<compile_context>
chip_gen: v5e
topology: v5e:2x2
jax: 0.10.0
libtpu: 0.0.40
codegen_flags: <defaults>
</compile_context>

<pallas_src>
import functools

import jax
import jax.numpy as jnp
from jax.experimental import pallas as pl
from jax.experimental.pallas import tpu as pltpu

LN_EPS = 1e-5        # torch.nn.LayerNorm default eps
LEAKY_SLOPE = 0.2    # nn.LeakyReLU(0.2)


def _bigru_kernel(word_ref, pos_ref, len_ref,
                  wpos_ref, bpos_ref, wemb_ref, bemb_ref,
                  wihf_ref, whhf_ref, bihf_ref, bhhf_ref,
                  wihb_ref, whhb_ref, bihb_ref, bhhb_ref,
                  h0_ref,
                  w1_ref, b1_ref, lng_ref, lnb_ref, w2_ref, b2_ref,
                  out_ref,
                  gxf_ref, gxb_ref,
                  *, batch, seq_len, hidden):
    f32 = jnp.float32
    B, T, H = batch, seq_len, hidden

    # ---- embeddings: pos Linear + add + input Linear as (T*B, .) matmuls ----
    inputs = word_ref[...] + (
        jnp.dot(pos_ref[...], wpos_ref[...], preferred_element_type=f32) + bpos_ref[...])
    x = jnp.dot(inputs, wemb_ref[...], preferred_element_type=f32) + bemb_ref[...]  # (T*B, H)

    # ---- input->gate projections for both directions, hoisted out of the
    #      recurrence (independent of h); kept in VMEM scratch ----------------
    gxf_ref[...] = jnp.dot(x, wihf_ref[...], preferred_element_type=f32) + bihf_ref[...]
    gxb_ref[...] = jnp.dot(x, wihb_ref[...], preferred_element_type=f32) + bihb_ref[...]

    lens = len_ref[...]                                  # (B, 1) int32
    h0_f = jnp.broadcast_to(h0_ref[0:1, :], (B, H))
    h0_b = jnp.broadcast_to(h0_ref[1:2, :], (B, H))

    whh_f = whhf_ref[...]
    bhh_f = bhhf_ref[...]
    whh_b = whhb_ref[...]
    bhh_b = bhhb_ref[...]

    def gru_cell(gx, h_prev, whh, bhh):
        # PyTorch GRU gate order r, z, n; n uses r * (W_hn h + b_hn)
        gh = jnp.dot(h_prev, whh, preferred_element_type=f32) + bhh     # (B, 3H)
        r = jax.nn.sigmoid(gx[:, 0:H] + gh[:, 0:H])
        z = jax.nn.sigmoid(gx[:, H:2 * H] + gh[:, H:2 * H])
        n = jnp.tanh(gx[:, 2 * H:3 * H] + r * gh[:, 2 * H:3 * H])
        return (1.0 - z) * n + z * h_prev

    def step(i, carry):
        h_f, h_b = carry
        # forward direction consumes timestep t = i
        row_f = pl.multiple_of(i * B, B)
        hf_new = gru_cell(gxf_ref[pl.ds(row_f, B), :], h_f, whh_f, bhh_f)
        h_f = jnp.where(lens > i, hf_new, h_f)           # packed-sequence mask
        # backward direction consumes timestep t = T - 1 - i
        t_b = T - 1 - i
        row_b = pl.multiple_of(t_b * B, B)
        hb_new = gru_cell(gxb_ref[pl.ds(row_b, B), :], h_b, whh_b, bhh_b)
        h_b = jnp.where(lens > t_b, hb_new, h_b)
        return h_f, h_b

    h_f, h_b = jax.lax.fori_loop(0, T, step, (h0_f, h0_b), unroll=True)

    gru_last = jnp.concatenate([h_f, h_b], axis=-1)       # (B, 2H)

    # ---- output_net: Linear -> LayerNorm -> LeakyReLU(0.2) -> Linear --------
    y = jnp.dot(gru_last, w1_ref[...], preferred_element_type=f32) + b1_ref[...]
    mu = jnp.mean(y, axis=-1, keepdims=True)
    var = jnp.mean(jnp.square(y - mu), axis=-1, keepdims=True)
    y = (y - mu) * jax.lax.rsqrt(var + LN_EPS)
    y = y * lng_ref[...] + lnb_ref[...]
    y = jnp.where(y >= 0.0, y, LEAKY_SLOPE * y)
    out_ref[...] = jnp.dot(y, w2_ref[...], preferred_element_type=f32) + b2_ref[...]


def _full_block(a):
    nd = a.ndim
    return pl.BlockSpec(a.shape, lambda *_: (0,) * nd)


def text_encoder_bigru_co(params, word_embs, pos_onehot, cap_lens):
    """word_embs (B,T,word), pos_onehot (B,T,pos), cap_lens (B,) int.
    Returns (B, output_size) float32 — same as the PyTorch module's forward."""
    f32 = jnp.float32
    B, T, Wd = word_embs.shape
    P = pos_onehot.shape[-1]
    H = params["w_in"].shape[0]
    O = params["w2"].shape[0]

    # Layout plumbing in plain JAX: time-major, flattened (T*B, .) activations.
    word_flat = word_embs.astype(f32).transpose(1, 0, 2).reshape(T * B, Wd)
    pos_flat = pos_onehot.astype(f32).transpose(1, 0, 2).reshape(T * B, P)
    lens = cap_lens.astype(jnp.int32).reshape(B, 1)

    def tr(a):   # torch Linear weight (out, in) -> (in, out) so kernel does x @ W
        return jnp.asarray(a, f32).T

    def rowv(a):  # bias (n,) -> (1, n) for sublane-broadcast adds
        return jnp.asarray(a, f32).reshape(1, -1)

    args = (
        word_flat, pos_flat, lens,
        tr(params["w_pos"]), rowv(params["b_pos"]),
        tr(params["w_in"]), rowv(params["b_in"]),
        tr(params["w_ih_f"]), tr(params["w_hh_f"]),
        rowv(params["b_ih_f"]), rowv(params["b_hh_f"]),
        tr(params["w_ih_b"]), tr(params["w_hh_b"]),
        rowv(params["b_ih_b"]), rowv(params["b_hh_b"]),
        jnp.asarray(params["h0"], f32).reshape(2, H),
        tr(params["w1"]), rowv(params["b1"]),
        rowv(params["ln_g"]), rowv(params["ln_b"]),
        tr(params["w2"]), rowv(params["b2"]),
    )

    kernel = functools.partial(_bigru_kernel, batch=B, seq_len=T, hidden=H)

    # Single block (everything fits VMEM at these sizes).  For large batches
    # one would add a "parallel" grid over batch tiles — rows are independent.
    return pl.pallas_call(
        kernel,
        out_shape=jax.ShapeDtypeStruct((B, O), f32),
        in_specs=[_full_block(a) for a in args],
        out_specs=pl.BlockSpec((B, O), lambda *_: (0, 0)),
        scratch_shapes=[pltpu.VMEM((T * B, 3 * H), f32),
                        pltpu.VMEM((T * B, 3 * H), f32)],
    )(*args)


def _reference(params, word_embs, pos_onehot, cap_lens):
    """Pure-JAX mirror of the PyTorch forward (packed sequence via masking)."""
    pos_embs = pos_onehot @ params["w_pos"].T + params["b_pos"]
    inputs = word_embs + pos_embs
    x = inputs @ params["w_in"].T + params["b_in"]          # (B, T, H)
    B, T, H = x.shape
    h0 = params["h0"].reshape(2, H)

    def run(order, w_ih, w_hh, b_ih, b_hh, h_init):
        h = jnp.broadcast_to(h_init[None, :], (B, H))
        for t in order:
            gx = x[:, t, :] @ w_ih.T + b_ih
            gh = h @ w_hh.T + b_hh
            r = jax.nn.sigmoid(gx[:, :H] + gh[:, :H])
            z = jax.nn.sigmoid(gx[:, H:2 * H] + gh[:, H:2 * H])
            n = jnp.tanh(gx[:, 2 * H:] + r * gh[:, 2 * H:])
            h_new = (1.0 - z) * n + z * h
            h = jnp.where((cap_lens > t)[:, None], h_new, h)
        return h

    h_f = run(range(T), params["w_ih_f"], params["w_hh_f"],
              params["b_ih_f"], params["b_hh_f"], h0[0])
    h_b = run(range(T - 1, -1, -1), params["w_ih_b"], params["w_hh_b"],
              params["b_ih_b"], params["b_hh_b"], h0[1])
    g = jnp.concatenate([h_f, h_b], axis=-1)

    y = g @ params["w1"].T + params["b1"]
    mu = y.mean(-1, keepdims=True)
    var = ((y - mu) ** 2).mean(-1, keepdims=True)
    y = (y - mu) / jnp.sqrt(var + LN_EPS) * params["ln_g"] + params["ln_b"]
    y = jnp.where(y >= 0.0, y, LEAKY_SLOPE * y)
    return y @ params["w2"].T + params["b2"]


if __name__ == "__main__":
    B, T = 8, 8                        # batch (sublane multiple), seq length
    P, Wd, H, O = 16, 128, 128, 128    # pos_size, word_size, hidden, output

    key = jax.random.PRNGKey(0)
    ks = jax.random.split(key, 24)

    def w(k, shape, fan_in):
        return jax.random.normal(k, shape, jnp.float32) / (float(fan_in) ** 0.5)

    params = {
        "w_pos": w(ks[0], (Wd, P), P),        "b_pos": 0.1 * w(ks[1], (Wd,), 1),
        "w_in":  w(ks[2], (H, Wd), Wd),       "b_in":  0.1 * w(ks[3], (H,), 1),
        "w_ih_f": w(ks[4], (3 * H, H), H),    "w_hh_f": w(ks[5], (3 * H, H), H),
        "b_ih_f": 0.1 * w(ks[6], (3 * H,), 1), "b_hh_f": 0.1 * w(ks[7], (3 * H,), 1),
        "w_ih_b": w(ks[8], (3 * H, H), H),    "w_hh_b": w(ks[9], (3 * H, H), H),
        "b_ih_b": 0.1 * w(ks[10], (3 * H,), 1), "b_hh_b": 0.1 * w(ks[11], (3 * H,), 1),
        "h0": w(ks[12], (2, 1, H), 1),        # module's nn.Parameter((2,1,H))
        "w1": w(ks[13], (H, 2 * H), 2 * H),   "b1": 0.1 * w(ks[14], (H,), 1),
        "ln_g": 1.0 + 0.1 * w(ks[15], (H,), 1), "ln_b": 0.1 * w(ks[16], (H,), 1),
        "w2": w(ks[17], (O, H), H),           "b2": 0.1 * w(ks[18], (O,), 1),
    }

    word_embs = 0.5 * jax.random.normal(ks[19], (B, T, Wd), jnp.float32)
    pos_idx = jax.random.randint(ks[20], (B, T), 0, P)
    pos_onehot = jax.nn.one_hot(pos_idx, P, dtype=jnp.float32)
    # pack_padded_sequence(enforce_sorted=True) requires descending lengths.
    cap_lens = jnp.array([8, 8, 7, 6, 5, 5, 3, 2], dtype=jnp.int32)

    out = jax.jit(text_encoder_bigru_co)(params, word_embs, pos_onehot, cap_lens)
    jax.block_until_ready(out)

    ref = _reference(params, word_embs, pos_onehot, cap_lens)
    assert out.shape == (B, O), out.shape
    assert jnp.allclose(out, ref, rtol=2e-2, atol=2e-2), float(jnp.max(jnp.abs(out - ref)))

    print("KERNEL_OK")
</pallas_src>

<mosaic_0001>
module attributes {stable_mosaic.version = 11 : i64} {
  func.func @_bigru_kernel(%arg0: memref<64x128xf32, #tpu.memory_space<vmem>>, %arg1: memref<64x16xf32, #tpu.memory_space<vmem>>, %arg2: memref<8x1xi32, #tpu.memory_space<vmem>>, %arg3: memref<16x128xf32, #tpu.memory_space<vmem>>, %arg4: memref<1x128xf32, #tpu.memory_space<vmem>>, %arg5: memref<128x128xf32, #tpu.memory_space<vmem>>, %arg6: memref<1x128xf32, #tpu.memory_space<vmem>>, %arg7: memref<128x384xf32, #tpu.memory_space<vmem>>, %arg8: memref<128x384xf32, #tpu.memory_space<vmem>>, %arg9: memref<1x384xf32, #tpu.memory_space<vmem>>, %arg10: memref<1x384xf32, #tpu.memory_space<vmem>>, %arg11: memref<128x384xf32, #tpu.memory_space<vmem>>, %arg12: memref<128x384xf32, #tpu.memory_space<vmem>>, %arg13: memref<1x384xf32, #tpu.memory_space<vmem>>, %arg14: memref<1x384xf32, #tpu.memory_space<vmem>>, %arg15: memref<2x128xf32, #tpu.memory_space<vmem>>, %arg16: memref<256x128xf32, #tpu.memory_space<vmem>>, %arg17: memref<1x128xf32, #tpu.memory_space<vmem>>, %arg18: memref<1x128xf32, #tpu.memory_space<vmem>>, %arg19: memref<1x128xf32, #tpu.memory_space<vmem>>, %arg20: memref<128x128xf32, #tpu.memory_space<vmem>>, %arg21: memref<1x128xf32, #tpu.memory_space<vmem>>, %arg22: memref<8x128xf32, #tpu.memory_space<vmem>>, %arg23: memref<64x384xf32, #tpu.memory_space<vmem>>, %arg24: memref<64x384xf32, #tpu.memory_space<vmem>>) attributes {dimension_semantics = [], scalar_prefetch = 0 : i64, scratch_operands = 2 : i64, tpu.core_type = #tpu.core_type<tc>} {
    %c0 = arith.constant 0 : index
    %c0_0 = arith.constant 0 : index
    %0 = vector.load %arg0[%c0, %c0_0] : memref<64x128xf32, #tpu.memory_space<vmem>>, vector<64x128xf32>
    %c0_1 = arith.constant 0 : index
    %c0_2 = arith.constant 0 : index
    %1 = vector.load %arg1[%c0_1, %c0_2] : memref<64x16xf32, #tpu.memory_space<vmem>>, vector<64x16xf32>
    %c0_3 = arith.constant 0 : index
    %c0_4 = arith.constant 0 : index
    %2 = vector.load %arg3[%c0_3, %c0_4] : memref<16x128xf32, #tpu.memory_space<vmem>>, vector<16x128xf32>
    %cst = arith.constant dense<0.000000e+00> : vector<64x128xf32>
    %3 = tpu.matmul %1, %2, %cst {dimension_numbers = #tpu.dot_dimension_numbers<[1], [0], [0], [1], [0, 0, 1, 1], [], []>} : vector<64x16xf32>, vector<16x128xf32>, vector<64x128xf32> -> vector<64x128xf32>
    %c0_5 = arith.constant 0 : index
    %c0_6 = arith.constant 0 : index
    %4 = vector.load %arg4[%c0_5, %c0_6] : memref<1x128xf32, #tpu.memory_space<vmem>>, vector<1x128xf32>
    %5 = vector.broadcast %4 : vector<1x128xf32> to vector<64x128xf32>
    %6 = arith.addf %3, %5 : vector<64x128xf32>
    %7 = arith.addf %0, %6 : vector<64x128xf32>
    %c0_7 = arith.constant 0 : index
    %c0_8 = arith.constant 0 : index
    %8 = vector.load %arg5[%c0_7, %c0_8] : memref<128x128xf32, #tpu.memory_space<vmem>>, vector<128x128xf32>
    %cst_9 = arith.constant dense<0.000000e+00> : vector<64x128xf32>
    %9 = tpu.matmul %7, %8, %cst_9 {dimension_numbers = #tpu.dot_dimension_numbers<[1], [0], [0], [1], [0, 0, 1, 1], [], []>} : vector<64x128xf32>, vector<128x128xf32>, vector<64x128xf32> -> vector<64x128xf32>
    %c0_10 = arith.constant 0 : index
    %c0_11 = arith.constant 0 : index
    %10 = vector.load %arg6[%c0_10, %c0_11] : memref<1x128xf32, #tpu.memory_space<vmem>>, vector<1x128xf32>
    %11 = vector.broadcast %10 : vector<1x128xf32> to vector<64x128xf32>
    %12 = arith.addf %9, %11 : vector<64x128xf32>
    %c0_12 = arith.constant 0 : index
    %c0_13 = arith.constant 0 : index
    %13 = vector.load %arg7[%c0_12, %c0_13] : memref<128x384xf32, #tpu.memory_space<vmem>>, vector<128x384xf32>
    %cst_14 = arith.constant dense<0.000000e+00> : vector<64x384xf32>
    %14 = tpu.matmul %12, %13, %cst_14 {dimension_numbers = #tpu.dot_dimension_numbers<[1], [0], [0], [1], [0, 0, 1, 1], [], []>} : vector<64x128xf32>, vector<128x384xf32>, vector<64x384xf32> -> vector<64x384xf32>
    %c0_15 = arith.constant 0 : index
    %c0_16 = arith.constant 0 : index
    %15 = vector.load %arg9[%c0_15, %c0_16] : memref<1x384xf32, #tpu.memory_space<vmem>>, vector<1x384xf32>
    %16 = vector.broadcast %15 : vector<1x384xf32> to vector<64x384xf32>
    %17 = arith.addf %14, %16 : vector<64x384xf32>
    %c0_17 = arith.constant 0 : index
    %c0_18 = arith.constant 0 : index
    %18 = vector.load %arg23[%c0_17, %c0_18] : memref<64x384xf32, #tpu.memory_space<vmem>>, vector<64x384xf32>
    tpu.vector_store %arg23[%c0_17, %c0_18], %17 {strides = array<i32>} : memref<64x384xf32, #tpu.memory_space<vmem>>, vector<64x384xf32>,
    %c0_19 = arith.constant 0 : index
    %c0_20 = arith.constant 0 : index
    %19 = vector.load %arg11[%c0_19, %c0_20] : memref<128x384xf32, #tpu.memory_space<vmem>>, vector<128x384xf32>
    %cst_21 = arith.constant dense<0.000000e+00> : vector<64x384xf32>
    %20 = tpu.matmul %12, %19, %cst_21 {dimension_numbers = #tpu.dot_dimension_numbers<[1], [0], [0], [1], [0, 0, 1, 1], [], []>} : vector<64x128xf32>, vector<128x384xf32>, vector<64x384xf32> -> vector<64x384xf32>
    %c0_22 = arith.constant 0 : index
    %c0_23 = arith.constant 0 : index
    %21 = vector.load %arg13[%c0_22, %c0_23] : memref<1x384xf32, #tpu.memory_space<vmem>>, vector<1x384xf32>
    %22 = vector.broadcast %21 : vector<1x384xf32> to vector<64x384xf32>
    %23 = arith.addf %20, %22 : vector<64x384xf32>
    %c0_24 = arith.constant 0 : index
    %c0_25 = arith.constant 0 : index
    %24 = vector.load %arg24[%c0_24, %c0_25] : memref<64x384xf32, #tpu.memory_space<vmem>>, vector<64x384xf32>
    tpu.vector_store %arg24[%c0_24, %c0_25], %23 {strides = array<i32>} : memref<64x384xf32, #tpu.memory_space<vmem>>, vector<64x384xf32>,
    %c0_26 = arith.constant 0 : index
    %c0_27 = arith.constant 0 : index
    %25 = vector.load %arg2[%c0_26, %c0_27] : memref<8x1xi32, #tpu.memory_space<vmem>>, vector<8x1xi32>
    %c0_28 = arith.constant 0 : index
    %c0_29 = arith.constant 0 : index
    %26 = vector.load %arg15[%c0_28, %c0_29] : memref<2x128xf32, #tpu.memory_space<vmem>>, vector<1x128xf32>
    %27 = vector.shape_cast %26 : vector<1x128xf32> to vector<1x128xf32>
    %28 = vector.broadcast %27 : vector<1x128xf32> to vector<8x128xf32>
    %c1 = arith.constant 1 : index
    %c0_30 = arith.constant 0 : index
    %29 = vector.load %arg15[%c1, %c0_30] : memref<2x128xf32, #tpu.memory_space<vmem>>, vector<1x128xf32>
    %30 = vector.shape_cast %29 : vector<1x128xf32> to vector<1x128xf32>
    %31 = vector.broadcast %30 : vector<1x128xf32> to vector<8x128xf32>
    %c0_31 = arith.constant 0 : index
    %c0_32 = arith.constant 0 : index
    %32 = vector.load %arg8[%c0_31, %c0_32] : memref<128x384xf32, #tpu.memory_space<vmem>>, vector<128x384xf32>
    %c0_33 = arith.constant 0 : index
    %c0_34 = arith.constant 0 : index
    %33 = vector.load %arg10[%c0_33, %c0_34] : memref<1x384xf32, #tpu.memory_space<vmem>>, vector<1x384xf32>
    %c0_35 = arith.constant 0 : index
    %c0_36 = arith.constant 0 : index
    %34 = vector.load %arg12[%c0_35, %c0_36] : memref<128x384xf32, #tpu.memory_space<vmem>>, vector<128x384xf32>
    %c0_37 = arith.constant 0 : index
    %c0_38 = arith.constant 0 : index
    %35 = vector.load %arg14[%c0_37, %c0_38] : memref<1x384xf32, #tpu.memory_space<vmem>>, vector<1x384xf32>
    %c0_i32 = arith.constant 0 : i32
    %c8_i32 = arith.constant 8 : i32
    %36 = arith.muli %c0_i32, %c8_i32 : i32
    %37 = tpu.assume_multiple %36, 8 : i32
    %38 = arith.index_cast %37 : i32 to index
    %c0_39 = arith.constant 0 : index
    %39 = vector.load %arg23[%38, %c0_39] : memref<64x384xf32, #tpu.memory_space<vmem>>, vector<8x384xf32>
    %cst_40 = arith.constant dense<0.000000e+00> : vector<8x384xf32>
    %40 = tpu.matmul %28, %32, %cst_40 {dimension_numbers = #tpu.dot_dimension_numbers<[1], [0], [0], [1], [0, 0, 1, 1], [], []>} : vector<8x128xf32>, vector<128x384xf32>, vector<8x384xf32> -> vector<8x384xf32>
    %41 = vector.broadcast %33 : vector<1x384xf32> to vector<8x384xf32>
    %42 = arith.addf %40, %41 : vector<8x384xf32>
    %43 = vector.extract_strided_slice %39 {offsets = [0, 0], sizes = [8, 128], strides = [1, 1]} : vector<8x384xf32> to vector<8x128xf32>
    %44 = vector.extract_strided_slice %42 {offsets = [0, 0], sizes = [8, 128], strides = [1, 1]} : vector<8x384xf32> to vector<8x128xf32>
    %45 = arith.addf %43, %44 : vector<8x128xf32>
    %46 = arith.negf %45 : vector<8x128xf32>
    %47 = math.exp %46 : vector<8x128xf32>
    %cst_41 = arith.constant 1.000000e+00 : f32
    %48 = vector.broadcast %cst_41 : f32 to vector<8x128xf32>
    %49 = arith.addf %48, %47 : vector<8x128xf32>
    %50 = arith.divf %48, %49 : vector<8x128xf32>
    %51 = vector.extract_strided_slice %39 {offsets = [0, 128], sizes = [8, 128], strides = [1, 1]} : vector<8x384xf32> to vector<8x128xf32>
    %52 = vector.extract_strided_slice %42 {offsets = [0, 128], sizes = [8, 128], strides = [1, 1]} : vector<8x384xf32> to vector<8x128xf32>
    %53 = arith.addf %51, %52 : vector<8x128xf32>
    %54 = arith.negf %53 : vector<8x128xf32>
    %55 = math.exp %54 : vector<8x128xf32>
    %cst_42 = arith.constant 1.000000e+00 : f32
    %56 = vector.broadcast %cst_42 : f32 to vector<8x128xf32>
    %57 = arith.addf %56, %55 : vector<8x128xf32>
    %58 = arith.divf %56, %57 : vector<8x128xf32>
    %59 = vector.extract_strided_slice %39 {offsets = [0, 256], sizes = [8, 128], strides = [1, 1]} : vector<8x384xf32> to vector<8x128xf32>
    %60 = vector.extract_strided_slice %42 {offsets = [0, 256], sizes = [8, 128], strides = [1, 1]} : vector<8x384xf32> to vector<8x128xf32>
    %61 = arith.mulf %50, %60 : vector<8x128xf32>
    %62 = arith.addf %59, %61 : vector<8x128xf32>
    %63 = math.tanh %62 : vector<8x128xf32>
    %cst_43 = arith.constant 1.000000e+00 : f32
    %64 = vector.broadcast %cst_43 : f32 to vector<8x128xf32>
    %65 = arith.subf %64, %58 : vector<8x128xf32>
    %66 = arith.mulf %65, %63 : vector<8x128xf32>
    %67 = arith.mulf %58, %28 : vector<8x128xf32>
    %68 = arith.addf %66, %67 : vector<8x128xf32>
    %69 = vector.broadcast %c0_i32 : i32 to vector<8x1xi32>
    %70 = arith.cmpi sgt, %25, %69 : vector<8x1xi32>
    %71 = vector.shape_cast %70 : vector<8x1xi1> to vector<8x1xi1>
    %72 = vector.broadcast %71 : vector<8x1xi1> to vector<8x128xi1>
    %73 = arith.select %72, %68, %28 : vector<8x128xi1>, vector<8x128xf32>
    %c7_i32 = arith.constant 7 : i32
    %74 = arith.subi %c7_i32, %c0_i32 : i32
    %c8_i32_44 = arith.constant 8 : i32
    %75 = arith.muli %74, %c8_i32_44 : i32
    %76 = tpu.assume_multiple %75, 8 : i32
    %77 = arith.index_cast %76 : i32 to index
    %c0_45 = arith.constant 0 : index
    %78 = vector.load %arg24[%77, %c0_45] : memref<64x384xf32, #tpu.memory_space<vmem>>, vector<8x384xf32>
    %cst_46 = arith.constant dense<0.000000e+00> : vector<8x384xf32>
    %79 = tpu.matmul %31, %34, %cst_46 {dimension_numbers = #tpu.dot_dimension_numbers<[1], [0], [0], [1], [0, 0, 1, 1], [], []>} : vector<8x128xf32>, vector<128x384xf32>, vector<8x384xf32> -> vector<8x384xf32>
    %80 = vector.broadcast %35 : vector<1x384xf32> to vector<8x384xf32>
    %81 = arith.addf %79, %80 : vector<8x384xf32>
    %82 = vector.extract_strided_slice %78 {offsets = [0, 0], sizes = [8, 128], strides = [1, 1]} : vector<8x384xf32> to vector<8x128xf32>
    %83 = vector.extract_strided_slice %81 {offsets = [0, 0], sizes = [8, 128], strides = [1, 1]} : vector<8x384xf32> to vector<8x128xf32>
    %84 = arith.addf %82, %83 : vector<8x128xf32>
    %85 = arith.negf %84 : vector<8x128xf32>
    %86 = math.exp %85 : vector<8x128xf32>
    %cst_47 = arith.constant 1.000000e+00 : f32
    %87 = vector.broadcast %cst_47 : f32 to vector<8x128xf32>
    %88 = arith.addf %87, %86 : vector<8x128xf32>
    %89 = arith.divf %87, %88 : vector<8x128xf32>
    %90 = vector.extract_strided_slice %78 {offsets = [0, 128], sizes = [8, 128], strides = [1, 1]} : vector<8x384xf32> to vector<8x128xf32>
    %91 = vector.extract_strided_slice %81 {offsets = [0, 128], sizes = [8, 128], strides = [1, 1]} : vector<8x384xf32> to vector<8x128xf32>
    %92 = arith.addf %90, %91 : vector<8x128xf32>
    %93 = arith.negf %92 : vector<8x128xf32>
    %94 = math.exp %93 : vector<8x128xf32>
    %cst_48 = arith.constant 1.000000e+00 : f32
    %95 = vector.broadcast %cst_48 : f32 to vector<8x128xf32>
    %96 = arith.addf %95, %94 : vector<8x128xf32>
    %97 = arith.divf %95, %96 : vector<8x128xf32>
    %98 = vector.extract_strided_slice %78 {offsets = [0, 256], sizes = [8, 128], strides = [1, 1]} : vector<8x384xf32> to vector<8x128xf32>
    %99 = vector.extract_strided_slice %81 {offsets = [0, 256], sizes = [8, 128], strides = [1, 1]} : vector<8x384xf32> to vector<8x128xf32>
    %100 = arith.mulf %89, %99 : vector<8x128xf32>
    %101 = arith.addf %98, %100 : vector<8x128xf32>
    %102 = math.tanh %101 : vector<8x128xf32>
    %cst_49 = arith.constant 1.000000e+00 : f32
    %103 = vector.broadcast %cst_49 : f32 to vector<8x128xf32>
    %104 = arith.subf %103, %97 : vector<8x128xf32>
    %105 = arith.mulf %104, %102 : vector<8x128xf32>
    %106 = arith.mulf %97, %31 : vector<8x128xf32>
    %107 = arith.addf %105, %106 : vector<8x128xf32>
    %108 = vector.broadcast %74 : i32 to vector<8x1xi32>
    %109 = arith.cmpi sgt, %25, %108 : vector<8x1xi32>
    %110 = vector.shape_cast %109 : vector<8x1xi1> to vector<8x1xi1>
    %111 = vector.broadcast %110 : vector<8x1xi1> to vector<8x128xi1>
    %112 = arith.select %111, %107, %31 : vector<8x128xi1>, vector<8x128xf32>
    %c1_i32 = arith.constant 1 : i32
    %c8_i32_50 = arith.constant 8 : i32
    %113 = arith.muli %c1_i32, %c8_i32_50 : i32
    %114 = tpu.assume_multiple %113, 8 : i32
    %115 = arith.index_cast %114 : i32 to index
    %c0_51 = arith.constant 0 : index
    %116 = vector.load %arg23[%115, %c0_51] : memref<64x384xf32, #tpu.memory_space<vmem>>, vector<8x384xf32>
    %cst_52 = arith.constant dense<0.000000e+00> : vector<8x384xf32>
    %117 = tpu.matmul %73, %32, %cst_52 {dimension_numbers = #tpu.dot_dimension_numbers<[1], [0], [0], [1], [0, 0, 1, 1], [], []>} : vector<8x128xf32>, vector<128x384xf32>, vector<8x384xf32> -> vector<8x384xf32>
    %118 = vector.broadcast %33 : vector<1x384xf32> to vector<8x384xf32>
    %119 = arith.addf %117, %118 : vector<8x384xf32>
    %120 = vector.extract_strided_slice %116 {offsets = [0, 0], sizes = [8, 128], strides = [1, 1]} : vector<8x384xf32> to vector<8x128xf32>
    %121 = vector.extract_strided_slice %119 {offsets = [0, 0], sizes = [8, 128], strides = [1, 1]} : vector<8x384xf32> to vector<8x128xf32>
    %122 = arith.addf %120, %121 : vector<8x128xf32>
    %123 = arith.negf %122 : vector<8x128xf32>
    %124 = math.exp %123 : vector<8x128xf32>
    %cst_53 = arith.constant 1.000000e+00 : f32
    %125 = vector.broadcast %cst_53 : f32 to vector<8x128xf32>
    %126 = arith.addf %125, %124 : vector<8x128xf32>
    %127 = arith.divf %125, %126 : vector<8x128xf32>
    %128 = vector.extract_strided_slice %116 {offsets = [0, 128], sizes = [8, 128], strides = [1, 1]} : vector<8x384xf32> to vector<8x128xf32>
    %129 = vector.extract_strided_slice %119 {offsets = [0, 128], sizes = [8, 128], strides = [1, 1]} : vector<8x384xf32> to vector<8x128xf32>
    %130 = arith.addf %128, %129 : vector<8x128xf32>
    %131 = arith.negf %130 : vector<8x128xf32>
    %132 = math.exp %131 : vector<8x128xf32>
    %cst_54 = arith.constant 1.000000e+00 : f32
    %133 = vector.broadcast %cst_54 : f32 to vector<8x128xf32>
    %134 = arith.addf %133, %132 : vector<8x128xf32>
    %135 = arith.divf %133, %134 : vector<8x128xf32>
    %136 = vector.extract_strided_slice %116 {offsets = [0, 256], sizes = [8, 128], strides = [1, 1]} : vector<8x384xf32> to vector<8x128xf32>
    %137 = vector.extract_strided_slice %119 {offsets = [0, 256], sizes = [8, 128], strides = [1, 1]} : vector<8x384xf32> to vector<8x128xf32>
    %138 = arith.mulf %127, %137 : vector<8x128xf32>
    %139 = arith.addf %136, %138 : vector<8x128xf32>
    %140 = math.tanh %139 : vector<8x128xf32>
    %cst_55 = arith.constant 1.000000e+00 : f32
    %141 = vector.broadcast %cst_55 : f32 to vector<8x128xf32>
    %142 = arith.subf %141, %135 : vector<8x128xf32>
    %143 = arith.mulf %142, %140 : vector<8x128xf32>
    %144 = arith.mulf %135, %73 : vector<8x128xf32>
    %145 = arith.addf %143, %144 : vector<8x128xf32>
    %146 = vector.broadcast %c1_i32 : i32 to vector<8x1xi32>
    %147 = arith.cmpi sgt, %25, %146 : vector<8x1xi32>
    %148 = vector.shape_cast %147 : vector<8x1xi1> to vector<8x1xi1>
    %149 = vector.broadcast %148 : vector<8x1xi1> to vector<8x128xi1>
    %150 = arith.select %149, %145, %73 : vector<8x128xi1>, vector<8x128xf32>
    %c7_i32_56 = arith.constant 7 : i32
    %151 = arith.subi %c7_i32_56, %c1_i32 : i32
    %c8_i32_57 = arith.constant 8 : i32
    %152 = arith.muli %151, %c8_i32_57 : i32
    %153 = tpu.assume_multiple %152, 8 : i32
    %154 = arith.index_cast %153 : i32 to index
    %c0_58 = arith.constant 0 : index
    %155 = vector.load %arg24[%154, %c0_58] : memref<64x384xf32, #tpu.memory_space<vmem>>, vector<8x384xf32>
    %cst_59 = arith.constant dense<0.000000e+00> : vector<8x384xf32>
    %156 = tpu.matmul %112, %34, %cst_59 {dimension_numbers = #tpu.dot_dimension_numbers<[1], [0], [0], [1], [0, 0, 1, 1], [], []>} : vector<8x128xf32>, vector<128x384xf32>, vector<8x384xf32> -> vector<8x384xf32>
    %157 = vector.broadcast %35 : vector<1x384xf32> to vector<8x384xf32>
    %158 = arith.addf %156, %157 : vector<8x384xf32>
    %159 = vector.extract_strided_slice %155 {offsets = [0, 0], sizes = [8, 128], strides = [1, 1]} : vector<8x384xf32> to vector<8x128xf32>
    %160 = vector.extract_strided_slice %158 {offsets = [0, 0], sizes = [8, 128], strides = [1, 1]} : vector<8x384xf32> to vector<8x128xf32>
    %161 = arith.addf %159, %160 : vector<8x128xf32>
    %162 = arith.negf %161 : vector<8x128xf32>
    %163 = math.exp %162 : vector<8x128xf32>
    %cst_60 = arith.constant 1.000000e+00 : f32
    %164 = vector.broadcast %cst_60 : f32 to vector<8x128xf32>
    %165 = arith.addf %164, %163 : vector<8x128xf32>
    %166 = arith.divf %164, %165 : vector<8x128xf32>
    %167 = vector.extract_strided_slice %155 {offsets = [0, 128], sizes = [8, 128], strides = [1, 1]} : vector<8x384xf32> to vector<8x128xf32>
    %168 = vector.extract_strided_slice %158 {offsets = [0, 128], sizes = [8, 128], strides = [1, 1]} : vector<8x384xf32> to vector<8x128xf32>
    %169 = arith.addf %167, %168 : vector<8x128xf32>
    %170 = arith.negf %169 : vector<8x128xf32>
    %171 = math.exp %170 : vector<8x128xf32>
    %cst_61 = arith.constant 1.000000e+00 : f32
    %172 = vector.broadcast %cst_61 : f32 to vector<8x128xf32>
    %173 = arith.addf %172, %171 : vector<8x128xf32>
    %174 = arith.divf %172, %173 : vector<8x128xf32>
    %175 = vector.extract_strided_slice %155 {offsets = [0, 256], sizes = [8, 128], strides = [1, 1]} : vector<8x384xf32> to vector<8x128xf32>
    %176 = vector.extract_strided_slice %158 {offsets = [0, 256], sizes = [8, 128], strides = [1, 1]} : vector<8x384xf32> to vector<8x128xf32>
    %177 = arith.mulf %166, %176 : vector<8x128xf32>
    %178 = arith.addf %175, %177 : vector<8x128xf32>
    %179 = math.tanh %178 : vector<8x128xf32>
    %cst_62 = arith.constant 1.000000e+00 : f32
    %180 = vector.broadcast %cst_62 : f32 to vector<8x128xf32>
    %181 = arith.subf %180, %174 : vector<8x128xf32>
    %182 = arith.mulf %181, %179 : vector<8x128xf32>
    %183 = arith.mulf %174, %112 : vector<8x128xf32>
    %184 = arith.addf %182, %183 : vector<8x128xf32>
    %185 = vector.broadcast %151 : i32 to vector<8x1xi32>
    %186 = arith.cmpi sgt, %25, %185 : vector<8x1xi32>
    %187 = vector.shape_cast %186 : vector<8x1xi1> to vector<8x1xi1>
    %188 = vector.broadcast %187 : vector<8x1xi1> to vector<8x128xi1>
    %189 = arith.select %188, %184, %112 : vector<8x128xi1>, vector<8x128xf32>
    %c2_i32 = arith.constant 2 : i32
    %c8_i32_63 = arith.constant 8 : i32
    %190 = arith.muli %c2_i32, %c8_i32_63 : i32
    %191 = tpu.assume_multiple %190, 8 : i32
    %192 = arith.index_cast %191 : i32 to index
    %c0_64 = arith.constant 0 : index
    %193 = vector.load %arg23[%192, %c0_64] : memref<64x384xf32, #tpu.memory_space<vmem>>, vector<8x384xf32>
    %cst_65 = arith.constant dense<0.000000e+00> : vector<8x384xf32>
    %194 = tpu.matmul %150, %32, %cst_65 {dimension_numbers = #tpu.dot_dimension_numbers<[1], [0], [0], [1], [0, 0, 1, 1], [], []>} : vector<8x128xf32>, vector<128x384xf32>, vector<8x384xf32> -> vector<8x384xf32>
    %195 = vector.broadcast %33 : vector<1x384xf32> to vector<8x384xf32>
    %196 = arith.addf %194, %195 : vector<8x384xf32>
    %197 = vector.extract_strided_slice %193 {offsets = [0, 0], sizes = [8, 128], strides = [1, 1]} : vector<8x384xf32> to vector<8x128xf32>
    %198 = vector.extract_strided_slice %196 {offsets = [0, 0], sizes = [8, 128], strides = [1, 1]} : vector<8x384xf32> to vector<8x128xf32>
    %199 = arith.addf %197, %198 : vector<8x128xf32>
    %200 = arith.negf %199 : vector<8x128xf32>
    %201 = math.exp %200 : vector<8x128xf32>
    %cst_66 = arith.constant 1.000000e+00 : f32
    %202 = vector.broadcast %cst_66 : f32 to vector<8x128xf32>
    %203 = arith.addf %202, %201 : vector<8x128xf32>
    %204 = arith.divf %202, %203 : vector<8x128xf32>
    %205 = vector.extract_strided_slice %193 {offsets = [0, 128], sizes = [8, 128], strides = [1, 1]} : vector<8x384xf32> to vector<8x128xf32>
    %206 = vector.extract_strided_slice %196 {offsets = [0, 128], sizes = [8, 128], strides = [1, 1]} : vector<8x384xf32> to vector<8x128xf32>
    %207 = arith.addf %205, %206 : vector<8x128xf32>
    %208 = arith.negf %207 : vector<8x128xf32>
    %209 = math.exp %208 : vector<8x128xf32>
    %cst_67 = arith.constant 1.000000e+00 : f32
    %210 = vector.broadcast %cst_67 : f32 to vector<8x128xf32>
    %211 = arith.addf %210, %209 : vector<8x128xf32>
    %212 = arith.divf %210, %211 : vector<8x128xf32>
    %213 = vector.extract_strided_slice %193 {offsets = [0, 256], sizes = [8, 128], strides = [1, 1]} : vector<8x384xf32> to vector<8x128xf32>
    %214 = vector.extract_strided_slice %196 {offsets = [0, 256], sizes = [8, 128], strides = [1, 1]} : vector<8x384xf32> to vector<8x128xf32>
    %215 = arith.mulf %204, %214 : vector<8x128xf32>
    %216 = arith.addf %213, %215 : vector<8x128xf32>
    %217 = math.tanh %216 : vector<8x128xf32>
    %cst_68 = arith.constant 1.000000e+00 : f32
    %218 = vector.broadcast %cst_68 : f32 to vector<8x128xf32>
    %219 = arith.subf %218, %212 : vector<8x128xf32>
    %220 = arith.mulf %219, %217 : vector<8x128xf32>
    %221 = arith.mulf %212, %150 : vector<8x128xf32>
    %222 = arith.addf %220, %221 : vector<8x128xf32>
    %223 = vector.broadcast %c2_i32 : i32 to vector<8x1xi32>
    %224 = arith.cmpi sgt, %25, %223 : vector<8x1xi32>
    %225 = vector.shape_cast %224 : vector<8x1xi1> to vector<8x1xi1>
    %226 = vector.broadcast %225 : vector<8x1xi1> to vector<8x128xi1>
    %227 = arith.select %226, %222, %150 : vector<8x128xi1>, vector<8x128xf32>
    %c7_i32_69 = arith.constant 7 : i32
    %228 = arith.subi %c7_i32_69, %c2_i32 : i32
    %c8_i32_70 = arith.constant 8 : i32
    %229 = arith.muli %228, %c8_i32_70 : i32
    %230 = tpu.assume_multiple %229, 8 : i32
    %231 = arith.index_cast %230 : i32 to index
    %c0_71 = arith.constant 0 : index
    %232 = vector.load %arg24[%231, %c0_71] : memref<64x384xf32, #tpu.memory_space<vmem>>, vector<8x384xf32>
    %cst_72 = arith.constant dense<0.000000e+00> : vector<8x384xf32>
    %233 = tpu.matmul %189, %34, %cst_72 {dimension_numbers = #tpu.dot_dimension_numbers<[1], [0], [0], [1], [0, 0, 1, 1], [], []>} : vector<8x128xf32>, vector<128x384xf32>, vector<8x384xf32> -> vector<8x384xf32>
    %234 = vector.broadcast %35 : vector<1x384xf32> to vector<8x384xf32>
    %235 = arith.addf %233, %234 : vector<8x384xf32>
    %236 = vector.extract_strided_slice %232 {offsets = [0, 0], sizes = [8, 128], strides = [1, 1]} : vector<8x384xf32> to vector<8x128xf32>
    %237 = vector.extract_strided_slice %235 {offsets = [0, 0], sizes = [8, 128], strides = [1, 1]} : vector<8x384xf32> to vector<8x128xf32>
    %238 = arith.addf %236, %237 : vector<8x128xf32>
    %239 = arith.negf %238 : vector<8x128xf32>
    %240 = math.exp %239 : vector<8x128xf32>
    %cst_73 = arith.constant 1.000000e+00 : f32
    %241 = vector.broadcast %cst_73 : f32 to vector<8x128xf32>
    %242 = arith.addf %241, %240 : vector<8x128xf32>
    %243 = arith.divf %241, %242 : vector<8x128xf32>
    %244 = vector.extract_strided_slice %232 {offsets = [0, 128], sizes = [8, 128], strides = [1, 1]} : vector<8x384xf32> to vector<8x128xf32>
    %245 = vector.extract_strided_slice %235 {offsets = [0, 128], sizes = [8, 128], strides = [1, 1]} : vector<8x384xf32> to vector<8x128xf32>
    %246 = arith.addf %244, %245 : vector<8x128xf32>
    %247 = arith.negf %246 : vector<8x128xf32>
    %248 = math.exp %247 : vector<8x128xf32>
    %cst_74 = arith.constant 1.000000e+00 : f32
    %249 = vector.broadcast %cst_74 : f32 to vector<8x128xf32>
    %250 = arith.addf %249, %248 : vector<8x128xf32>
    %251 = arith.divf %249, %250 : vector<8x128xf32>
    %252 = vector.extract_strided_slice %232 {offsets = [0, 256], sizes = [8, 128], strides = [1, 1]} : vector<8x384xf32> to vector<8x128xf32>
    %253 = vector.extract_strided_slice %235 {offsets = [0, 256], sizes = [8, 128], strides = [1, 1]} : vector<8x384xf32> to vector<8x128xf32>
    %254 = arith.mulf %243, %253 : vector<8x128xf32>
    %255 = arith.addf %252, %254 : vector<8x128xf32>
    %256 = math.tanh %255 : vector<8x128xf32>
    %cst_75 = arith.constant 1.000000e+00 : f32
    %257 = vector.broadcast %cst_75 : f32 to vector<8x128xf32>
    %258 = arith.subf %257, %251 : vector<8x128xf32>
    %259 = arith.mulf %258, %256 : vector<8x128xf32>
    %260 = arith.mulf %251, %189 : vector<8x128xf32>
    %261 = arith.addf %259, %260 : vector<8x128xf32>
    %262 = vector.broadcast %228 : i32 to vector<8x1xi32>
    %263 = arith.cmpi sgt, %25, %262 : vector<8x1xi32>
    %264 = vector.shape_cast %263 : vector<8x1xi1> to vector<8x1xi1>
    %265 = vector.broadcast %264 : vector<8x1xi1> to vector<8x128xi1>
    %266 = arith.select %265, %261, %189 : vector<8x128xi1>, vector<8x128xf32>
    %c3_i32 = arith.constant 3 : i32
    %c8_i32_76 = arith.constant 8 : i32
    %267 = arith.muli %c3_i32, %c8_i32_76 : i32
    %268 = tpu.assume_multiple %267, 8 : i32
    %269 = arith.index_cast %268 : i32 to index
    %c0_77 = arith.constant 0 : index
    %270 = vector.load %arg23[%269, %c0_77] : memref<64x384xf32, #tpu.memory_space<vmem>>, vector<8x384xf32>
    %cst_78 = arith.constant dense<0.000000e+00> : vector<8x384xf32>
    %271 = tpu.matmul %227, %32, %cst_78 {dimension_numbers = #tpu.dot_dimension_numbers<[1], [0], [0], [1], [0, 0, 1, 1], [], []>} : vector<8x128xf32>, vector<128x384xf32>, vector<8x384xf32> -> vector<8x384xf32>
    %272 = vector.broadcast %33 : vector<1x384xf32> to vector<8x384xf32>
    %273 = arith.addf %271, %272 : vector<8x384xf32>
    %274 = vector.extract_strided_slice %270 {offsets = [0, 0], sizes = [8, 128], strides = [1, 1]} : vector<8x384xf32> to vector<8x128xf32>
    %275 = vector.extract_strided_slice %273 {offsets = [0, 0], sizes = [8, 128], strides = [1, 1]} : vector<8x384xf32> to vector<8x128xf32>
    %276 = arith.addf %274, %275 : vector<8x128xf32>
    %277 = arith.negf %276 : vector<8x128xf32>
    %278 = math.exp %277 : vector<8x128xf32>
    %cst_79 = arith.constant 1.000000e+00 : f32
    %279 = vector.broadcast %cst_79 : f32 to vector<8x128xf32>
    %280 = arith.addf %279, %278 : vector<8x128xf32>
    %281 = arith.divf %279, %280 : vector<8x128xf32>
    %282 = vector.extract_strided_slice %270 {offsets = [0, 128], sizes = [8, 128], strides = [1, 1]} : vector<8x384xf32> to vector<8x128xf32>
    %283 = vector.extract_strided_slice %273 {offsets = [0, 128], sizes = [8, 128], strides = [1, 1]} : vector<8x384xf32> to vector<8x128xf32>
    %284 = arith.addf %282, %283 : vector<8x128xf32>
    %285 = arith.negf %284 : vector<8x128xf32>
    %286 = math.exp %285 : vector<8x128xf32>
    %cst_80 = arith.constant 1.000000e+00 : f32
    %287 = vector.broadcast %cst_80 : f32 to vector<8x128xf32>
    %288 = arith.addf %287, %286 : vector<8x128xf32>
    %289 = arith.divf %287, %288 : vector<8x128xf32>
    %290 = vector.extract_strided_slice %270 {offsets = [0, 256], sizes = [8, 128], strides = [1, 1]} : vector<8x384xf32> to vector<8x128xf32>
    %291 = vector.extract_strided_slice %273 {offsets = [0, 256], sizes = [8, 128], strides = [1, 1]} : vector<8x384xf32> to vector<8x128xf32>
    %292 = arith.mulf %281, %291 : vector<8x128xf32>
    %293 = arith.addf %290, %292 : vector<8x128xf32>
    %294 = math.tanh %293 : vector<8x128xf32>
    %cst_81 = arith.constant 1.000000e+00 : f32
    %295 = vector.broadcast %cst_81 : f32 to vector<8x128xf32>
    %296 = arith.subf %295, %289 : vector<8x128xf32>
    %297 = arith.mulf %296, %294 : vector<8x128xf32>
    %298 = arith.mulf %289, %227 : vector<8x128xf32>
    %299 = arith.addf %297, %298 : vector<8x128xf32>
    %300 = vector.broadcast %c3_i32 : i32 to vector<8x1xi32>
    %301 = arith.cmpi sgt, %25, %300 : vector<8x1xi32>
    %302 = vector.shape_cast %301 : vector<8x1xi1> to vector<8x1xi1>
    %303 = vector.broadcast %302 : vector<8x1xi1> to vector<8x128xi1>
    %304 = arith.select %303, %299, %227 : vector<8x128xi1>, vector<8x128xf32>
    %c7_i32_82 = arith.constant 7 : i32
    %305 = arith.subi %c7_i32_82, %c3_i32 : i32
    %c8_i32_83 = arith.constant 8 : i32
    %306 = arith.muli %305, %c8_i32_83 : i32
    %307 = tpu.assume_multiple %306, 8 : i32
    %308 = arith.index_cast %307 : i32 to index
    %c0_84 = arith.constant 0 : index
    %309 = vector.load %arg24[%308, %c0_84] : memref<64x384xf32, #tpu.memory_space<vmem>>, vector<8x384xf32>
    %cst_85 = arith.constant dense<0.000000e+00> : vector<8x384xf32>
    %310 = tpu.matmul %266, %34, %cst_85 {dimension_numbers = #tpu.dot_dimension_numbers<[1], [0], [0], [1], [0, 0, 1, 1], [], []>} : vector<8x128xf32>, vector<128x384xf32>, vector<8x384xf32> -> vector<8x384xf32>
    %311 = vector.broadcast %35 : vector<1x384xf32> to vector<8x384xf32>
    %312 = arith.addf %310, %311 : vector<8x384xf32>
    %313 = vector.extract_strided_slice %309 {offsets = [0, 0], sizes = [8, 128], strides = [1, 1]} : vector<8x384xf32> to vector<8x128xf32>
    %314 = vector.extract_strided_slice %312 {offsets = [0, 0], sizes = [8, 128], strides = [1, 1]} : vector<8x384xf32> to vector<8x128xf32>
    %315 = arith.addf %313, %314 : vector<8x128xf32>
    %316 = arith.negf %315 : vector<8x128xf32>
    %317 = math.exp %316 : vector<8x128xf32>
    %cst_86 = arith.constant 1.000000e+00 : f32
    %318 = vector.broadcast %cst_86 : f32 to vector<8x128xf32>
    %319 = arith.addf %318, %317 : vector<8x128xf32>
    %320 = arith.divf %318, %319 : vector<8x128xf32>
    %321 = vector.extract_strided_slice %309 {offsets = [0, 128], sizes = [8, 128], strides = [1, 1]} : vector<8x384xf32> to vector<8x128xf32>
    %322 = vector.extract_strided_slice %312 {offsets = [0, 128], sizes = [8, 128], strides = [1, 1]} : vector<8x384xf32> to vector<8x128xf32>
    %323 = arith.addf %321, %322 : vector<8x128xf32>
    %324 = arith.negf %323 : vector<8x128xf32>
    %325 = math.exp %324 : vector<8x128xf32>
    %cst_87 = arith.constant 1.000000e+00 : f32
    %326 = vector.broadcast %cst_87 : f32 to vector<8x128xf32>
    %327 = arith.addf %326, %325 : vector<8x128xf32>
    %328 = arith.divf %326, %327 : vector<8x128xf32>
    %329 = vector.extract_strided_slice %309 {offsets = [0, 256], sizes = [8, 128], strides = [1, 1]} : vector<8x384xf32> to vector<8x128xf32>
    %330 = vector.extract_strided_slice %312 {offsets = [0, 256], sizes = [8, 128], strides = [1, 1]} : vector<8x384xf32> to vector<8x128xf32>
    %331 = arith.mulf %320, %330 : vector<8x128xf32>
    %332 = arith.addf %329, %331 : vector<8x128xf32>
    %333 = math.tanh %332 : vector<8x128xf32>
    %cst_88 = arith.constant 1.000000e+00 : f32
    %334 = vector.broadcast %cst_88 : f32 to vector<8x128xf32>
    %335 = arith.subf %334, %328 : vector<8x128xf32>
    %336 = arith.mulf %335, %333 : vector<8x128xf32>
    %337 = arith.mulf %328, %266 : vector<8x128xf32>
    %338 = arith.addf %336, %337 : vector<8x128xf32>
    %339 = vector.broadcast %305 : i32 to vector<8x1xi32>
    %340 = arith.cmpi sgt, %25, %339 : vector<8x1xi32>
    %341 = vector.shape_cast %340 : vector<8x1xi1> to vector<8x1xi1>
    %342 = vector.broadcast %341 : vector<8x1xi1> to vector<8x128xi1>
    %343 = arith.select %342, %338, %266 : vector<8x128xi1>, vector<8x128xf32>
    %c4_i32 = arith.constant 4 : i32
    %c8_i32_89 = arith.constant 8 : i32
    %344 = arith.muli %c4_i32, %c8_i32_89 : i32
    %345 = tpu.assume_multiple %344, 8 : i32
    %346 = arith.index_cast %345 : i32 to index
    %c0_90 = arith.constant 0 : index
    %347 = vector.load %arg23[%346, %c0_90] : memref<64x384xf32, #tpu.memory_space<vmem>>, vector<8x384xf32>
    %cst_91 = arith.constant dense<0.000000e+00> : vector<8x384xf32>
    %348 = tpu.matmul %304, %32, %cst_91 {dimension_numbers = #tpu.dot_dimension_numbers<[1], [0], [0], [1], [0, 0, 1, 1], [], []>} : vector<8x128xf32>, vector<128x384xf32>, vector<8x384xf32> -> vector<8x384xf32>
    %349 = vector.broadcast %33 : vector<1x384xf32> to vector<8x384xf32>
    %350 = arith.addf %348, %349 : vector<8x384xf32>
    %351 = vector.extract_strided_slice %347 {offsets = [0, 0], sizes = [8, 128], strides = [1, 1]} : vector<8x384xf32> to vector<8x128xf32>
    %352 = vector.extract_strided_slice %350 {offsets = [0, 0], sizes = [8, 128], strides = [1, 1]} : vector<8x384xf32> to vector<8x128xf32>
    %353 = arith.addf %351, %352 : vector<8x128xf32>
    %354 = arith.negf %353 : vector<8x128xf32>
    %355 = math.exp %354 : vector<8x128xf32>
    %cst_92 = arith.constant 1.000000e+00 : f32
    %356 = vector.broadcast %cst_92 : f32 to vector<8x128xf32>
    %357 = arith.addf %356, %355 : vector<8x128xf32>
    %358 = arith.divf %356, %357 : vector<8x128xf32>
    %359 = vector.extract_strided_slice %347 {offsets = [0, 128], sizes = [8, 128], strides = [1, 1]} : vector<8x384xf32> to vector<8x128xf32>
    %360 = vector.extract_strided_slice %350 {offsets = [0, 128], sizes = [8, 128], strides = [1, 1]} : vector<8x384xf32> to vector<8x128xf32>
    %361 = arith.addf %359, %360 : vector<8x128xf32>
    %362 = arith.negf %361 : vector<8x128xf32>
    %363 = math.exp %362 : vector<8x128xf32>
    %cst_93 = arith.constant 1.000000e+00 : f32
    %364 = vector.broadcast %cst_93 : f32 to vector<8x128xf32>
    %365 = arith.addf %364, %363 : vector<8x128xf32>
    %366 = arith.divf %364, %365 : vector<8x128xf32>
    %367 = vector.extract_strided_slice %347 {offsets = [0, 256], sizes = [8, 128], strides = [1, 1]} : vector<8x384xf32> to vector<8x128xf32>
    %368 = vector.extract_strided_slice %350 {offsets = [0, 256], sizes = [8, 128], strides = [1, 1]} : vector<8x384xf32> to vector<8x128xf32>
    %369 = arith.mulf %358, %368 : vector<8x128xf32>
    %370 = arith.addf %367, %369 : vector<8x128xf32>
    %371 = math.tanh %370 : vector<8x128xf32>
    %cst_94 = arith.constant 1.000000e+00 : f32
    %372 = vector.broadcast %cst_94 : f32 to vector<8x128xf32>
    %373 = arith.subf %372, %366 : vector<8x128xf32>
    %374 = arith.mulf %373, %371 : vector<8x128xf32>
    %375 = arith.mulf %366, %304 : vector<8x128xf32>
    %376 = arith.addf %374, %375 : vector<8x128xf32>
    %377 = vector.broadcast %c4_i32 : i32 to vector<8x1xi32>
    %378 = arith.cmpi sgt, %25, %377 : vector<8x1xi32>
    %379 = vector.shape_cast %378 : vector<8x1xi1> to vector<8x1xi1>
    %380 = vector.broadcast %379 : vector<8x1xi1> to vector<8x128xi1>
    %381 = arith.select %380, %376, %304 : vector<8x128xi1>, vector<8x128xf32>
    %c7_i32_95 = arith.constant 7 : i32
    %382 = arith.subi %c7_i32_95, %c4_i32 : i32
    %c8_i32_96 = arith.constant 8 : i32
    %383 = arith.muli %382, %c8_i32_96 : i32
    %384 = tpu.assume_multiple %383, 8 : i32
    %385 = arith.index_cast %384 : i32 to index
    %c0_97 = arith.constant 0 : index
    %386 = vector.load %arg24[%385, %c0_97] : memref<64x384xf32, #tpu.memory_space<vmem>>, vector<8x384xf32>
    %cst_98 = arith.constant dense<0.000000e+00> : vector<8x384xf32>
    %387 = tpu.matmul %343, %34, %cst_98 {dimension_numbers = #tpu.dot_dimension_numbers<[1], [0], [0], [1], [0, 0, 1, 1], [], []>} : vector<8x128xf32>, vector<128x384xf32>, vector<8x384xf32> -> vector<8x384xf32>
    %388 = vector.broadcast %35 : vector<1x384xf32> to vector<8x384xf32>
    %389 = arith.addf %387, %388 : vector<8x384xf32>
    %390 = vector.extract_strided_slice %386 {offsets = [0, 0], sizes = [8, 128], strides = [1, 1]} : vector<8x384xf32> to vector<8x128xf32>
    %391 = vector.extract_strided_slice %389 {offsets = [0, 0], sizes = [8, 128], strides = [1, 1]} : vector<8x384xf32> to vector<8x128xf32>
    %392 = arith.addf %390, %391 : vector<8x128xf32>
    %393 = arith.negf %392 : vector<8x128xf32>
    %394 = math.exp %393 : vector<8x128xf32>
    %cst_99 = arith.constant 1.000000e+00 : f32
    %395 = vector.broadcast %cst_99 : f32 to vector<8x128xf32>
    %396 = arith.addf %395, %394 : vector<8x128xf32>
    %397 = arith.divf %395, %396 : vector<8x128xf32>
    %398 = vector.extract_strided_slice %386 {offsets = [0, 128], sizes = [8, 128], strides = [1, 1]} : vector<8x384xf32> to vector<8x128xf32>
    %399 = vector.extract_strided_slice %389 {offsets = [0, 128], sizes = [8, 128], strides = [1, 1]} : vector<8x384xf32> to vector<8x128xf32>
    %400 = arith.addf %398, %399 : vector<8x128xf32>
    %401 = arith.negf %400 : vector<8x128xf32>
    %402 = math.exp %401 : vector<8x128xf32>
    %cst_100 = arith.constant 1.000000e+00 : f32
    %403 = vector.broadcast %cst_100 : f32 to vector<8x128xf32>
    %404 = arith.addf %403, %402 : vector<8x128xf32>
    %405 = arith.divf %403, %404 : vector<8x128xf32>
    %406 = vector.extract_strided_slice %386 {offsets = [0, 256], sizes = [8, 128], strides = [1, 1]} : vector<8x384xf32> to vector<8x128xf32>
    %407 = vector.extract_strided_slice %389 {offsets = [0, 256], sizes = [8, 128], strides = [1, 1]} : vector<8x384xf32> to vector<8x128xf32>
    %408 = arith.mulf %397, %407 : vector<8x128xf32>
    %409 = arith.addf %406, %408 : vector<8x128xf32>
    %410 = math.tanh %409 : vector<8x128xf32>
    %cst_101 = arith.constant 1.000000e+00 : f32
    %411 = vector.broadcast %cst_101 : f32 to vector<8x128xf32>
    %412 = arith.subf %411, %405 : vector<8x128xf32>
    %413 = arith.mulf %412, %410 : vector<8x128xf32>
    %414 = arith.mulf %405, %343 : vector<8x128xf32>
    %415 = arith.addf %413, %414 : vector<8x128xf32>
    %416 = vector.broadcast %382 : i32 to vector<8x1xi32>
    %417 = arith.cmpi sgt, %25, %416 : vector<8x1xi32>
    %418 = vector.shape_cast %417 : vector<8x1xi1> to vector<8x1xi1>
    %419 = vector.broadcast %418 : vector<8x1xi1> to vector<8x128xi1>
    %420 = arith.select %419, %415, %343 : vector<8x128xi1>, vector<8x128xf32>
    %c5_i32 = arith.constant 5 : i32
    %c8_i32_102 = arith.constant 8 : i32
    %421 = arith.muli %c5_i32, %c8_i32_102 : i32
    %422 = tpu.assume_multiple %421, 8 : i32
    %423 = arith.index_cast %422 : i32 to index
    %c0_103 = arith.constant 0 : index
    %424 = vector.load %arg23[%423, %c0_103] : memref<64x384xf32, #tpu.memory_space<vmem>>, vector<8x384xf32>
    %cst_104 = arith.constant dense<0.000000e+00> : vector<8x384xf32>
    %425 = tpu.matmul %381, %32, %cst_104 {dimension_numbers = #tpu.dot_dimension_numbers<[1], [0], [0], [1], [0, 0, 1, 1], [], []>} : vector<8x128xf32>, vector<128x384xf32>, vector<8x384xf32> -> vector<8x384xf32>
    %426 = vector.broadcast %33 : vector<1x384xf32> to vector<8x384xf32>
    %427 = arith.addf %425, %426 : vector<8x384xf32>
    %428 = vector.extract_strided_slice %424 {offsets = [0, 0], sizes = [8, 128], strides = [1, 1]} : vector<8x384xf32> to vector<8x128xf32>
    %429 = vector.extract_strided_slice %427 {offsets = [0, 0], sizes = [8, 128], strides = [1, 1]} : vector<8x384xf32> to vector<8x128xf32>
    %430 = arith.addf %428, %429 : vector<8x128xf32>
    %431 = arith.negf %430 : vector<8x128xf32>
    %432 = math.exp %431 : vector<8x128xf32>
    %cst_105 = arith.constant 1.000000e+00 : f32
    %433 = vector.broadcast %cst_105 : f32 to vector<8x128xf32>
    %434 = arith.addf %433, %432 : vector<8x128xf32>
    %435 = arith.divf %433, %434 : vector<8x128xf32>
    %436 = vector.extract_strided_slice %424 {offsets = [0, 128], sizes = [8, 128], strides = [1, 1]} : vector<8x384xf32> to vector<8x128xf32>
    %437 = vector.extract_strided_slice %427 {offsets = [0, 128], sizes = [8, 128], strides = [1, 1]} : vector<8x384xf32> to vector<8x128xf32>
    %438 = arith.addf %436, %437 : vector<8x128xf32>
    %439 = arith.negf %438 : vector<8x128xf32>
    %440 = math.exp %439 : vector<8x128xf32>
    %cst_106 = arith.constant 1.000000e+00 : f32
    %441 = vector.broadcast %cst_106 : f32 to vector<8x128xf32>
    %442 = arith.addf %441, %440 : vector<8x128xf32>
    %443 = arith.divf %441, %442 : vector<8x128xf32>
    %444 = vector.extract_strided_slice %424 {offsets = [0, 256], sizes = [8, 128], strides = [1, 1]} : vector<8x384xf32> to vector<8x128xf32>
    %445 = vector.extract_strided_slice %427 {offsets = [0, 256], sizes = [8, 128], strides = [1, 1]} : vector<8x384xf32> to vector<8x128xf32>
    %446 = arith.mulf %435, %445 : vector<8x128xf32>
    %447 = arith.addf %444, %446 : vector<8x128xf32>
    %448 = math.tanh %447 : vector<8x128xf32>
    %cst_107 = arith.constant 1.000000e+00 : f32
    %449 = vector.broadcast %cst_107 : f32 to vector<8x128xf32>
    %450 = arith.subf %449, %443 : vector<8x128xf32>
    %451 = arith.mulf %450, %448 : vector<8x128xf32>
    %452 = arith.mulf %443, %381 : vector<8x128xf32>
    %453 = arith.addf %451, %452 : vector<8x128xf32>
    %454 = vector.broadcast %c5_i32 : i32 to vector<8x1xi32>
    %455 = arith.cmpi sgt, %25, %454 : vector<8x1xi32>
    %456 = vector.shape_cast %455 : vector<8x1xi1> to vector<8x1xi1>
    %457 = vector.broadcast %456 : vector<8x1xi1> to vector<8x128xi1>
    %458 = arith.select %457, %453, %381 : vector<8x128xi1>, vector<8x128xf32>
    %c7_i32_108 = arith.constant 7 : i32
    %459 = arith.subi %c7_i32_108, %c5_i32 : i32
    %c8_i32_109 = arith.constant 8 : i32
    %460 = arith.muli %459, %c8_i32_109 : i32
    %461 = tpu.assume_multiple %460, 8 : i32
    %462 = arith.index_cast %461 : i32 to index
    %c0_110 = arith.constant 0 : index
    %463 = vector.load %arg24[%462, %c0_110] : memref<64x384xf32, #tpu.memory_space<vmem>>, vector<8x384xf32>
    %cst_111 = arith.constant dense<0.000000e+00> : vector<8x384xf32>
    %464 = tpu.matmul %420, %34, %cst_111 {dimension_numbers = #tpu.dot_dimension_numbers<[1], [0], [0], [1], [0, 0, 1, 1], [], []>} : vector<8x128xf32>, vector<128x384xf32>, vector<8x384xf32> -> vector<8x384xf32>
    %465 = vector.broadcast %35 : vector<1x384xf32> to vector<8x384xf32>
    %466 = arith.addf %464, %465 : vector<8x384xf32>
    %467 = vector.extract_strided_slice %463 {offsets = [0, 0], sizes = [8, 128], strides = [1, 1]} : vector<8x384xf32> to vector<8x128xf32>
    %468 = vector.extract_strided_slice %466 {offsets = [0, 0], sizes = [8, 128], strides = [1, 1]} : vector<8x384xf32> to vector<8x128xf32>
    %469 = arith.addf %467, %468 : vector<8x128xf32>
    %470 = arith.negf %469 : vector<8x128xf32>
    %471 = math.exp %470 : vector<8x128xf32>
    %cst_112 = arith.constant 1.000000e+00 : f32
    %472 = vector.broadcast %cst_112 : f32 to vector<8x128xf32>
    %473 = arith.addf %472, %471 : vector<8x128xf32>
    %474 = arith.divf %472, %473 : vector<8x128xf32>
    %475 = vector.extract_strided_slice %463 {offsets = [0, 128], sizes = [8, 128], strides = [1, 1]} : vector<8x384xf32> to vector<8x128xf32>
    %476 = vector.extract_strided_slice %466 {offsets = [0, 128], sizes = [8, 128], strides = [1, 1]} : vector<8x384xf32> to vector<8x128xf32>
    %477 = arith.addf %475, %476 : vector<8x128xf32>
    %478 = arith.negf %477 : vector<8x128xf32>
    %479 = math.exp %478 : vector<8x128xf32>
    %cst_113 = arith.constant 1.000000e+00 : f32
    %480 = vector.broadcast %cst_113 : f32 to vector<8x128xf32>
    %481 = arith.addf %480, %479 : vector<8x128xf32>
    %482 = arith.divf %480, %481 : vector<8x128xf32>
    %483 = vector.extract_strided_slice %463 {offsets = [0, 256], sizes = [8, 128], strides = [1, 1]} : vector<8x384xf32> to vector<8x128xf32>
    %484 = vector.extract_strided_slice %466 {offsets = [0, 256], sizes = [8, 128], strides = [1, 1]} : vector<8x384xf32> to vector<8x128xf32>
    %485 = arith.mulf %474, %484 : vector<8x128xf32>
    %486 = arith.addf %483, %485 : vector<8x128xf32>
    %487 = math.tanh %486 : vector<8x128xf32>
    %cst_114 = arith.constant 1.000000e+00 : f32
    %488 = vector.broadcast %cst_114 : f32 to vector<8x128xf32>
    %489 = arith.subf %488, %482 : vector<8x128xf32>
    %490 = arith.mulf %489, %487 : vector<8x128xf32>
    %491 = arith.mulf %482, %420 : vector<8x128xf32>
    %492 = arith.addf %490, %491 : vector<8x128xf32>
    %493 = vector.broadcast %459 : i32 to vector<8x1xi32>
    %494 = arith.cmpi sgt, %25, %493 : vector<8x1xi32>
    %495 = vector.shape_cast %494 : vector<8x1xi1> to vector<8x1xi1>
    %496 = vector.broadcast %495 : vector<8x1xi1> to vector<8x128xi1>
    %497 = arith.select %496, %492, %420 : vector<8x128xi1>, vector<8x128xf32>
    %c6_i32 = arith.constant 6 : i32
    %c8_i32_115 = arith.constant 8 : i32
    %498 = arith.muli %c6_i32, %c8_i32_115 : i32
    %499 = tpu.assume_multiple %498, 8 : i32
    %500 = arith.index_cast %499 : i32 to index
    %c0_116 = arith.constant 0 : index
    %501 = vector.load %arg23[%500, %c0_116] : memref<64x384xf32, #tpu.memory_space<vmem>>, vector<8x384xf32>
    %cst_117 = arith.constant dense<0.000000e+00> : vector<8x384xf32>
    %502 = tpu.matmul %458, %32, %cst_117 {dimension_numbers = #tpu.dot_dimension_numbers<[1], [0], [0], [1], [0, 0, 1, 1], [], []>} : vector<8x128xf32>, vector<128x384xf32>, vector<8x384xf32> -> vector<8x384xf32>
    %503 = vector.broadcast %33 : vector<1x384xf32> to vector<8x384xf32>
    %504 = arith.addf %502, %503 : vector<8x384xf32>
    %505 = vector.extract_strided_slice %501 {offsets = [0, 0], sizes = [8, 128], strides = [1, 1]} : vector<8x384xf32> to vector<8x128xf32>
    %506 = vector.extract_strided_slice %504 {offsets = [0, 0], sizes = [8, 128], strides = [1, 1]} : vector<8x384xf32> to vector<8x128xf32>
    %507 = arith.addf %505, %506 : vector<8x128xf32>
    %508 = arith.negf %507 : vector<8x128xf32>
    %509 = math.exp %508 : vector<8x128xf32>
    %cst_118 = arith.constant 1.000000e+00 : f32
    %510 = vector.broadcast %cst_118 : f32 to vector<8x128xf32>
    %511 = arith.addf %510, %509 : vector<8x128xf32>
    %512 = arith.divf %510, %511 : vector<8x128xf32>
    %513 = vector.extract_strided_slice %501 {offsets = [0, 128], sizes = [8, 128], strides = [1, 1]} : vector<8x384xf32> to vector<8x128xf32>
    %514 = vector.extract_strided_slice %504 {offsets = [0, 128], sizes = [8, 128], strides = [1, 1]} : vector<8x384xf32> to vector<8x128xf32>
    %515 = arith.addf %513, %514 : vector<8x128xf32>
    %516 = arith.negf %515 : vector<8x128xf32>
    %517 = math.exp %516 : vector<8x128xf32>
    %cst_119 = arith.constant 1.000000e+00 : f32
    %518 = vector.broadcast %cst_119 : f32 to vector<8x128xf32>
    %519 = arith.addf %518, %517 : vector<8x128xf32>
    %520 = arith.divf %518, %519 : vector<8x128xf32>
    %521 = vector.extract_strided_slice %501 {offsets = [0, 256], sizes = [8, 128], strides = [1, 1]} : vector<8x384xf32> to vector<8x128xf32>
    %522 = vector.extract_strided_slice %504 {offsets = [0, 256], sizes = [8, 128], strides = [1, 1]} : vector<8x384xf32> to vector<8x128xf32>
    %523 = arith.mulf %512, %522 : vector<8x128xf32>
    %524 = arith.addf %521, %523 : vector<8x128xf32>
    %525 = math.tanh %524 : vector<8x128xf32>
    %cst_120 = arith.constant 1.000000e+00 : f32
    %526 = vector.broadcast %cst_120 : f32 to vector<8x128xf32>
    %527 = arith.subf %526, %520 : vector<8x128xf32>
    %528 = arith.mulf %527, %525 : vector<8x128xf32>
    %529 = arith.mulf %520, %458 : vector<8x128xf32>
    %530 = arith.addf %528, %529 : vector<8x128xf32>
    %531 = vector.broadcast %c6_i32 : i32 to vector<8x1xi32>
    %532 = arith.cmpi sgt, %25, %531 : vector<8x1xi32>
    %533 = vector.shape_cast %532 : vector<8x1xi1> to vector<8x1xi1>
    %534 = vector.broadcast %533 : vector<8x1xi1> to vector<8x128xi1>
    %535 = arith.select %534, %530, %458 : vector<8x128xi1>, vector<8x128xf32>
    %c7_i32_121 = arith.constant 7 : i32
    %536 = arith.subi %c7_i32_121, %c6_i32 : i32
    %c8_i32_122 = arith.constant 8 : i32
    %537 = arith.muli %536, %c8_i32_122 : i32
    %538 = tpu.assume_multiple %537, 8 : i32
    %539 = arith.index_cast %538 : i32 to index
    %c0_123 = arith.constant 0 : index
    %540 = vector.load %arg24[%539, %c0_123] : memref<64x384xf32, #tpu.memory_space<vmem>>, vector<8x384xf32>
    %cst_124 = arith.constant dense<0.000000e+00> : vector<8x384xf32>
    %541 = tpu.matmul %497, %34, %cst_124 {dimension_numbers = #tpu.dot_dimension_numbers<[1], [0], [0], [1], [0, 0, 1, 1], [], []>} : vector<8x128xf32>, vector<128x384xf32>, vector<8x384xf32> -> vector<8x384xf32>
    %542 = vector.broadcast %35 : vector<1x384xf32> to vector<8x384xf32>
    %543 = arith.addf %541, %542 : vector<8x384xf32>
    %544 = vector.extract_strided_slice %540 {offsets = [0, 0], sizes = [8, 128], strides = [1, 1]} : vector<8x384xf32> to vector<8x128xf32>
    %545 = vector.extract_strided_slice %543 {offsets = [0, 0], sizes = [8, 128], strides = [1, 1]} : vector<8x384xf32> to vector<8x128xf32>
    %546 = arith.addf %544, %545 : vector<8x128xf32>
    %547 = arith.negf %546 : vector<8x128xf32>
    %548 = math.exp %547 : vector<8x128xf32>
    %cst_125 = arith.constant 1.000000e+00 : f32
    %549 = vector.broadcast %cst_125 : f32 to vector<8x128xf32>
    %550 = arith.addf %549, %548 : vector<8x128xf32>
    %551 = arith.divf %549, %550 : vector<8x128xf32>
    %552 = vector.extract_strided_slice %540 {offsets = [0, 128], sizes = [8, 128], strides = [1, 1]} : vector<8x384xf32> to vector<8x128xf32>
    %553 = vector.extract_strided_slice %543 {offsets = [0, 128], sizes = [8, 128], strides = [1, 1]} : vector<8x384xf32> to vector<8x128xf32>
    %554 = arith.addf %552, %553 : vector<8x128xf32>
    %555 = arith.negf %554 : vector<8x128xf32>
    %556 = math.exp %555 : vector<8x128xf32>
    %cst_126 = arith.constant 1.000000e+00 : f32
    %557 = vector.broadcast %cst_126 : f32 to vector<8x128xf32>
    %558 = arith.addf %557, %556 : vector<8x128xf32>
    %559 = arith.divf %557, %558 : vector<8x128xf32>
    %560 = vector.extract_strided_slice %540 {offsets = [0, 256], sizes = [8, 128], strides = [1, 1]} : vector<8x384xf32> to vector<8x128xf32>
    %561 = vector.extract_strided_slice %543 {offsets = [0, 256], sizes = [8, 128], strides = [1, 1]} : vector<8x384xf32> to vector<8x128xf32>
    %562 = arith.mulf %551, %561 : vector<8x128xf32>
    %563 = arith.addf %560, %562 : vector<8x128xf32>
    %564 = math.tanh %563 : vector<8x128xf32>
    %cst_127 = arith.constant 1.000000e+00 : f32
    %565 = vector.broadcast %cst_127 : f32 to vector<8x128xf32>
    %566 = arith.subf %565, %559 : vector<8x128xf32>
    %567 = arith.mulf %566, %564 : vector<8x128xf32>
    %568 = arith.mulf %559, %497 : vector<8x128xf32>
    %569 = arith.addf %567, %568 : vector<8x128xf32>
    %570 = vector.broadcast %536 : i32 to vector<8x1xi32>
    %571 = arith.cmpi sgt, %25, %570 : vector<8x1xi32>
    %572 = vector.shape_cast %571 : vector<8x1xi1> to vector<8x1xi1>
    %573 = vector.broadcast %572 : vector<8x1xi1> to vector<8x128xi1>
    %574 = arith.select %573, %569, %497 : vector<8x128xi1>, vector<8x128xf32>
    %c7_i32_128 = arith.constant 7 : i32
    %c8_i32_129 = arith.constant 8 : i32
    %575 = arith.muli %c7_i32_128, %c8_i32_129 : i32
    %576 = tpu.assume_multiple %575, 8 : i32
    %577 = arith.index_cast %576 : i32 to index
    %c0_130 = arith.constant 0 : index
    %578 = vector.load %arg23[%577, %c0_130] : memref<64x384xf32, #tpu.memory_space<vmem>>, vector<8x384xf32>
    %cst_131 = arith.constant dense<0.000000e+00> : vector<8x384xf32>
    %579 = tpu.matmul %535, %32, %cst_131 {dimension_numbers = #tpu.dot_dimension_numbers<[1], [0], [0], [1], [0, 0, 1, 1], [], []>} : vector<8x128xf32>, vector<128x384xf32>, vector<8x384xf32> -> vector<8x384xf32>
    %580 = vector.broadcast %33 : vector<1x384xf32> to vector<8x384xf32>
    %581 = arith.addf %579, %580 : vector<8x384xf32>
    %582 = vector.extract_strided_slice %578 {offsets = [0, 0], sizes = [8, 128], strides = [1, 1]} : vector<8x384xf32> to vector<8x128xf32>
    %583 = vector.extract_strided_slice %581 {offsets = [0, 0], sizes = [8, 128], strides = [1, 1]} : vector<8x384xf32> to vector<8x128xf32>
    %584 = arith.addf %582, %583 : vector<8x128xf32>
    %585 = arith.negf %584 : vector<8x128xf32>
    %586 = math.exp %585 : vector<8x128xf32>
    %cst_132 = arith.constant 1.000000e+00 : f32
    %587 = vector.broadcast %cst_132 : f32 to vector<8x128xf32>
    %588 = arith.addf %587, %586 : vector<8x128xf32>
    %589 = arith.divf %587, %588 : vector<8x128xf32>
    %590 = vector.extract_strided_slice %578 {offsets = [0, 128], sizes = [8, 128], strides = [1, 1]} : vector<8x384xf32> to vector<8x128xf32>
    %591 = vector.extract_strided_slice %581 {offsets = [0, 128], sizes = [8, 128], strides = [1, 1]} : vector<8x384xf32> to vector<8x128xf32>
    %592 = arith.addf %590, %591 : vector<8x128xf32>
    %593 = arith.negf %592 : vector<8x128xf32>
    %594 = math.exp %593 : vector<8x128xf32>
    %cst_133 = arith.constant 1.000000e+00 : f32
    %595 = vector.broadcast %cst_133 : f32 to vector<8x128xf32>
    %596 = arith.addf %595, %594 : vector<8x128xf32>
    %597 = arith.divf %595, %596 : vector<8x128xf32>
    %598 = vector.extract_strided_slice %578 {offsets = [0, 256], sizes = [8, 128], strides = [1, 1]} : vector<8x384xf32> to vector<8x128xf32>
    %599 = vector.extract_strided_slice %581 {offsets = [0, 256], sizes = [8, 128], strides = [1, 1]} : vector<8x384xf32> to vector<8x128xf32>
    %600 = arith.mulf %589, %599 : vector<8x128xf32>
    %601 = arith.addf %598, %600 : vector<8x128xf32>
    %602 = math.tanh %601 : vector<8x128xf32>
    %cst_134 = arith.constant 1.000000e+00 : f32
    %603 = vector.broadcast %cst_134 : f32 to vector<8x128xf32>
    %604 = arith.subf %603, %597 : vector<8x128xf32>
    %605 = arith.mulf %604, %602 : vector<8x128xf32>
    %606 = arith.mulf %597, %535 : vector<8x128xf32>
    %607 = arith.addf %605, %606 : vector<8x128xf32>
    %608 = vector.broadcast %c7_i32_128 : i32 to vector<8x1xi32>
    %609 = arith.cmpi sgt, %25, %608 : vector<8x1xi32>
    %610 = vector.shape_cast %609 : vector<8x1xi1> to vector<8x1xi1>
    %611 = vector.broadcast %610 : vector<8x1xi1> to vector<8x128xi1>
    %612 = arith.select %611, %607, %535 : vector<8x128xi1>, vector<8x128xf32>
    %c7_i32_135 = arith.constant 7 : i32
    %613 = arith.subi %c7_i32_135, %c7_i32_128 : i32
    %c8_i32_136 = arith.constant 8 : i32
    %614 = arith.muli %613, %c8_i32_136 : i32
    %615 = tpu.assume_multiple %614, 8 : i32
    %616 = arith.index_cast %615 : i32 to index
    %c0_137 = arith.constant 0 : index
    %617 = vector.load %arg24[%616, %c0_137] : memref<64x384xf32, #tpu.memory_space<vmem>>, vector<8x384xf32>
    %cst_138 = arith.constant dense<0.000000e+00> : vector<8x384xf32>
    %618 = tpu.matmul %574, %34, %cst_138 {dimension_numbers = #tpu.dot_dimension_numbers<[1], [0], [0], [1], [0, 0, 1, 1], [], []>} : vector<8x128xf32>, vector<128x384xf32>, vector<8x384xf32> -> vector<8x384xf32>
    %619 = vector.broadcast %35 : vector<1x384xf32> to vector<8x384xf32>
    %620 = arith.addf %618, %619 : vector<8x384xf32>
    %621 = vector.extract_strided_slice %617 {offsets = [0, 0], sizes = [8, 128], strides = [1, 1]} : vector<8x384xf32> to vector<8x128xf32>
    %622 = vector.extract_strided_slice %620 {offsets = [0, 0], sizes = [8, 128], strides = [1, 1]} : vector<8x384xf32> to vector<8x128xf32>
    %623 = arith.addf %621, %622 : vector<8x128xf32>
    %624 = arith.negf %623 : vector<8x128xf32>
    %625 = math.exp %624 : vector<8x128xf32>
    %cst_139 = arith.constant 1.000000e+00 : f32
    %626 = vector.broadcast %cst_139 : f32 to vector<8x128xf32>
    %627 = arith.addf %626, %625 : vector<8x128xf32>
    %628 = arith.divf %626, %627 : vector<8x128xf32>
    %629 = vector.extract_strided_slice %617 {offsets = [0, 128], sizes = [8, 128], strides = [1, 1]} : vector<8x384xf32> to vector<8x128xf32>
    %630 = vector.extract_strided_slice %620 {offsets = [0, 128], sizes = [8, 128], strides = [1, 1]} : vector<8x384xf32> to vector<8x128xf32>
    %631 = arith.addf %629, %630 : vector<8x128xf32>
    %632 = arith.negf %631 : vector<8x128xf32>
    %633 = math.exp %632 : vector<8x128xf32>
    %cst_140 = arith.constant 1.000000e+00 : f32
    %634 = vector.broadcast %cst_140 : f32 to vector<8x128xf32>
    %635 = arith.addf %634, %633 : vector<8x128xf32>
    %636 = arith.divf %634, %635 : vector<8x128xf32>
    %637 = vector.extract_strided_slice %617 {offsets = [0, 256], sizes = [8, 128], strides = [1, 1]} : vector<8x384xf32> to vector<8x128xf32>
    %638 = vector.extract_strided_slice %620 {offsets = [0, 256], sizes = [8, 128], strides = [1, 1]} : vector<8x384xf32> to vector<8x128xf32>
    %639 = arith.mulf %628, %638 : vector<8x128xf32>
    %640 = arith.addf %637, %639 : vector<8x128xf32>
    %641 = math.tanh %640 : vector<8x128xf32>
    %cst_141 = arith.constant 1.000000e+00 : f32
    %642 = vector.broadcast %cst_141 : f32 to vector<8x128xf32>
    %643 = arith.subf %642, %636 : vector<8x128xf32>
    %644 = arith.mulf %643, %641 : vector<8x128xf32>
    %645 = arith.mulf %636, %574 : vector<8x128xf32>
    %646 = arith.addf %644, %645 : vector<8x128xf32>
    %647 = vector.broadcast %613 : i32 to vector<8x1xi32>
    %648 = arith.cmpi sgt, %25, %647 : vector<8x1xi32>
    %649 = vector.shape_cast %648 : vector<8x1xi1> to vector<8x1xi1>
    %650 = vector.broadcast %649 : vector<8x1xi1> to vector<8x128xi1>
    %651 = arith.select %650, %646, %574 : vector<8x128xi1>, vector<8x128xf32>
    %c8_i32_142 = arith.constant 8 : i32
    %652 = tpu.concatenate %612, %651 in 1 : vector<8x128xf32>, vector<8x128xf32> -> vector<8x256xf32>
    %c0_143 = arith.constant 0 : index
    %c0_144 = arith.constant 0 : index
    %653 = vector.load %arg16[%c0_143, %c0_144] : memref<256x128xf32, #tpu.memory_space<vmem>>, vector<256x128xf32>
    %cst_145 = arith.constant dense<0.000000e+00> : vector<8x128xf32>
    %654 = tpu.matmul %652, %653, %cst_145 {dimension_numbers = #tpu.dot_dimension_numbers<[1], [0], [0], [1], [0, 0, 1, 1], [], []>} : vector<8x256xf32>, vector<256x128xf32>, vector<8x128xf32> -> vector<8x128xf32>
    %c0_146 = arith.constant 0 : index
    %c0_147 = arith.constant 0 : index
    %655 = vector.load %arg17[%c0_146, %c0_147] : memref<1x128xf32, #tpu.memory_space<vmem>>, vector<1x128xf32>
    %656 = vector.broadcast %655 : vector<1x128xf32> to vector<8x128xf32>
    %657 = arith.addf %654, %656 : vector<8x128xf32>
    %cst_148 = arith.constant dense<0.000000e+00> : vector<8xf32>
    %658 = vector.multi_reduction <add>, %657, %cst_148 [1] : vector<8x128xf32> to vector<8xf32>
    %659 = vector.shape_cast %658 : vector<8xf32> to vector<8x1xf32>
    %cst_149 = arith.constant 1.280000e+02 : f32
    %660 = vector.broadcast %cst_149 : f32 to vector<8x1xf32>
    %661 = arith.divf %659, %660 : vector<8x1xf32>
    %662 = vector.broadcast %661 : vector<8x1xf32> to vector<8x128xf32>
    %663 = arith.subf %657, %662 : vector<8x128xf32>
    %664 = arith.mulf %663, %663 : vector<8x128xf32>
    %cst_150 = arith.constant dense<0.000000e+00> : vector<8xf32>
    %665 = vector.multi_reduction <add>, %664, %cst_150 [1] : vector<8x128xf32> to vector<8xf32>
    %666 = vector.shape_cast %665 : vector<8xf32> to vector<8x1xf32>
    %cst_151 = arith.constant 1.280000e+02 : f32
    %667 = vector.broadcast %cst_151 : f32 to vector<8x1xf32>
    %668 = arith.divf %666, %667 : vector<8x1xf32>
    %669 = vector.broadcast %661 : vector<8x1xf32> to vector<8x128xf32>
    %670 = arith.subf %657, %669 : vector<8x128xf32>
    %cst_152 = arith.constant 9.99999974E-6 : f32
    %671 = vector.broadcast %cst_152 : f32 to vector<8x1xf32>
    %672 = arith.addf %668, %671 : vector<8x1xf32>
    %673 = math.rsqrt %672 : vector<8x1xf32>
    %674 = vector.broadcast %673 : vector<8x1xf32> to vector<8x128xf32>
    %675 = arith.mulf %670, %674 : vector<8x128xf32>
    %c0_153 = arith.constant 0 : index
    %c0_154 = arith.constant 0 : index
    %676 = vector.load %arg18[%c0_153, %c0_154] : memref<1x128xf32, #tpu.memory_space<vmem>>, vector<1x128xf32>
    %677 = vector.broadcast %676 : vector<1x128xf32> to vector<8x128xf32>
    %678 = arith.mulf %675, %677 : vector<8x128xf32>
    %c0_155 = arith.constant 0 : index
    %c0_156 = arith.constant 0 : index
    %679 = vector.load %arg19[%c0_155, %c0_156] : memref<1x128xf32, #tpu.memory_space<vmem>>, vector<1x128xf32>
    %680 = vector.broadcast %679 : vector<1x128xf32> to vector<8x128xf32>
    %681 = arith.addf %678, %680 : vector<8x128xf32>
    %cst_157 = arith.constant 0.000000e+00 : f32
    %682 = vector.broadcast %cst_157 : f32 to vector<8x128xf32>
    %683 = arith.cmpf oge, %681, %682 : vector<8x128xf32>
    %cst_158 = arith.constant 2.000000e-01 : f32
    %684 = vector.broadcast %cst_158 : f32 to vector<8x128xf32>
    %685 = arith.mulf %684, %681 : vector<8x128xf32>
    %686 = arith.select %683, %681, %685 : vector<8x128xi1>, vector<8x128xf32>
    %c0_159 = arith.constant 0 : index
    %c0_160 = arith.constant 0 : index
    %687 = vector.load %arg20[%c0_159, %c0_160] : memref<128x128xf32, #tpu.memory_space<vmem>>, vector<128x128xf32>
    %cst_161 = arith.constant dense<0.000000e+00> : vector<8x128xf32>
    %688 = tpu.matmul %686, %687, %cst_161 {dimension_numbers = #tpu.dot_dimension_numbers<[1], [0], [0], [1], [0, 0, 1, 1], [], []>} : vector<8x128xf32>, vector<128x128xf32>, vector<8x128xf32> -> vector<8x128xf32>
    %c0_162 = arith.constant 0 : index
    %c0_163 = arith.constant 0 : index
    %689 = vector.load %arg21[%c0_162, %c0_163] : memref<1x128xf32, #tpu.memory_space<vmem>>, vector<1x128xf32>
    %690 = vector.broadcast %689 : vector<1x128xf32> to vector<8x128xf32>
    %691 = arith.addf %688, %690 : vector<8x128xf32>
    %c0_164 = arith.constant 0 : index
    %c0_165 = arith.constant 0 : index
    %692 = vector.load %arg22[%c0_164, %c0_165] : memref<8x128xf32, #tpu.memory_space<vmem>>, vector<8x128xf32>
    tpu.vector_store %arg22[%c0_164, %c0_165], %691 {strides = array<i32>} : memref<8x128xf32, #tpu.memory_space<vmem>>, vector<8x128xf32>,
    return
  }
}

</mosaic_0001>

<llo_original>
// kernel: text_encoder_bigru_co.1
$region0: #{text_encoder_bigru_co.1}
  #allocation0 [shape = 'u32[]', space=smem, size = 0x4, offset = 0x4, fixed_abs, tag = 'smem constant byte address 0x4 - core index']
  #allocation1 [shape = 'u32[72,128]{1,0:T(1,128)}', space=vmem, size = 0x9000, scoped, tag = 'internal scratch']
  #allocation2 [shape = 'f32[64,384]{1,0:T(8,128)}', space=vmem, size = 0x18000, scoped, tag = 'scratch operand']
  #allocation3 [shape = 'f32[64,384]{1,0:T(8,128)}', space=vmem, size = 0x18000, scoped, tag = 'scratch operand']
  %s0 = inlined_call_operand.vmem [shape: f32[64,128], index: 0, kind: input, shape index: {}]
  %s1 = inlined_call_operand.vmem [shape: f32[64,16], index: 1, kind: input, shape index: {}]
  %s2 = inlined_call_operand.vmem [shape: s32[8,1], index: 2, kind: input, shape index: {}]
  %s3 = inlined_call_operand.vmem [shape: f32[16,128], index: 3, kind: input, shape index: {}]
  %s4 = inlined_call_operand.vmem [shape: f32[1,128], index: 4, kind: input, shape index: {}]
  %s5 = inlined_call_operand.vmem [shape: f32[128,128], index: 5, kind: input, shape index: {}]
  %s6 = inlined_call_operand.vmem [shape: f32[1,128], index: 6, kind: input, shape index: {}]
  %s7 = inlined_call_operand.vmem [shape: f32[128,384], index: 7, kind: input, shape index: {}]
  %s8 = inlined_call_operand.vmem [shape: f32[128,384], index: 8, kind: input, shape index: {}]
  %s9 = inlined_call_operand.vmem [shape: f32[1,384], index: 9, kind: input, shape index: {}]
  %s10 = inlined_call_operand.vmem [shape: f32[1,384], index: 10, kind: input, shape index: {}]
  %s11 = inlined_call_operand.vmem [shape: f32[128,384], index: 11, kind: input, shape index: {}]
  %s12 = inlined_call_operand.vmem [shape: f32[128,384], index: 12, kind: input, shape index: {}]
  %s13 = inlined_call_operand.vmem [shape: f32[1,384], index: 13, kind: input, shape index: {}]
  %s14 = inlined_call_operand.vmem [shape: f32[1,384], index: 14, kind: input, shape index: {}]
  %s15 = inlined_call_operand.vmem [shape: f32[2,128], index: 15, kind: input, shape index: {}]
  %s16 = inlined_call_operand.vmem [shape: f32[256,128], index: 16, kind: input, shape index: {}]
  %s17 = inlined_call_operand.vmem [shape: f32[1,128], index: 17, kind: input, shape index: {}]
  %s18 = inlined_call_operand.vmem [shape: f32[1,128], index: 18, kind: input, shape index: {}]
  %s19 = inlined_call_operand.vmem [shape: f32[1,128], index: 19, kind: input, shape index: {}]
  %s20 = inlined_call_operand.vmem [shape: f32[128,128], index: 20, kind: input, shape index: {}]
  %s21 = inlined_call_operand.vmem [shape: f32[1,128], index: 21, kind: input, shape index: {}]
  %s22 = inlined_call_operand.hbm [shape: f32[8,128], index: 22, kind: output, shape index: {}]
  %s23 = sld [smem:[#allocation0]]
  $region98: #{text_encoder_bigru_co.1} parent=0
    _
  %s25 = ssub.s32 1, %s23
  %s26 = scalar_select 0, %s25, %s23
  $region1: #{text_encoder_bigru_co.1} parent=0
    #allocation4 [shape = 'u8[4096]{0}', space=vmem, size = 0x1000, scoped, tag = 'output window, operand 0, single buffered']
    #allocation5 [shape = 's32[1]{0}', space=sflag, size = 0x4, scoped, tag = 'scoped memory for text_encoder_bigru_co.1']
    %27 = vsyncpa [#allocation5], 0
    // Predicated region
    $region2: #{text_encoder_bigru_co.1} parent=1 // pred_check
      _
    $region3: #{text_encoder_bigru_co.1} parent=1 // pred_check_branch
      %29 = sbr.rel (0) target = $region5
    $region4: #{text_encoder_bigru_co.1} parent=1 // pred_region
      _
    $region5: #{text_encoder_bigru_co.1} parent=1 // pred_fallthru
      _
    // Predicated region
    $region6: #{text_encoder_bigru_co.1} parent=1 // pred_check
      _
    $region7: #{text_encoder_bigru_co.1} parent=1 // pred_check_branch
      %31 = sbr.rel (0) target = $region9
    $region8: #{text_encoder_bigru_co.1} parent=1 // pred_region
      _
    $region9: #{text_encoder_bigru_co.1} parent=1 // pred_fallthru
      _
    // Predicated region
    $region10: #{text_encoder_bigru_co.1} parent=1 // pred_check
      _
    $region11: #{text_encoder_bigru_co.1} parent=1 // pred_check_branch
      %33 = sbr.rel (0) target = $region13
    $region12: #{text_encoder_bigru_co.1} parent=1 // pred_region
      _
    $region13: #{text_encoder_bigru_co.1} parent=1 // pred_fallthru
      _
    // Predicated region
    $region14: #{text_encoder_bigru_co.1} parent=1 // pred_check
      _
    $region15: #{text_encoder_bigru_co.1} parent=1 // pred_check_branch
      %35 = sbr.rel (0) target = $region17
    $region16: #{text_encoder_bigru_co.1} parent=1 // pred_region
      _
    $region17: #{text_encoder_bigru_co.1} parent=1 // pred_fallthru
      _
    // Predicated region
    $region18: #{text_encoder_bigru_co.1} parent=1 // pred_check
      _
    $region19: #{text_encoder_bigru_co.1} parent=1 // pred_check_branch
      %37 = sbr.rel (0) target = $region21
    $region20: #{text_encoder_bigru_co.1} parent=1 // pred_region
      _
    $region21: #{text_encoder_bigru_co.1} parent=1 // pred_fallthru
      _
    // Predicated region
    $region22: #{text_encoder_bigru_co.1} parent=1 // pred_check
      _
    $region23: #{text_encoder_bigru_co.1} parent=1 // pred_check_branch
      %39 = sbr.rel (0) target = $region25
    $region24: #{text_encoder_bigru_co.1} parent=1 // pred_region
      _
    $region25: #{text_encoder_bigru_co.1} parent=1 // pred_fallthru
      _
    // Predicated region
    $region26: #{text_encoder_bigru_co.1} parent=1 // pred_check
      _
    $region27: #{text_encoder_bigru_co.1} parent=1 // pred_check_branch
      %41 = sbr.rel (0) target = $region29
    $region28: #{text_encoder_bigru_co.1} parent=1 // pred_region
      _
    $region29: #{text_encoder_bigru_co.1} parent=1 // pred_fallthru
      _
    // Predicated region
    $region30: #{text_encoder_bigru_co.1} parent=1 // pred_check
      _
    $region31: #{text_encoder_bigru_co.1} parent=1 // pred_check_branch
      %43 = sbr.rel (0) target = $region33
    $region32: #{text_encoder_bigru_co.1} parent=1 // pred_region
      _
    $region33: #{text_encoder_bigru_co.1} parent=1 // pred_fallthru
      _
    // Predicated region
    $region34: #{text_encoder_bigru_co.1} parent=1 // pred_check
      _
    $region35: #{text_encoder_bigru_co.1} parent=1 // pred_check_branch
      %45 = sbr.rel (0) target = $region37
    $region36: #{text_encoder_bigru_co.1} parent=1 // pred_region
      _
    $region37: #{text_encoder_bigru_co.1} parent=1 // pred_fallthru
      _
    // Predicated region
    $region38: #{text_encoder_bigru_co.1} parent=1 // pred_check
      _
    $region39: #{text_encoder_bigru_co.1} parent=1 // pred_check_branch
      %47 = sbr.rel (0) target = $region41
    $region40: #{text_encoder_bigru_co.1} parent=1 // pred_region
      _
    $region41: #{text_encoder_bigru_co.1} parent=1 // pred_fallthru
      _
    // Predicated region
    $region42: #{text_encoder_bigru_co.1} parent=1 // pred_check
      _
    $region43: #{text_encoder_bigru_co.1} parent=1 // pred_check_branch
      %49 = sbr.rel (0) target = $region45
    $region44: #{text_encoder_bigru_co.1} parent=1 // pred_region
      _
    $region45: #{text_encoder_bigru_co.1} parent=1 // pred_fallthru
      _
    // Predicated region
    $region46: #{text_encoder_bigru_co.1} parent=1 // pred_check
      _
    $region47: #{text_encoder_bigru_co.1} parent=1 // pred_check_branch
      %51 = sbr.rel (0) target = $region49
    $region48: #{text_encoder_bigru_co.1} parent=1 // pred_region
      _
    $region49: #{text_encoder_bigru_co.1} parent=1 // pred_fallthru
      _
    // Predicated region
    $region50: #{text_encoder_bigru_co.1} parent=1 // pred_check
      _
    $region51: #{text_encoder_bigru_co.1} parent=1 // pred_check_branch
      %53 = sbr.rel (0) target = $region53
    $region52: #{text_encoder_bigru_co.1} parent=1 // pred_region
      _
    $region53: #{text_encoder_bigru_co.1} parent=1 // pred_fallthru
      _
    // Predicated region
    $region54: #{text_encoder_bigru_co.1} parent=1 // pred_check
      _
    $region55: #{text_encoder_bigru_co.1} parent=1 // pred_check_branch
      %55 = sbr.rel (0) target = $region57
    $region56: #{text_encoder_bigru_co.1} parent=1 // pred_region
      _
    $region57: #{text_encoder_bigru_co.1} parent=1 // pred_fallthru
      _
    // Predicated region
    $region58: #{text_encoder_bigru_co.1} parent=1 // pred_check
      _
    $region59: #{text_encoder_bigru_co.1} parent=1 // pred_check_branch
      %57 = sbr.rel (0) target = $region61
    $region60: #{text_encoder_bigru_co.1} parent=1 // pred_region
      _
    $region61: #{text_encoder_bigru_co.1} parent=1 // pred_fallthru
      _
    // Predicated region
    $region62: #{text_encoder_bigru_co.1} parent=1 // pred_check
      _
    $region63: #{text_encoder_bigru_co.1} parent=1 // pred_check_branch
      %59 = sbr.rel (0) target = $region65
    $region64: #{text_encoder_bigru_co.1} parent=1 // pred_region
      _
    $region65: #{text_encoder_bigru_co.1} parent=1 // pred_fallthru
      _
    // Predicated region
    $region66: #{text_encoder_bigru_co.1} parent=1 // pred_check
      _
    $region67: #{text_encoder_bigru_co.1} parent=1 // pred_check_branch
      %61 = sbr.rel (0) target = $region69
    $region68: #{text_encoder_bigru_co.1} parent=1 // pred_region
      _
    $region69: #{text_encoder_bigru_co.1} parent=1 // pred_fallthru
      _
    // Predicated region
    $region70: #{text_encoder_bigru_co.1} parent=1 // pred_check
      _
    $region71: #{text_encoder_bigru_co.1} parent=1 // pred_check_branch
      %63 = sbr.rel (0) target = $region73
    $region72: #{text_encoder_bigru_co.1} parent=1 // pred_region
      _
    $region73: #{text_encoder_bigru_co.1} parent=1 // pred_fallthru
      _
    // Predicated region
    $region74: #{text_encoder_bigru_co.1} parent=1 // pred_check
      _
    $region75: #{text_encoder_bigru_co.1} parent=1 // pred_check_branch
      %65 = sbr.rel (0) target = $region77
    $region76: #{text_encoder_bigru_co.1} parent=1 // pred_region
      _
    $region77: #{text_encoder_bigru_co.1} parent=1 // pred_fallthru
      _
    // Predicated region
    $region78: #{text_encoder_bigru_co.1} parent=1 // pred_check
      _
    $region79: #{text_encoder_bigru_co.1} parent=1 // pred_check_branch
      %67 = sbr.rel (0) target = $region81
    $region80: #{text_encoder_bigru_co.1} parent=1 // pred_region
      _
    $region81: #{text_encoder_bigru_co.1} parent=1 // pred_fallthru
      _
    // Predicated region
    $region82: #{text_encoder_bigru_co.1} parent=1 // pred_check
      _
    $region83: #{text_encoder_bigru_co.1} parent=1 // pred_check_branch
      %69 = sbr.rel (0) target = $region85
    $region84: #{text_encoder_bigru_co.1} parent=1 // pred_region
      _
    $region85: #{text_encoder_bigru_co.1} parent=1 // pred_fallthru
      _
    // Predicated region
    $region86: #{text_encoder_bigru_co.1} parent=1 // pred_check
      _
    $region87: #{text_encoder_bigru_co.1} parent=1 // pred_check_branch
      %71 = sbr.rel (0) target = $region89
    $region88: #{text_encoder_bigru_co.1} parent=1 // pred_region
      _
    $region89: #{text_encoder_bigru_co.1} parent=1 // pred_fallthru
      _
    %v72 = vld [vmem:[%s0] sm:$0xff]
    %v73 = vld [vmem:[%s0 + $0x8] sm:$0xff]
    %v74 = vld [vmem:[%s0 + $0x10] sm:$0xff]
    %v75 = vld [vmem:[%s0 + $0x18] sm:$0xff]
    %v76 = vld [vmem:[%s0 + $0x20] sm:$0xff]
    %v77 = vld [vmem:[%s0 + $0x28] sm:$0xff]
    %v78 = vld [vmem:[%s0 + $0x30] sm:$0xff]
    %v79 = vld [vmem:[%s0 + $0x38] sm:$0xff]
    %v80 = vld [vmem:[%s1] sm:$0xff]
    %v81 = vld [vmem:[%s1 + $0x8] sm:$0xff]
    %v82 = vld [vmem:[%s1 + $0x10] sm:$0xff]
    %v83 = vld [vmem:[%s1 + $0x18] sm:$0xff]
    %v84 = vld [vmem:[%s1 + $0x20] sm:$0xff]
    %v85 = vld [vmem:[%s1 + $0x28] sm:$0xff]
    %v86 = vld [vmem:[%s1 + $0x30] sm:$0xff]
    %v87 = vld [vmem:[%s1 + $0x38] sm:$0xff]
    %v88 = vld [vmem:[%s3] sm:$0xff]
    %v89 = vld [vmem:[%s3 + $0x8] sm:$0xff]
    %v90 = vld [vmem:[%s4] sm:$0x1]
    %v92 = vperm.slane %v90, 0
    %vm94 = vcmask 130048
    %v96 = vsel %vm94, %v80, 0
    %v99 = vsel %vm94, %v81, 0
    %v102 = vsel %vm94, %v82, 0
    %v105 = vsel %vm94, %v83, 0
    %v108 = vsel %vm94, %v84, 0
    %v111 = vsel %vm94, %v85, 0
    %v114 = vsel %vm94, %v86, 0
    %v117 = vsel %vm94, %v87, 0
    %119 = vmatpush.msra.mxu0 0.0
    %120 = vmatpush.msra.mxu0 0.0
    %121 = vmatpush.msra.mxu0 0.0
    %122 = vmatpush.msra.mxu0 0.0
    %123 = vmatpush.msra.mxu0 0.0
    %124 = vmatpush.msra.mxu0 0.0
    %125 = vmatpush.msra.mxu0 0.0
    %126 = vmatpush.msra.mxu0 0.0
    %127 = vmatpush.msra.mxu0 0.0
    %128 = vmatpush.msra.mxu0 0.0
    %129 = vmatpush.msra.mxu0 0.0
    %130 = vmatpush.msra.mxu0 0.0
    %131 = vmatpush.msra.mxu0 0.0
    %132 = vmatpush.msra.mxu0 0.0
    %133 = vmatpush.msra.mxu0 %v89
    %134 = vmatpush.msra.mxu0 %v88
    %135 = vmatmul.f32.gmra.mxu0 %v96
    %v136 = vpop.f32.mrf.mxu0
    %v137 = vadd.f32 %v92, %v136
    %138 = vmatmul.f32.gmra.mxu0 %v99
    %v139 = vpop.f32.mrf.mxu0
    %v140 = vadd.f32 %v92, %v139
    %141 = vmatmul.f32.gmra.mxu0 %v102
    %v142 = vpop.f32.mrf.mxu0
    %v143 = vadd.f32 %v92, %v142
    %144 = vmatmul.f32.gmra.mxu0 %v105
    %v145 = vpop.f32.mrf.mxu0
    %v146 = vadd.f32 %v92, %v145
    %147 = vmatmul.f32.gmra.mxu0 %v108
    %v148 = vpop.f32.mrf.mxu0
    %v149 = vadd.f32 %v92, %v148
    %150 = vmatmul.f32.gmra.mxu0 %v111
    %v151 = vpop.f32.mrf.mxu0
    %v152 = vadd.f32 %v92, %v151
    %153 = vmatmul.f32.gmra.mxu0 %v114
    %v154 = vpop.f32.mrf.mxu0
    %v155 = vadd.f32 %v92, %v154
    %156 = vmatmul.f32.gmra.mxu0 %v117
    %v157 = vpop.f32.mrf.mxu0
    %v158 = vadd.f32 %v92, %v157
    %159 = vdwg.mxu0
    %v160 = vadd.f32 %v72, %v137
    %v161 = vadd.f32 %v73, %v140
    %v162 = vadd.f32 %v74, %v143
    %v163 = vadd.f32 %v75, %v146
    %v164 = vadd.f32 %v76, %v149
    %v165 = vadd.f32 %v77, %v152
    %v166 = vadd.f32 %v78, %v155
    %v167 = vadd.f32 %v79, %v158
    %v168 = vld [vmem:[%s5] sm:$0xff]
    %v169 = vld [vmem:[%s5 + $0x8] sm:$0xff]
    %v170 = vld [vmem:[%s5 + $0x10] sm:$0xff]
    %v171 = vld [vmem:[%s5 + $0x18] sm:$0xff]
    %v172 = vld [vmem:[%s5 + $0x20] sm:$0xff]
    %v173 = vld [vmem:[%s5 + $0x28] sm:$0xff]
    %v174 = vld [vmem:[%s5 + $0x30] sm:$0xff]
    %v175 = vld [vmem:[%s5 + $0x38] sm:$0xff]
    %v176 = vld [vmem:[%s5 + $0x40] sm:$0xff]
    %v177 = vld [vmem:[%s5 + $0x48] sm:$0xff]
    %v178 = vld [vmem:[%s5 + $0x50] sm:$0xff]
    %v179 = vld [vmem:[%s5 + $0x58] sm:$0xff]
    %v180 = vld [vmem:[%s5 + $0x60] sm:$0xff]
    %v181 = vld [vmem:[%s5 + $0x68] sm:$0xff]
    %v182 = vld [vmem:[%s5 + $0x70] sm:$0xff]
    %v183 = vld [vmem:[%s5 + $0x78] sm:$0xff]
    %v184 = vld [vmem:[%s6] sm:$0x1]
    %v186 = vperm.slane %v184, 0
    %188 = vmatpush.msra.mxu0 %v183
    %189 = vmatpush.msra.mxu0 %v182
    %190 = vmatpush.msra.mxu0 %v181
    %191 = vmatpush.msra.mxu0 %v180
    %192 = vmatpush.msra.mxu0 %v179
    %193 = vmatpush.msra.mxu0 %v178
    %194 = vmatpush.msra.mxu0 %v177
    %195 = vmatpush.msra.mxu0 %v176
    %196 = vmatpush.msra.mxu0 %v175
    %197 = vmatpush.msra.mxu0 %v174
    %198 = vmatpush.msra.mxu0 %v173
    %199 = vmatpush.msra.mxu0 %v172
    %200 = vmatpush.msra.mxu0 %v171
    %201 = vmatpush.msra.mxu0 %v170
    %202 = vmatpush.msra.mxu0 %v169
    %203 = vmatpush.msra.mxu0 %v168
    %204 = vmatmul.f32.gmra.mxu0 %v160
    %v205 = vpop.f32.mrf.mxu0
    %v206 = vadd.f32 %v186, %v205
    %207 = vmatmul.f32.gmra.mxu0 %v161
    %v208 = vpop.f32.mrf.mxu0
    %v209 = vadd.f32 %v186, %v208
    %210 = vmatmul.f32.gmra.mxu0 %v162
    %v211 = vpop.f32.mrf.mxu0
    %v212 = vadd.f32 %v186, %v211
    %213 = vmatmul.f32.gmra.mxu0 %v163
    %v214 = vpop.f32.mrf.mxu0
    %v215 = vadd.f32 %v186, %v214
    %216 = vmatmul.f32.gmra.mxu0 %v164
    %v217 = vpop.f32.mrf.mxu0
    %v218 = vadd.f32 %v186, %v217
    %219 = vmatmul.f32.gmra.mxu0 %v165
    %v220 = vpop.f32.mrf.mxu0
    %v221 = vadd.f32 %v186, %v220
    %222 = vmatmul.f32.gmra.mxu0 %v166
    %v223 = vpop.f32.mrf.mxu0
    %v224 = vadd.f32 %v186, %v223
    %225 = vmatmul.f32.gmra.mxu0 %v167
    %v226 = vpop.f32.mrf.mxu0
    %v227 = vadd.f32 %v186, %v226
    %228 = vdwg.mxu0
    %v229 = vld [vmem:[%s7] sm:$0xff]
    %v230 = vld [vmem:[%s7 + $0x8] sm:$0xff]
    %v231 = vld [vmem:[%s7 + $0x10] sm:$0xff]
    %v232 = vld [vmem:[%s7 + $0x18] sm:$0xff]
    %v233 = vld [vmem:[%s7 + $0x20] sm:$0xff]
    %v234 = vld [vmem:[%s7 + $0x28] sm:$0xff]
    %v235 = vld [vmem:[%s7 + $0x30] sm:$0xff]
    %v236 = vld [vmem:[%s7 + $0x38] sm:$0xff]
    %v237 = vld [vmem:[%s7 + $0x40] sm:$0xff]
    %v238 = vld [vmem:[%s7 + $0x48] sm:$0xff]
    %v239 = vld [vmem:[%s7 + $0x50] sm:$0xff]
    %v240 = vld [vmem:[%s7 + $0x58] sm:$0xff]
    %v241 = vld [vmem:[%s7 + $0x60] sm:$0xff]
    %v242 = vld [vmem:[%s7 + $0x68] sm:$0xff]
    %v243 = vld [vmem:[%s7 + $0x70] sm:$0xff]
    %v244 = vld [vmem:[%s7 + $0x78] sm:$0xff]
    %v245 = vld [vmem:[%s7 + $0x80] sm:$0xff]
    %v246 = vld [vmem:[%s7 + $0x88] sm:$0xff]
    %v247 = vld [vmem:[%s7 + $0x90] sm:$0xff]
    %v248 = vld [vmem:[%s7 + $0x98] sm:$0xff]
    %v249 = vld [vmem:[%s7 + $0xa0] sm:$0xff]
    %v250 = vld [vmem:[%s7 + $0xa8] sm:$0xff]
    %v251 = vld [vmem:[%s7 + $0xb0] sm:$0xff]
    %v252 = vld [vmem:[%s7 + $0xb8] sm:$0xff]
    %v253 = vld [vmem:[%s7 + $0xc0] sm:$0xff]
    %v254 = vld [vmem:[%s7 + $0xc8] sm:$0xff]
    %v255 = vld [vmem:[%s7 + $0xd0] sm:$0xff]
    %v256 = vld [vmem:[%s7 + $0xd8] sm:$0xff]
    %v257 = vld [vmem:[%s7 + $0xe0] sm:$0xff]
    %v258 = vld [vmem:[%s7 + $0xe8] sm:$0xff]
    %v259 = vld [vmem:[%s7 + $0xf0] sm:$0xff]
    %v260 = vld [vmem:[%s7 + $0xf8] sm:$0xff]
    %v261 = vld [vmem:[%s7 + $0x100] sm:$0xff]
    %v262 = vld [vmem:[%s7 + $0x108] sm:$0xff]
    %v263 = vld [vmem:[%s7 + $0x110] sm:$0xff]
    %v264 = vld [vmem:[%s7 + $0x118] sm:$0xff]
    %v265 = vld [vmem:[%s7 + $0x120] sm:$0xff]
    %v266 = vld [vmem:[%s7 + $0x128] sm:$0xff]
    %v267 = vld [vmem:[%s7 + $0x130] sm:$0xff]
    %v268 = vld [vmem:[%s7 + $0x138] sm:$0xff]
    %v269 = vld [vmem:[%s7 + $0x140] sm:$0xff]
    %v270 = vld [vmem:[%s7 + $0x148] sm:$0xff]
    %v271 = vld [vmem:[%s7 + $0x150] sm:$0xff]
    %v272 = vld [vmem:[%s7 + $0x158] sm:$0xff]
    %v273 = vld [vmem:[%s7 + $0x160] sm:$0xff]
    %v274 = vld [vmem:[%s7 + $0x168] sm:$0xff]
    %v275 = vld [vmem:[%s7 + $0x170] sm:$0xff]
    %v276 = vld [vmem:[%s7 + $0x178] sm:$0xff]
    %v277 = vld [vmem:[%s9] sm:$0x7]
    %v279 = vperm.slane %v277, 0
    %v280 = vperm.slane %v277, 1
    %v281 = vperm.slane %v277, 2
    %285 = vmatpush.msra.mxu0 %v274
    %286 = vmatpush.msra.mxu0 %v271
    %287 = vmatpush.msra.mxu0 %v268
    %288 = vmatpush.msra.mxu0 %v265
    %289 = vmatpush.msra.mxu0 %v262
    %290 = vmatpush.msra.mxu0 %v259
    %291 = vmatpush.msra.mxu0 %v256
    %292 = vmatpush.msra.mxu0 %v253
    %293 = vmatpush.msra.mxu0 %v250
    %294 = vmatpush.msra.mxu0 %v247
    %295 = vmatpush.msra.mxu0 %v244
    %296 = vmatpush.msra.mxu0 %v241
    %297 = vmatpush.msra.mxu0 %v238
    %298 = vmatpush.msra.mxu0 %v235
    %299 = vmatpush.msra.mxu0 %v232
    %300 = vmatpush.msra.mxu0 %v229
    %301 = vmatmul.f32.gmra.mxu0 %v206
    %v302 = vpop.f32.mrf.mxu0
    %v303 = vadd.f32 %v279, %v302
    %304 = vmatmul.f32.gmra.mxu0 %v209
    %v305 = vpop.f32.mrf.mxu0
    %v306 = vadd.f32 %v279, %v305
    %307 = vmatmul.f32.gmra.mxu0 %v212
    %v308 = vpop.f32.mrf.mxu0
    %v309 = vadd.f32 %v279, %v308
    %310 = vmatmul.f32.gmra.mxu0 %v215
    %v311 = vpop.f32.mrf.mxu0
    %v312 = vadd.f32 %v279, %v311
    %313 = vmatmul.f32.gmra.mxu0 %v218
    %v314 = vpop.f32.mrf.mxu0
    %v315 = vadd.f32 %v279, %v314
    %316 = vmatmul.f32.gmra.mxu0 %v221
    %v317 = vpop.f32.mrf.mxu0
    %v318 = vadd.f32 %v279, %v317
    %319 = vmatmul.f32.gmra.mxu0 %v224
    %v320 = vpop.f32.mrf.mxu0
    %v321 = vadd.f32 %v279, %v320
    %322 = vmatmul.f32.gmra.mxu0 %v227
    %v323 = vpop.f32.mrf.mxu0
    %v324 = vadd.f32 %v279, %v323
    %325 = vdwg.mxu0
    %326 = vmatpush.msra.mxu0 %v275
    %327 = vmatpush.msra.mxu0 %v272
    %328 = vmatpush.msra.mxu0 %v269
    %329 = vmatpush.msra.mxu0 %v266
    %330 = vmatpush.msra.mxu0 %v263
    %331 = vmatpush.msra.mxu0 %v260
    %332 = vmatpush.msra.mxu0 %v257
    %333 = vmatpush.msra.mxu0 %v254
    %334 = vmatpush.msra.mxu0 %v251
    %335 = vmatpush.msra.mxu0 %v248
    %336 = vmatpush.msra.mxu0 %v245
    %337 = vmatpush.msra.mxu0 %v242
    %338 = vmatpush.msra.mxu0 %v239
    %339 = vmatpush.msra.mxu0 %v236
    %340 = vmatpush.msra.mxu0 %v233
    %341 = vmatpush.msra.mxu0 %v230
    %342 = vmatmul.f32.gmra.mxu0 %v206
    %v343 = vpop.f32.mrf.mxu0
    %v344 = vadd.f32 %v280, %v343
    %345 = vmatmul.f32.gmra.mxu0 %v209
    %v346 = vpop.f32.mrf.mxu0
    %v347 = vadd.f32 %v280, %v346
    %348 = vmatmul.f32.gmra.mxu0 %v212
    %v349 = vpop.f32.mrf.mxu0
    %v350 = vadd.f32 %v280, %v349
    %351 = vmatmul.f32.gmra.mxu0 %v215
    %v352 = vpop.f32.mrf.mxu0
    %v353 = vadd.f32 %v280, %v352
    %354 = vmatmul.f32.gmra.mxu0 %v218
    %v355 = vpop.f32.mrf.mxu0
    %v356 = vadd.f32 %v280, %v355
    %357 = vmatmul.f32.gmra.mxu0 %v221
    %v358 = vpop.f32.mrf.mxu0
    %v359 = vadd.f32 %v280, %v358
    %360 = vmatmul.f32.gmra.mxu0 %v224
    %v361 = vpop.f32.mrf.mxu0
    %v362 = vadd.f32 %v280, %v361
    %363 = vmatmul.f32.gmra.mxu0 %v227
    %v364 = vpop.f32.mrf.mxu0
    %v365 = vadd.f32 %v280, %v364
    %366 = vdwg.mxu0
    %367 = vmatpush.msra.mxu0 %v276
    %368 = vmatpush.msra.mxu0 %v273
    %369 = vmatpush.msra.mxu0 %v270
    %370 = vmatpush.msra.mxu0 %v267
    %371 = vmatpush.msra.mxu0 %v264
    %372 = vmatpush.msra.mxu0 %v261
    %373 = vmatpush.msra.mxu0 %v258
    %374 = vmatpush.msra.mxu0 %v255
    %375 = vmatpush.msra.mxu0 %v252
    %376 = vmatpush.msra.mxu0 %v249
    %377 = vmatpush.msra.mxu0 %v246
    %378 = vmatpush.msra.mxu0 %v243
    %379 = vmatpush.msra.mxu0 %v240
    %380 = vmatpush.msra.mxu0 %v237
    %381 = vmatpush.msra.mxu0 %v234
    %382 = vmatpush.msra.mxu0 %v231
    %383 = vmatmul.f32.gmra.mxu0 %v206
    %v384 = vpop.f32.mrf.mxu0
    %v385 = vadd.f32 %v281, %v384
    %386 = vmatmul.f32.gmra.mxu0 %v209
    %v387 = vpop.f32.mrf.mxu0
    %v388 = vadd.f32 %v281, %v387
    %389 = vmatmul.f32.gmra.mxu0 %v212
    %v390 = vpop.f32.mrf.mxu0
    %v391 = vadd.f32 %v281, %v390
    %392 = vmatmul.f32.gmra.mxu0 %v215
    %v393 = vpop.f32.mrf.mxu0
    %v394 = vadd.f32 %v281, %v393
    %395 = vmatmul.f32.gmra.mxu0 %v218
    %v396 = vpop.f32.mrf.mxu0
    %v397 = vadd.f32 %v281, %v396
    %398 = vmatmul.f32.gmra.mxu0 %v221
    %v399 = vpop.f32.mrf.mxu0
    %v400 = vadd.f32 %v281, %v399
    %401 = vmatmul.f32.gmra.mxu0 %v224
    %v402 = vpop.f32.mrf.mxu0
    %v403 = vadd.f32 %v281, %v402
    %404 = vmatmul.f32.gmra.mxu0 %v227
    %v405 = vpop.f32.mrf.mxu0
    %v406 = vadd.f32 %v281, %v405
    %407 = vdwg.mxu0
    %408 = vst [vmem:[#allocation2] sm:$0xff] %v303
    %409 = vst [vmem:[#allocation2 + $0x8] sm:$0xff] %v344
    %410 = vst [vmem:[#allocation2 + $0x10] sm:$0xff] %v385
    %411 = vst [vmem:[#allocation2 + $0x18] sm:$0xff] %v306
    %412 = vst [vmem:[#allocation2 + $0x20] sm:$0xff] %v347
    %413 = vst [vmem:[#allocation2 + $0x28] sm:$0xff] %v388
    %414 = vst [vmem:[#allocation2 + $0x30] sm:$0xff] %v309
    %415 = vst [vmem:[#allocation2 + $0x38] sm:$0xff] %v350
    %416 = vst [vmem:[#allocation2 + $0x40] sm:$0xff] %v391
    %417 = vst [vmem:[#allocation2 + $0x48] sm:$0xff] %v312
    %418 = vst [vmem:[#allocation2 + $0x50] sm:$0xff] %v353
    %419 = vst [vmem:[#allocation2 + $0x58] sm:$0xff] %v394
    %420 = vst [vmem:[#allocation2 + $0x60] sm:$0xff] %v315
    %421 = vst [vmem:[#allocation2 + $0x68] sm:$0xff] %v356
    %422 = vst [vmem:[#allocation2 + $0x70] sm:$0xff] %v397
    %423 = vst [vmem:[#allocation2 + $0x78] sm:$0xff] %v318
    %424 = vst [vmem:[#allocation2 + $0x80] sm:$0xff] %v359
    %425 = vst [vmem:[#allocation2 + $0x88] sm:$0xff] %v400
    %426 = vst [vmem:[#allocation2 + $0x90] sm:$0xff] %v321
    %427 = vst [vmem:[#allocation2 + $0x98] sm:$0xff] %v362
    %428 = vst [vmem:[#allocation2 + $0xa0] sm:$0xff] %v403
    %429 = vst [vmem:[#allocation2 + $0xa8] sm:$0xff] %v324
    %430 = vst [vmem:[#allocation2 + $0xb0] sm:$0xff] %v365
    %431 = vst [vmem:[#allocation2 + $0xb8] sm:$0xff] %v406
    %v432 = vld [vmem:[%s11] sm:$0xff]
    %v433 = vld [vmem:[%s11 + $0x8] sm:$0xff]
    %v434 = vld [vmem:[%s11 + $0x10] sm:$0xff]
    %v435 = vld [vmem:[%s11 + $0x18] sm:$0xff]
    %v436 = vld [vmem:[%s11 + $0x20] sm:$0xff]
    %v437 = vld [vmem:[%s11 + $0x28] sm:$0xff]
    %v438 = vld [vmem:[%s11 + $0x30] sm:$0xff]
    %v439 = vld [vmem:[%s11 + $0x38] sm:$0xff]
    %v440 = vld [vmem:[%s11 + $0x40] sm:$0xff]
    %v441 = vld [vmem:[%s11 + $0x48] sm:$0xff]
    %v442 = vld [vmem:[%s11 + $0x50] sm:$0xff]
    %v443 = vld [vmem:[%s11 + $0x58] sm:$0xff]
    %v444 = vld [vmem:[%s11 + $0x60] sm:$0xff]
    %v445 = vld [vmem:[%s11 + $0x68] sm:$0xff]
    %v446 = vld [vmem:[%s11 + $0x70] sm:$0xff]
    %v447 = vld [vmem:[%s11 + $0x78] sm:$0xff]
    %v448 = vld [vmem:[%s11 + $0x80] sm:$0xff]
    %v449 = vld [vmem:[%s11 + $0x88] sm:$0xff]
    %v450 = vld [vmem:[%s11 + $0x90] sm:$0xff]
    %v451 = vld [vmem:[%s11 + $0x98] sm:$0xff]
    %v452 = vld [vmem:[%s11 + $0xa0] sm:$0xff]
    %v453 = vld [vmem:[%s11 + $0xa8] sm:$0xff]
    %v454 = vld [vmem:[%s11 + $0xb0] sm:$0xff]
    %v455 = vld [vmem:[%s11 + $0xb8] sm:$0xff]
    %v456 = vld [vmem:[%s11 + $0xc0] sm:$0xff]
    %v457 = vld [vmem:[%s11 + $0xc8] sm:$0xff]
    %v458 = vld [vmem:[%s11 + $0xd0] sm:$0xff]
    %v459 = vld [vmem:[%s11 + $0xd8] sm:$0xff]
    %v460 = vld [vmem:[%s11 + $0xe0] sm:$0xff]
    %v461 = vld [vmem:[%s11 + $0xe8] sm:$0xff]
    %v462 = vld [vmem:[%s11 + $0xf0] sm:$0xff]
    %v463 = vld [vmem:[%s11 + $0xf8] sm:$0xff]
    %v464 = vld [vmem:[%s11 + $0x100] sm:$0xff]
    %v465 = vld [vmem:[%s11 + $0x108] sm:$0xff]
    %v466 = vld [vmem:[%s11 + $0x110] sm:$0xff]
    %v467 = vld [vmem:[%s11 + $0x118] sm:$0xff]
    %v468 = vld [vmem:[%s11 + $0x120] sm:$0xff]
    %v469 = vld [vmem:[%s11 + $0x128] sm:$0xff]
    %v470 = vld [vmem:[%s11 + $0x130] sm:$0xff]
    %v471 = vld [vmem:[%s11 + $0x138] sm:$0xff]
    %v472 = vld [vmem:[%s11 + $0x140] sm:$0xff]
    %v473 = vld [vmem:[%s11 + $0x148] sm:$0xff]
    %v474 = vld [vmem:[%s11 + $0x150] sm:$0xff]
    %v475 = vld [vmem:[%s11 + $0x158] sm:$0xff]
    %v476 = vld [vmem:[%s11 + $0x160] sm:$0xff]
    %v477 = vld [vmem:[%s11 + $0x168] sm:$0xff]
    %v478 = vld [vmem:[%s11 + $0x170] sm:$0xff]
    %v479 = vld [vmem:[%s11 + $0x178] sm:$0xff]
    %v480 = vld [vmem:[%s13] sm:$0x7]
    %v482 = vperm.slane %v480, 0
    %v483 = vperm.slane %v480, 1
    %v484 = vperm.slane %v480, 2
    %488 = vmatpush.msra.mxu0 %v477
    %489 = vmatpush.msra.mxu0 %v474
    %490 = vmatpush.msra.mxu0 %v471
    %491 = vmatpush.msra.mxu0 %v468
    %492 = vmatpush.msra.mxu0 %v465
    %493 = vmatpush.msra.mxu0 %v462
    %494 = vmatpush.msra.mxu0 %v459
    %495 = vmatpush.msra.mxu0 %v456
    %496 = vmatpush.msra.mxu0 %v453
    %497 = vmatpush.msra.mxu0 %v450
    %498 = vmatpush.msra.mxu0 %v447
    %499 = vmatpush.msra.mxu0 %v444
    %500 = vmatpush.msra.mxu0 %v441
    %501 = vmatpush.msra.mxu0 %v438
    %502 = vmatpush.msra.mxu0 %v435
    %503 = vmatpush.msra.mxu0 %v432
    %504 = vmatmul.f32.gmra.mxu0 %v206
    %v505 = vpop.f32.mrf.mxu0
    %v506 = vadd.f32 %v482, %v505
    %507 = vmatmul.f32.gmra.mxu0 %v209
    %v508 = vpop.f32.mrf.mxu0
    %v509 = vadd.f32 %v482, %v508
    %510 = vmatmul.f32.gmra.mxu0 %v212
    %v511 = vpop.f32.mrf.mxu0
    %v512 = vadd.f32 %v482, %v511
    %513 = vmatmul.f32.gmra.mxu0 %v215
    %v514 = vpop.f32.mrf.mxu0
    %v515 = vadd.f32 %v482, %v514
    %516 = vmatmul.f32.gmra.mxu0 %v218
    %v517 = vpop.f32.mrf.mxu0
    %v518 = vadd.f32 %v482, %v517
    %519 = vmatmul.f32.gmra.mxu0 %v221
    %v520 = vpop.f32.mrf.mxu0
    %v521 = vadd.f32 %v482, %v520
    %522 = vmatmul.f32.gmra.mxu0 %v224
    %v523 = vpop.f32.mrf.mxu0
    %v524 = vadd.f32 %v482, %v523
    %525 = vmatmul.f32.gmra.mxu0 %v227
    %v526 = vpop.f32.mrf.mxu0
    %v527 = vadd.f32 %v482, %v526
    %528 = vdwg.mxu0
    %529 = vmatpush.msra.mxu0 %v478
    %530 = vmatpush.msra.mxu0 %v475
    %531 = vmatpush.msra.mxu0 %v472
    %532 = vmatpush.msra.mxu0 %v469
    %533 = vmatpush.msra.mxu0 %v466
    %534 = vmatpush.msra.mxu0 %v463
    %535 = vmatpush.msra.mxu0 %v460
    %536 = vmatpush.msra.mxu0 %v457
    %537 = vmatpush.msra.mxu0 %v454
    %538 = vmatpush.msra.mxu0 %v451
    %539 = vmatpush.msra.mxu0 %v448
    %540 = vmatpush.msra.mxu0 %v445
    %541 = vmatpush.msra.mxu0 %v442
    %542 = vmatpush.msra.mxu0 %v439
    %543 = vmatpush.msra.mxu0 %v436
    %544 = vmatpush.msra.mxu0 %v433
    %545 = vmatmul.f32.gmra.mxu0 %v206
    %v546 = vpop.f32.mrf.mxu0
    %v547 = vadd.f32 %v483, %v546
    %548 = vmatmul.f32.gmra.mxu0 %v209
    %v549 = vpop.f32.mrf.mxu0
    %v550 = vadd.f32 %v483, %v549
    %551 = vmatmul.f32.gmra.mxu0 %v212
    %v552 = vpop.f32.mrf.mxu0
    %v553 = vadd.f32 %v483, %v552
    %554 = vmatmul.f32.gmra.mxu0 %v215
    %v555 = vpop.f32.mrf.mxu0
    %v556 = vadd.f32 %v483, %v555
    %557 = vmatmul.f32.gmra.mxu0 %v218
    %v558 = vpop.f32.mrf.mxu0
    %v559 = vadd.f32 %v483, %v558
    %560 = vmatmul.f32.gmra.mxu0 %v221
    %v561 = vpop.f32.mrf.mxu0
    %v562 = vadd.f32 %v483, %v561
    %563 = vmatmul.f32.gmra.mxu0 %v224
    %v564 = vpop.f32.mrf.mxu0
    %v565 = vadd.f32 %v483, %v564
    %566 = vmatmul.f32.gmra.mxu0 %v227
    %v567 = vpop.f32.mrf.mxu0
    %v568 = vadd.f32 %v483, %v567
    %569 = vdwg.mxu0
    %570 = vmatpush.msra.mxu0 %v479
    %571 = vmatpush.msra.mxu0 %v476
    %572 = vmatpush.msra.mxu0 %v473
    %573 = vmatpush.msra.mxu0 %v470
    %574 = vmatpush.msra.mxu0 %v467
    %575 = vmatpush.msra.mxu0 %v464
    %576 = vmatpush.msra.mxu0 %v461
    %577 = vmatpush.msra.mxu0 %v458
    %578 = vmatpush.msra.mxu0 %v455
    %579 = vmatpush.msra.mxu0 %v452
    %580 = vmatpush.msra.mxu0 %v449
    %581 = vmatpush.msra.mxu0 %v446
    %582 = vmatpush.msra.mxu0 %v443
    %583 = vmatpush.msra.mxu0 %v440
    %584 = vmatpush.msra.mxu0 %v437
    %585 = vmatpush.msra.mxu0 %v434
    %586 = vmatmul.f32.gmra.mxu0 %v206
    %v587 = vpop.f32.mrf.mxu0
    %v588 = vadd.f32 %v484, %v587
    %589 = vmatmul.f32.gmra.mxu0 %v209
    %v590 = vpop.f32.mrf.mxu0
    %v591 = vadd.f32 %v484, %v590
    %592 = vmatmul.f32.gmra.mxu0 %v212
    %v593 = vpop.f32.mrf.mxu0
    %v594 = vadd.f32 %v484, %v593
    %595 = vmatmul.f32.gmra.mxu0 %v215
    %v596 = vpop.f32.mrf.mxu0
    %v597 = vadd.f32 %v484, %v596
    %598 = vmatmul.f32.gmra.mxu0 %v218
    %v599 = vpop.f32.mrf.mxu0
    %v600 = vadd.f32 %v484, %v599
    %601 = vmatmul.f32.gmra.mxu0 %v221
    %v602 = vpop.f32.mrf.mxu0
    %v603 = vadd.f32 %v484, %v602
    %604 = vmatmul.f32.gmra.mxu0 %v224
    %v605 = vpop.f32.mrf.mxu0
    %v606 = vadd.f32 %v484, %v605
    %607 = vmatmul.f32.gmra.mxu0 %v227
    %v608 = vpop.f32.mrf.mxu0
    %v609 = vadd.f32 %v484, %v608
    %610 = vdwg.mxu0
    %611 = vst [vmem:[#allocation3] sm:$0xff] %v506
    %612 = vst [vmem:[#allocation3 + $0x8] sm:$0xff] %v547
    %613 = vst [vmem:[#allocation3 + $0x10] sm:$0xff] %v588
    %614 = vst [vmem:[#allocation3 + $0x18] sm:$0xff] %v509
    %615 = vst [vmem:[#allocation3 + $0x20] sm:$0xff] %v550
    %616 = vst [vmem:[#allocation3 + $0x28] sm:$0xff] %v591
    %617 = vst [vmem:[#allocation3 + $0x30] sm:$0xff] %v512
    %618 = vst [vmem:[#allocation3 + $0x38] sm:$0xff] %v553
    %619 = vst [vmem:[#allocation3 + $0x40] sm:$0xff] %v594
    %620 = vst [vmem:[#allocation3 + $0x48] sm:$0xff] %v515
    %621 = vst [vmem:[#allocation3 + $0x50] sm:$0xff] %v556
    %622 = vst [vmem:[#allocation3 + $0x58] sm:$0xff] %v597
    %623 = vst [vmem:[#allocation3 + $0x60] sm:$0xff] %v518
    %624 = vst [vmem:[#allocation3 + $0x68] sm:$0xff] %v559
    %625 = vst [vmem:[#allocation3 + $0x70] sm:$0xff] %v600
    %626 = vst [vmem:[#allocation3 + $0x78] sm:$0xff] %v521
    %627 = vst [vmem:[#allocation3 + $0x80] sm:$0xff] %v562
    %628 = vst [vmem:[#allocation3 + $0x88] sm:$0xff] %v603
    %629 = vst [vmem:[#allocation3 + $0x90] sm:$0xff] %v524
    %630 = vst [vmem:[#allocation3 + $0x98] sm:$0xff] %v565
    %631 = vst [vmem:[#allocation3 + $0xa0] sm:$0xff] %v606
    %632 = vst [vmem:[#allocation3 + $0xa8] sm:$0xff] %v527
    %633 = vst [vmem:[#allocation3 + $0xb0] sm:$0xff] %v568
    %634 = vst [vmem:[#allocation3 + $0xb8] sm:$0xff] %v609
    %v635 = vld [vmem:[%s2] sm:$0xff]
    %v636 = vld [vmem:[%s15] sm:$0x1]
    %v637 = vperm.slane %v636, 0
    %v638 = vld [vmem:[%s15 + $0x1] sm:$0x1]
    %v639 = vperm.slane %v638, 0
    %v640 = vld [vmem:[%s8] sm:$0xff]
    %v641 = vld [vmem:[%s8 + $0x8] sm:$0xff]
    %v642 = vld [vmem:[%s8 + $0x10] sm:$0xff]
    %v643 = vld [vmem:[%s8 + $0x18] sm:$0xff]
    %v644 = vld [vmem:[%s8 + $0x20] sm:$0xff]
    %v645 = vld [vmem:[%s8 + $0x28] sm:$0xff]
    %v646 = vld [vmem:[%s8 + $0x30] sm:$0xff]
    %v647 = vld [vmem:[%s8 + $0x38] sm:$0xff]
    %v648 = vld [vmem:[%s8 + $0x40] sm:$0xff]
    %v649 = vld [vmem:[%s8 + $0x48] sm:$0xff]
    %v650 = vld [vmem:[%s8 + $0x50] sm:$0xff]
    %v651 = vld [vmem:[%s8 + $0x58] sm:$0xff]
    %v652 = vld [vmem:[%s8 + $0x60] sm:$0xff]
    %v653 = vld [vmem:[%s8 + $0x68] sm:$0xff]
    %v654 = vld [vmem:[%s8 + $0x70] sm:$0xff]
    %v655 = vld [vmem:[%s8 + $0x78] sm:$0xff]
    %v656 = vld [vmem:[%s8 + $0x80] sm:$0xff]
    %v657 = vld [vmem:[%s8 + $0x88] sm:$0xff]
    %v658 = vld [vmem:[%s8 + $0x90] sm:$0xff]
    %v659 = vld [vmem:[%s8 + $0x98] sm:$0xff]
    %v660 = vld [vmem:[%s8 + $0xa0] sm:$0xff]
    %v661 = vld [vmem:[%s8 + $0xa8] sm:$0xff]
    %v662 = vld [vmem:[%s8 + $0xb0] sm:$0xff]
    %v663 = vld [vmem:[%s8 + $0xb8] sm:$0xff]
    %v664 = vld [vmem:[%s8 + $0xc0] sm:$0xff]
    %v665 = vld [vmem:[%s8 + $0xc8] sm:$0xff]
    %v666 = vld [vmem:[%s8 + $0xd0] sm:$0xff]
    %v667 = vld [vmem:[%s8 + $0xd8] sm:$0xff]
    %v668 = vld [vmem:[%s8 + $0xe0] sm:$0xff]
    %v669 = vld [vmem:[%s8 + $0xe8] sm:$0xff]
    %v670 = vld [vmem:[%s8 + $0xf0] sm:$0xff]
    %v671 = vld [vmem:[%s8 + $0xf8] sm:$0xff]
    %v672 = vld [vmem:[%s8 + $0x100] sm:$0xff]
    %v673 = vld [vmem:[%s8 + $0x108] sm:$0xff]
    %v674 = vld [vmem:[%s8 + $0x110] sm:$0xff]
    %v675 = vld [vmem:[%s8 + $0x118] sm:$0xff]
    %v676 = vld [vmem:[%s8 + $0x120] sm:$0xff]
    %v677 = vld [vmem:[%s8 + $0x128] sm:$0xff]
    %v678 = vld [vmem:[%s8 + $0x130] sm:$0xff]
    %v679 = vld [vmem:[%s8 + $0x138] sm:$0xff]
    %v680 = vld [vmem:[%s8 + $0x140] sm:$0xff]
    %v681 = vld [vmem:[%s8 + $0x148] sm:$0xff]
    %v682 = vld [vmem:[%s8 + $0x150] sm:$0xff]
    %v683 = vld [vmem:[%s8 + $0x158] sm:$0xff]
    %v684 = vld [vmem:[%s8 + $0x160] sm:$0xff]
    %v685 = vld [vmem:[%s8 + $0x168] sm:$0xff]
    %v686 = vld [vmem:[%s8 + $0x170] sm:$0xff]
    %v687 = vld [vmem:[%s8 + $0x178] sm:$0xff]
    %v688 = vld [vmem:[%s10] sm:$0x7]
    %v689 = vld [vmem:[%s12] sm:$0xff]
    %v690 = vld [vmem:[%s12 + $0x8] sm:$0xff]
    %v691 = vld [vmem:[%s12 + $0x10] sm:$0xff]
    %v692 = vld [vmem:[%s12 + $0x18] sm:$0xff]
    %v693 = vld [vmem:[%s12 + $0x20] sm:$0xff]
    %v694 = vld [vmem:[%s12 + $0x28] sm:$0xff]
    %v695 = vld [vmem:[%s12 + $0x30] sm:$0xff]
    %v696 = vld [vmem:[%s12 + $0x38] sm:$0xff]
    %v697 = vld [vmem:[%s12 + $0x40] sm:$0xff]
    %v698 = vld [vmem:[%s12 + $0x48] sm:$0xff]
    %v699 = vld [vmem:[%s12 + $0x50] sm:$0xff]
    %v700 = vld [vmem:[%s12 + $0x58] sm:$0xff]
    %v701 = vld [vmem:[%s12 + $0x60] sm:$0xff]
    %v702 = vld [vmem:[%s12 + $0x68] sm:$0xff]
    %v703 = vld [vmem:[%s12 + $0x70] sm:$0xff]
    %v704 = vld [vmem:[%s12 + $0x78] sm:$0xff]
    %v705 = vld [vmem:[%s12 + $0x80] sm:$0xff]
    %v706 = vld [vmem:[%s12 + $0x88] sm:$0xff]
    %v707 = vld [vmem:[%s12 + $0x90] sm:$0xff]
    %v708 = vld [vmem:[%s12 + $0x98] sm:$0xff]
    %v709 = vld [vmem:[%s12 + $0xa0] sm:$0xff]
    %v710 = vld [vmem:[%s12 + $0xa8] sm:$0xff]
    %v711 = vld [vmem:[%s12 + $0xb0] sm:$0xff]
    %v712 = vld [vmem:[%s12 + $0xb8] sm:$0xff]
    %v713 = vld [vmem:[%s12 + $0xc0] sm:$0xff]
    %v714 = vld [vmem:[%s12 + $0xc8] sm:$0xff]
    %v715 = vld [vmem:[%s12 + $0xd0] sm:$0xff]
    %v716 = vld [vmem:[%s12 + $0xd8] sm:$0xff]
    %v717 = vld [vmem:[%s12 + $0xe0] sm:$0xff]
    %v718 = vld [vmem:[%s12 + $0xe8] sm:$0xff]
    %v719 = vld [vmem:[%s12 + $0xf0] sm:$0xff]
    %v720 = vld [vmem:[%s12 + $0xf8] sm:$0xff]
    %v721 = vld [vmem:[%s12 + $0x100] sm:$0xff]
    %v722 = vld [vmem:[%s12 + $0x108] sm:$0xff]
    %v723 = vld [vmem:[%s12 + $0x110] sm:$0xff]
    %v724 = vld [vmem:[%s12 + $0x118] sm:$0xff]
    %v725 = vld [vmem:[%s12 + $0x120] sm:$0xff]
    %v726 = vld [vmem:[%s12 + $0x128] sm:$0xff]
    %v727 = vld [vmem:[%s12 + $0x130] sm:$0xff]
    %v728 = vld [vmem:[%s12 + $0x138] sm:$0xff]
    %v729 = vld [vmem:[%s12 + $0x140] sm:$0xff]
    %v730 = vld [vmem:[%s12 + $0x148] sm:$0xff]
    %v731 = vld [vmem:[%s12 + $0x150] sm:$0xff]
    %v732 = vld [vmem:[%s12 + $0x158] sm:$0xff]
    %v733 = vld [vmem:[%s12 + $0x160] sm:$0xff]
    %v734 = vld [vmem:[%s12 + $0x168] sm:$0xff]
    %v735 = vld [vmem:[%s12 + $0x170] sm:$0xff]
    %v736 = vld [vmem:[%s12 + $0x178] sm:$0xff]
    %v737 = vld [vmem:[%s14] sm:$0x7]
    %s738 = smul.u32 0, 3
    %s739 = smul.addr %s738, 8
    %s740 = scalar_lea.vmem [#allocation2], %s739
    %v741 = vld [vmem:[%s740] sm:$0xff]
    %v742 = vld [vmem:[%s740 + $0x8] sm:$0xff]
    %v743 = vld [vmem:[%s740 + $0x10] sm:$0xff]
    %v745 = vperm.slane %v688, 0
    %v746 = vperm.slane %v688, 1
    %v747 = vperm.slane %v688, 2
    %751 = vmatpush.msra.mxu0 %v685
    %752 = vmatpush.msra.mxu0 %v682
    %753 = vmatpush.msra.mxu0 %v679
    %754 = vmatpush.msra.mxu0 %v676
    %755 = vmatpush.msra.mxu0 %v673
    %756 = vmatpush.msra.mxu0 %v670
    %757 = vmatpush.msra.mxu0 %v667
    %758 = vmatpush.msra.mxu0 %v664
    %759 = vmatpush.msra.mxu0 %v661
    %760 = vmatpush.msra.mxu0 %v658
    %761 = vmatpush.msra.mxu0 %v655
    %762 = vmatpush.msra.mxu0 %v652
    %763 = vmatpush.msra.mxu0 %v649
    %764 = vmatpush.msra.mxu0 %v646
    %765 = vmatpush.msra.mxu0 %v643
    %766 = vmatpush.msra.mxu0 %v640
    %767 = vmatmul.f32.gmra.mxu0 %v637
    %v768 = vpop.f32.mrf.mxu0
    %v769 = vadd.f32 %v745, %v768
    %770 = vdwg.mxu0
    %771 = vmatpush.msra.mxu0 %v686
    %772 = vmatpush.msra.mxu0 %v683
    %773 = vmatpush.msra.mxu0 %v680
    %774 = vmatpush.msra.mxu0 %v677
    %775 = vmatpush.msra.mxu0 %v674
    %776 = vmatpush.msra.mxu0 %v671
    %777 = vmatpush.msra.mxu0 %v668
    %778 = vmatpush.msra.mxu0 %v665
    %779 = vmatpush.msra.mxu0 %v662
    %780 = vmatpush.msra.mxu0 %v659
    %781 = vmatpush.msra.mxu0 %v656
    %782 = vmatpush.msra.mxu0 %v653
    %783 = vmatpush.msra.mxu0 %v650
    %784 = vmatpush.msra.mxu0 %v647
    %785 = vmatpush.msra.mxu0 %v644
    %786 = vmatpush.msra.mxu0 %v641
    %787 = vmatmul.f32.gmra.mxu0 %v637
    %v788 = vpop.f32.mrf.mxu0
    %v789 = vadd.f32 %v746, %v788
    %790 = vdwg.mxu0
    %791 = vmatpush.msra.mxu0 %v687
    %792 = vmatpush.msra.mxu0 %v684
    %793 = vmatpush.msra.mxu0 %v681
    %794 = vmatpush.msra.mxu0 %v678
    %795 = vmatpush.msra.mxu0 %v675
    %796 = vmatpush.msra.mxu0 %v672
    %797 = vmatpush.msra.mxu0 %v669
    %798 = vmatpush.msra.mxu0 %v666
    %799 = vmatpush.msra.mxu0 %v663
    %800 = vmatpush.msra.mxu0 %v660
    %801 = vmatpush.msra.mxu0 %v657
    %802 = vmatpush.msra.mxu0 %v654
    %803 = vmatpush.msra.mxu0 %v651
    %804 = vmatpush.msra.mxu0 %v648
    %805 = vmatpush.msra.mxu0 %v645
    %806 = vmatpush.msra.mxu0 %v642
    %807 = vmatmul.f32.gmra.mxu0 %v637
    %v808 = vpop.f32.mrf.mxu0
    %v809 = vadd.f32 %v747, %v808
    %810 = vdwg.mxu0
    %v811 = vadd.f32 %v741, %v769
    %v812 = vxor.u32 %v811, 2147483648
    %v813 = vmul.f32 %v812, 1.442695
    %v814 = vpow.pop %v813
    %v815 = vadd.f32 %v814, 1.0
    %v816 = vrcp.pop %v815
    %v817 = vmul.f32 %v815, %v816
    %v818 = vsub.f32 1.0, %v817
    %v819 = vmul.f32 %v816, %v818
    %v820 = vadd.f32 %v816, %v819
    %vm821 = vweird.f32 %v815
    %vm822 = vweird.f32 %v816
    %vm823 = vmor %vm821, %vm822
    %v824 = vsel %vm823, %v816, %v820
    %v825 = vand.u32 2147483647, %v815
    %vm826 = vcmp.eq.f32.partialorder %v825, 8.507059e+37
    %v827 = vand.u32 %v815, 2147483648
    %v828 = vor.u32 1.1754944e-38, %v827
    %v829 = vsel %vm826, %v828, %v824
    %v830 = vmul.f32 1.0, %v829
    %v831 = vadd.f32 %v742, %v789
    %v832 = vxor.u32 %v831, 2147483648
    %v833 = vmul.f32 %v832, 1.442695
    %v834 = vpow.pop %v833
    %v835 = vadd.f32 %v834, 1.0
    %v836 = vrcp.pop %v835
    %v837 = vmul.f32 %v835, %v836
    %v838 = vsub.f32 1.0, %v837
    %v839 = vmul.f32 %v836, %v838
    %v840 = vadd.f32 %v836, %v839
    %vm841 = vweird.f32 %v835
    %vm842 = vweird.f32 %v836
    %vm843 = vmor %vm841, %vm842
    %v844 = vsel %vm843, %v836, %v840
    %v845 = vand.u32 2147483647, %v835
    %vm846 = vcmp.eq.f32.partialorder %v845, 8.507059e+37
    %v847 = vand.u32 %v835, 2147483648
    %v848 = vor.u32 1.1754944e-38, %v847
    %v849 = vsel %vm846, %v848, %v844
    %v850 = vmul.f32 1.0, %v849
    %v851 = vmul.f32 %v830, %v809
    %v852 = vadd.f32 %v743, %v851
    %v853 = vtanh.pop %v852
    %v854 = vsub.f32 1.0, %v850
    %v855 = vmul.f32 %v854, %v853
    %v856 = vmul.f32 %v850, %v637
    %v857 = vadd.f32 %v855, %v856
    %vm858 = vcmp.gt.s32.totalorder %v635, 0
    %v859 = vsel %vm858, 1, 0
    %860 = vset.pattern.permute.xlu0 0
    %861 = vperm.xlu0 %860, %v859
    %v862 = vpop.permute.xlu0 %861
    %vm863 = vcmp.eq.s32.totalorder %v862, 1
    %v864 = vsel %vm863, %v857, %v637
    %s865 = smul.u32 7, 3
    %s866 = smul.addr %s865, 8
    %s867 = scalar_lea.vmem [#allocation3], %s866
    %v868 = vld [vmem:[%s867] sm:$0xff]
    %v869 = vld [vmem:[%s867 + $0x8] sm:$0xff]
    %v870 = vld [vmem:[%s867 + $0x10] sm:$0xff]
    %v872 = vperm.slane %v737, 0
    %v873 = vperm.slane %v737, 1
    %v874 = vperm.slane %v737, 2
    %878 = vmatpush.msra.mxu0 %v734
    %879 = vmatpush.msra.mxu0 %v731
    %880 = vmatpush.msra.mxu0 %v728
    %881 = vmatpush.msra.mxu0 %v725
    %882 = vmatpush.msra.mxu0 %v722
    %883 = vmatpush.msra.mxu0 %v719
    %884 = vmatpush.msra.mxu0 %v716
    %885 = vmatpush.msra.mxu0 %v713
    %886 = vmatpush.msra.mxu0 %v710
    %887 = vmatpush.msra.mxu0 %v707
    %888 = vmatpush.msra.mxu0 %v704
    %889 = vmatpush.msra.mxu0 %v701
    %890 = vmatpush.msra.mxu0 %v698
    %891 = vmatpush.msra.mxu0 %v695
    %892 = vmatpush.msra.mxu0 %v692
    %893 = vmatpush.msra.mxu0 %v689
    %894 = vmatmul.f32.gmra.mxu0 %v639
    %v895 = vpop.f32.mrf.mxu0
    %v896 = vadd.f32 %v872, %v895
    %897 = vdwg.mxu0
    %898 = vmatpush.msra.mxu0 %v735
    %899 = vmatpush.msra.mxu0 %v732
    %900 = vmatpush.msra.mxu0 %v729
    %901 = vmatpush.msra.mxu0 %v726
    %902 = vmatpush.msra.mxu0 %v723
    %903 = vmatpush.msra.mxu0 %v720
    %904 = vmatpush.msra.mxu0 %v717
    %905 = vmatpush.msra.mxu0 %v714
    %906 = vmatpush.msra.mxu0 %v711
    %907 = vmatpush.msra.mxu0 %v708
    %908 = vmatpush.msra.mxu0 %v705
    %909 = vmatpush.msra.mxu0 %v702
    %910 = vmatpush.msra.mxu0 %v699
    %911 = vmatpush.msra.mxu0 %v696
    %912 = vmatpush.msra.mxu0 %v693
    %913 = vmatpush.msra.mxu0 %v690
    %914 = vmatmul.f32.gmra.mxu0 %v639
    %v915 = vpop.f32.mrf.mxu0
    %v916 = vadd.f32 %v873, %v915
    %917 = vdwg.mxu0
    %918 = vmatpush.msra.mxu0 %v736
    %919 = vmatpush.msra.mxu0 %v733
    %920 = vmatpush.msra.mxu0 %v730
    %921 = vmatpush.msra.mxu0 %v727
    %922 = vmatpush.msra.mxu0 %v724
    %923 = vmatpush.msra.mxu0 %v721
    %924 = vmatpush.msra.mxu0 %v718
    %925 = vmatpush.msra.mxu0 %v715
    %926 = vmatpush.msra.mxu0 %v712
    %927 = vmatpush.msra.mxu0 %v709
    %928 = vmatpush.msra.mxu0 %v706
    %929 = vmatpush.msra.mxu0 %v703
    %930 = vmatpush.msra.mxu0 %v700
    %931 = vmatpush.msra.mxu0 %v697
    %932 = vmatpush.msra.mxu0 %v694
    %933 = vmatpush.msra.mxu0 %v691
    %934 = vmatmul.f32.gmra.mxu0 %v639
    %v935 = vpop.f32.mrf.mxu0
    %v936 = vadd.f32 %v874, %v935
    %937 = vdwg.mxu0
    %v938 = vadd.f32 %v868, %v896
    %v939 = vxor.u32 %v938, 2147483648
    %v940 = vmul.f32 %v939, 1.442695
    %v941 = vpow.pop %v940
    %v942 = vadd.f32 %v941, 1.0
    %v943 = vrcp.pop %v942
    %v944 = vmul.f32 %v942, %v943
    %v945 = vsub.f32 1.0, %v944
    %v946 = vmul.f32 %v943, %v945
    %v947 = vadd.f32 %v943, %v946
    %vm948 = vweird.f32 %v942
    %vm949 = vweird.f32 %v943
    %vm950 = vmor %vm948, %vm949
    %v951 = vsel %vm950, %v943, %v947
    %v952 = vand.u32 2147483647, %v942
    %vm953 = vcmp.eq.f32.partialorder %v952, 8.507059e+37
    %v954 = vand.u32 %v942, 2147483648
    %v955 = vor.u32 1.1754944e-38, %v954
    %v956 = vsel %vm953, %v955, %v951
    %v957 = vmul.f32 1.0, %v956
    %v958 = vadd.f32 %v869, %v916
    %v959 = vxor.u32 %v958, 2147483648
    %v960 = vmul.f32 %v959, 1.442695
    %v961 = vpow.pop %v960
    %v962 = vadd.f32 %v961, 1.0
    %v963 = vrcp.pop %v962
    %v964 = vmul.f32 %v962, %v963
    %v965 = vsub.f32 1.0, %v964
    %v966 = vmul.f32 %v963, %v965
    %v967 = vadd.f32 %v963, %v966
    %vm968 = vweird.f32 %v962
    %vm969 = vweird.f32 %v963
    %vm970 = vmor %vm968, %vm969
    %v971 = vsel %vm970, %v963, %v967
    %v972 = vand.u32 2147483647, %v962
    %vm973 = vcmp.eq.f32.partialorder %v972, 8.507059e+37
    %v974 = vand.u32 %v962, 2147483648
    %v975 = vor.u32 1.1754944e-38, %v974
    %v976 = vsel %vm973, %v975, %v971
    %v977 = vmul.f32 1.0, %v976
    %v978 = vmul.f32 %v957, %v936
    %v979 = vadd.f32 %v870, %v978
    %v980 = vtanh.pop %v979
    %v981 = vsub.f32 1.0, %v977
    %v982 = vmul.f32 %v981, %v980
    %v983 = vmul.f32 %v977, %v639
    %v984 = vadd.f32 %v982, %v983
    %vm985 = vcmp.gt.s32.totalorder %v635, 7
    %v986 = vsel %vm985, 1, 0
    %987 = vset.pattern.permute.xlu0 0
    %988 = vperm.xlu0 %987, %v986
    %v989 = vpop.permute.xlu0 %988
    %vm990 = vcmp.eq.s32.totalorder %v989, 1
    %v991 = vsel %vm990, %v984, %v639
    %s992 = smul.u32 1, 3
    %s993 = smul.addr %s992, 8
    %s994 = scalar_lea.vmem [#allocation2], %s993
    %v995 = vld [vmem:[%s994] sm:$0xff]
    %v996 = vld [vmem:[%s994 + $0x8] sm:$0xff]
    %v997 = vld [vmem:[%s994 + $0x10] sm:$0xff]
    %998 = vmatpush.msra.mxu0 %v685
    %999 = vmatpush.msra.mxu0 %v682
    %1000 = vmatpush.msra.mxu0 %v679
    %1001 = vmatpush.msra.mxu0 %v676
    %1002 = vmatpush.msra.mxu0 %v673
    %1003 = vmatpush.msra.mxu0 %v670
    %1004 = vmatpush.msra.mxu0 %v667
    %1005 = vmatpush.msra.mxu0 %v664
    %1006 = vmatpush.msra.mxu0 %v661
    %1007 = vmatpush.msra.mxu0 %v658
    %1008 = vmatpush.msra.mxu0 %v655
    %1009 = vmatpush.msra.mxu0 %v652
    %1010 = vmatpush.msra.mxu0 %v649
    %1011 = vmatpush.msra.mxu0 %v646
    %1012 = vmatpush.msra.mxu0 %v643
    %1013 = vmatpush.msra.mxu0 %v640
    %1014 = vmatmul.f32.gmra.mxu0 %v864
    %v1015 = vpop.f32.mrf.mxu0
    %v1016 = vadd.f32 %v745, %v1015
    %1017 = vdwg.mxu0
    %1018 = vmatpush.msra.mxu0 %v686
    %1019 = vmatpush.msra.mxu0 %v683
    %1020 = vmatpush.msra.mxu0 %v680
    %1021 = vmatpush.msra.mxu0 %v677
    %1022 = vmatpush.msra.mxu0 %v674
    %1023 = vmatpush.msra.mxu0 %v671
    %1024 = vmatpush.msra.mxu0 %v668
    %1025 = vmatpush.msra.mxu0 %v665
    %1026 = vmatpush.msra.mxu0 %v662
    %1027 = vmatpush.msra.mxu0 %v659
    %1028 = vmatpush.msra.mxu0 %v656
    %1029 = vmatpush.msra.mxu0 %v653
    %1030 = vmatpush.msra.mxu0 %v650
    %1031 = vmatpush.msra.mxu0 %v647
    %1032 = vmatpush.msra.mxu0 %v644
    %1033 = vmatpush.msra.mxu0 %v641
    %1034 = vmatmul.f32.gmra.mxu0 %v864
    %v1035 = vpop.f32.mrf.mxu0
    %v1036 = vadd.f32 %v746, %v1035
    %1037 = vdwg.mxu0
    %1038 = vmatpush.msra.mxu0 %v687
    %1039 = vmatpush.msra.mxu0 %v684
    %1040 = vmatpush.msra.mxu0 %v681
    %1041 = vmatpush.msra.mxu0 %v678
    %1042 = vmatpush.msra.mxu0 %v675
    %1043 = vmatpush.msra.mxu0 %v672
    %1044 = vmatpush.msra.mxu0 %v669
    %1045 = vmatpush.msra.mxu0 %v666
    %1046 = vmatpush.msra.mxu0 %v663
    %1047 = vmatpush.msra.mxu0 %v660
    %1048 = vmatpush.msra.mxu0 %v657
    %1049 = vmatpush.msra.mxu0 %v654
    %1050 = vmatpush.msra.mxu0 %v651
    %1051 = vmatpush.msra.mxu0 %v648
    %1052 = vmatpush.msra.mxu0 %v645
    %1053 = vmatpush.msra.mxu0 %v642
    %1054 = vmatmul.f32.gmra.mxu0 %v864
    %v1055 = vpop.f32.mrf.mxu0
    %v1056 = vadd.f32 %v747, %v1055
    %1057 = vdwg.mxu0
    %v1058 = vadd.f32 %v995, %v1016
    %v1059 = vxor.u32 %v1058, 2147483648
    %v1060 = vmul.f32 %v1059, 1.442695
    %v1061 = vpow.pop %v1060
    %v1062 = vadd.f32 %v1061, 1.0
    %v1063 = vrcp.pop %v1062
    %v1064 = vmul.f32 %v1062, %v1063
    %v1065 = vsub.f32 1.0, %v1064
    %v1066 = vmul.f32 %v1063, %v1065
    %v1067 = vadd.f32 %v1063, %v1066
    %vm1068 = vweird.f32 %v1062
    %vm1069 = vweird.f32 %v1063
    %vm1070 = vmor %vm1068, %vm1069
    %v1071 = vsel %vm1070, %v1063, %v1067
    %v1072 = vand.u32 2147483647, %v1062
    %vm1073 = vcmp.eq.f32.partialorder %v1072, 8.507059e+37
    %v1074 = vand.u32 %v1062, 2147483648
    %v1075 = vor.u32 1.1754944e-38, %v1074
    %v1076 = vsel %vm1073, %v1075, %v1071
    %v1077 = vmul.f32 1.0, %v1076
    %v1078 = vadd.f32 %v996, %v1036
    %v1079 = vxor.u32 %v1078, 2147483648
    %v1080 = vmul.f32 %v1079, 1.442695
    %v1081 = vpow.pop %v1080
    %v1082 = vadd.f32 %v1081, 1.0
    %v1083 = vrcp.pop %v1082
    %v1084 = vmul.f32 %v1082, %v1083
    %v1085 = vsub.f32 1.0, %v1084
    %v1086 = vmul.f32 %v1083, %v1085
    %v1087 = vadd.f32 %v1083, %v1086
    %vm1088 = vweird.f32 %v1082
    %vm1089 = vweird.f32 %v1083
    %vm1090 = vmor %vm1088, %vm1089
    %v1091 = vsel %vm1090, %v1083, %v1087
    %v1092 = vand.u32 2147483647, %v1082
    %vm1093 = vcmp.eq.f32.partialorder %v1092, 8.507059e+37
    %v1094 = vand.u32 %v1082, 2147483648
    %v1095 = vor.u32 1.1754944e-38, %v1094
    %v1096 = vsel %vm1093, %v1095, %v1091
    %v1097 = vmul.f32 1.0, %v1096
    %v1098 = vmul.f32 %v1077, %v1056
    %v1099 = vadd.f32 %v997, %v1098
    %v1100 = vtanh.pop %v1099
    %v1101 = vsub.f32 1.0, %v1097
    %v1102 = vmul.f32 %v1101, %v1100
    %v1103 = vmul.f32 %v1097, %v864
    %v1104 = vadd.f32 %v1102, %v1103
    %vm1105 = vcmp.gt.s32.totalorder %v635, 1
    %v1106 = vsel %vm1105, 1, 0
    %1107 = vset.pattern.permute.xlu0 0
    %1108 = vperm.xlu0 %1107, %v1106
    %v1109 = vpop.permute.xlu0 %1108
    %vm1110 = vcmp.eq.s32.totalorder %v1109, 1
    %v1111 = vsel %vm1110, %v1104, %v864
    %s1112 = smul.u32 6, 3
    %s1113 = smul.addr %s1112, 8
    %s1114 = scalar_lea.vmem [#allocation3], %s1113
    %v1115 = vld [vmem:[%s1114] sm:$0xff]
    %v1116 = vld [vmem:[%s1114 + $0x8] sm:$0xff]
    %v1117 = vld [vmem:[%s1114 + $0x10] sm:$0xff]
    %1118 = vmatpush.msra.mxu0 %v734
    %1119 = vmatpush.msra.mxu0 %v731
    %1120 = vmatpush.msra.mxu0 %v728
    %1121 = vmatpush.msra.mxu0 %v725
    %1122 = vmatpush.msra.mxu0 %v722
    %1123 = vmatpush.msra.mxu0 %v719
    %1124 = vmatpush.msra.mxu0 %v716
    %1125 = vmatpush.msra.mxu0 %v713
    %1126 = vmatpush.msra.mxu0 %v710
    %1127 = vmatpush.msra.mxu0 %v707
    %1128 = vmatpush.msra.mxu0 %v704
    %1129 = vmatpush.msra.mxu0 %v701
    %1130 = vmatpush.msra.mxu0 %v698
    %1131 = vmatpush.msra.mxu0 %v695
    %1132 = vmatpush.msra.mxu0 %v692
    %1133 = vmatpush.msra.mxu0 %v689
    %1134 = vmatmul.f32.gmra.mxu0 %v991
    %v1135 = vpop.f32.mrf.mxu0
    %v1136 = vadd.f32 %v872, %v1135
    %1137 = vdwg.mxu0
    %1138 = vmatpush.msra.mxu0 %v735
    %1139 = vmatpush.msra.mxu0 %v732
    %1140 = vmatpush.msra.mxu0 %v729
    %1141 = vmatpush.msra.mxu0 %v726
    %1142 = vmatpush.msra.mxu0 %v723
    %1143 = vmatpush.msra.mxu0 %v720
    %1144 = vmatpush.msra.mxu0 %v717
    %1145 = vmatpush.msra.mxu0 %v714
    %1146 = vmatpush.msra.mxu0 %v711
    %1147 = vmatpush.msra.mxu0 %v708
    %1148 = vmatpush.msra.mxu0 %v705
    %1149 = vmatpush.msra.mxu0 %v702
    %1150 = vmatpush.msra.mxu0 %v699
    %1151 = vmatpush.msra.mxu0 %v696
    %1152 = vmatpush.msra.mxu0 %v693
    %1153 = vmatpush.msra.mxu0 %v690
    %1154 = vmatmul.f32.gmra.mxu0 %v991
    %v1155 = vpop.f32.mrf.mxu0
    %v1156 = vadd.f32 %v873, %v1155
    %1157 = vdwg.mxu0
    %1158 = vmatpush.msra.mxu0 %v736
    %1159 = vmatpush.msra.mxu0 %v733
    %1160 = vmatpush.msra.mxu0 %v730
    %1161 = vmatpush.msra.mxu0 %v727
    %1162 = vmatpush.msra.mxu0 %v724
    %1163 = vmatpush.msra.mxu0 %v721
    %1164 = vmatpush.msra.mxu0 %v718
    %1165 = vmatpush.msra.mxu0 %v715
    %1166 = vmatpush.msra.mxu0 %v712
    %1167 = vmatpush.msra.mxu0 %v709
    %1168 = vmatpush.msra.mxu0 %v706
    %1169 = vmatpush.msra.mxu0 %v703
    %1170 = vmatpush.msra.mxu0 %v700
    %1171 = vmatpush.msra.mxu0 %v697
    %1172 = vmatpush.msra.mxu0 %v694
    %1173 = vmatpush.msra.mxu0 %v691
    %1174 = vmatmul.f32.gmra.mxu0 %v991
    %v1175 = vpop.f32.mrf.mxu0
    %v1176 = vadd.f32 %v874, %v1175
    %1177 = vdwg.mxu0
    %v1178 = vadd.f32 %v1115, %v1136
    %v1179 = vxor.u32 %v1178, 2147483648
    %v1180 = vmul.f32 %v1179, 1.442695
    %v1181 = vpow.pop %v1180
    %v1182 = vadd.f32 %v1181, 1.0
    %v1183 = vrcp.pop %v1182
    %v1184 = vmul.f32 %v1182, %v1183
    %v1185 = vsub.f32 1.0, %v1184
    %v1186 = vmul.f32 %v1183, %v1185
    %v1187 = vadd.f32 %v1183, %v1186
    %vm1188 = vweird.f32 %v1182
    %vm1189 = vweird.f32 %v1183
    %vm1190 = vmor %vm1188, %vm1189
    %v1191 = vsel %vm1190, %v1183, %v1187
    %v1192 = vand.u32 2147483647, %v1182
    %vm1193 = vcmp.eq.f32.partialorder %v1192, 8.507059e+37
    %v1194 = vand.u32 %v1182, 2147483648
    %v1195 = vor.u32 1.1754944e-38, %v1194
    %v1196 = vsel %vm1193, %v1195, %v1191
    %v1197 = vmul.f32 1.0, %v1196
    %v1198 = vadd.f32 %v1116, %v1156
    %v1199 = vxor.u32 %v1198, 2147483648
    %v1200 = vmul.f32 %v1199, 1.442695
    %v1201 = vpow.pop %v1200
    %v1202 = vadd.f32 %v1201, 1.0
    %v1203 = vrcp.pop %v1202
    %v1204 = vmul.f32 %v1202, %v1203
    %v1205 = vsub.f32 1.0, %v1204
    %v1206 = vmul.f32 %v1203, %v1205
    %v1207 = vadd.f32 %v1203, %v1206
    %vm1208 = vweird.f32 %v1202
    %vm1209 = vweird.f32 %v1203
    %vm1210 = vmor %vm1208, %vm1209
    %v1211 = vsel %vm1210, %v1203, %v1207
    %v1212 = vand.u32 2147483647, %v1202
    %vm1213 = vcmp.eq.f32.partialorder %v1212, 8.507059e+37
    %v1214 = vand.u32 %v1202, 2147483648
    %v1215 = vor.u32 1.1754944e-38, %v1214
    %v1216 = vsel %vm1213, %v1215, %v1211
    %v1217 = vmul.f32 1.0, %v1216
    %v1218 = vmul.f32 %v1197, %v1176
    %v1219 = vadd.f32 %v1117, %v1218
    %v1220 = vtanh.pop %v1219
    %v1221 = vsub.f32 1.0, %v1217
    %v1222 = vmul.f32 %v1221, %v1220
    %v1223 = vmul.f32 %v1217, %v991
    %v1224 = vadd.f32 %v1222, %v1223
    %vm1225 = vcmp.gt.s32.totalorder %v635, 6
    %v1226 = vsel %vm1225, 1, 0
    %1227 = vset.pattern.permute.xlu0 0
    %1228 = vperm.xlu0 %1227, %v1226
    %v1229 = vpop.permute.xlu0 %1228
    %vm1230 = vcmp.eq.s32.totalorder %v1229, 1
    %v1231 = vsel %vm1230, %v1224, %v991
    %s1232 = smul.u32 2, 3
    %s1233 = smul.addr %s1232, 8
    %s1234 = scalar_lea.vmem [#allocation2], %s1233
    %v1235 = vld [vmem:[%s1234] sm:$0xff]
    %v1236 = vld [vmem:[%s1234 + $0x8] sm:$0xff]
    %v1237 = vld [vmem:[%s1234 + $0x10] sm:$0xff]
    %1238 = vmatpush.msra.mxu0 %v685
    %1239 = vmatpush.msra.mxu0 %v682
    %1240 = vmatpush.msra.mxu0 %v679
    %1241 = vmatpush.msra.mxu0 %v676
    %1242 = vmatpush.msra.mxu0 %v673
    %1243 = vmatpush.msra.mxu0 %v670
    %1244 = vmatpush.msra.mxu0 %v667
    %1245 = vmatpush.msra.mxu0 %v664
    %1246 = vmatpush.msra.mxu0 %v661
    %1247 = vmatpush.msra.mxu0 %v658
    %1248 = vmatpush.msra.mxu0 %v655
    %1249 = vmatpush.msra.mxu0 %v652
    %1250 = vmatpush.msra.mxu0 %v649
    %1251 = vmatpush.msra.mxu0 %v646
    %1252 = vmatpush.msra.mxu0 %v643
    %1253 = vmatpush.msra.mxu0 %v640
    %1254 = vmatmul.f32.gmra.mxu0 %v1111
    %v1255 = vpop.f32.mrf.mxu0
    %v1256 = vadd.f32 %v745, %v1255
    %1257 = vdwg.mxu0
    %1258 = vmatpush.msra.mxu0 %v686
    %1259 = vmatpush.msra.mxu0 %v683
    %1260 = vmatpush.msra.mxu0 %v680
    %1261 = vmatpush.msra.mxu0 %v677
    %1262 = vmatpush.msra.mxu0 %v674
    %1263 = vmatpush.msra.mxu0 %v671
    %1264 = vmatpush.msra.mxu0 %v668
    %1265 = vmatpush.msra.mxu0 %v665
    %1266 = vmatpush.msra.mxu0 %v662
    %1267 = vmatpush.msra.mxu0 %v659
    %1268 = vmatpush.msra.mxu0 %v656
    %1269 = vmatpush.msra.mxu0 %v653
    %1270 = vmatpush.msra.mxu0 %v650
    %1271 = vmatpush.msra.mxu0 %v647
    %1272 = vmatpush.msra.mxu0 %v644
    %1273 = vmatpush.msra.mxu0 %v641
    %1274 = vmatmul.f32.gmra.mxu0 %v1111
    %v1275 = vpop.f32.mrf.mxu0
    %v1276 = vadd.f32 %v746, %v1275
    %1277 = vdwg.mxu0
    %1278 = vmatpush.msra.mxu0 %v687
    %1279 = vmatpush.msra.mxu0 %v684
    %1280 = vmatpush.msra.mxu0 %v681
    %1281 = vmatpush.msra.mxu0 %v678
    %1282 = vmatpush.msra.mxu0 %v675
    %1283 = vmatpush.msra.mxu0 %v672
    %1284 = vmatpush.msra.mxu0 %v669
    %1285 = vmatpush.msra.mxu0 %v666
    %1286 = vmatpush.msra.mxu0 %v663
    %1287 = vmatpush.msra.mxu0 %v660
    %1288 = vmatpush.msra.mxu0 %v657
    %1289 = vmatpush.msra.mxu0 %v654
    %1290 = vmatpush.msra.mxu0 %v651
    %1291 = vmatpush.msra.mxu0 %v648
    %1292 = vmatpush.msra.mxu0 %v645
    %1293 = vmatpush.msra.mxu0 %v642
    %1294 = vmatmul.f32.gmra.mxu0 %v1111
    %v1295 = vpop.f32.mrf.mxu0
    %v1296 = vadd.f32 %v747, %v1295
    %1297 = vdwg.mxu0
    %v1298 = vadd.f32 %v1235, %v1256
    %v1299 = vxor.u32 %v1298, 2147483648
    %v1300 = vmul.f32 %v1299, 1.442695
    %v1301 = vpow.pop %v1300
    %v1302 = vadd.f32 %v1301, 1.0
    %v1303 = vrcp.pop %v1302
    %v1304 = vmul.f32 %v1302, %v1303
    %v1305 = vsub.f32 1.0, %v1304
    %v1306 = vmul.f32 %v1303, %v1305
    %v1307 = vadd.f32 %v1303, %v1306
    %vm1308 = vweird.f32 %v1302
    %vm1309 = vweird.f32 %v1303
    %vm1310 = vmor %vm1308, %vm1309
    %v1311 = vsel %vm1310, %v1303, %v1307
    %v1312 = vand.u32 2147483647, %v1302
    %vm1313 = vcmp.eq.f32.partialorder %v1312, 8.507059e+37
    %v1314 = vand.u32 %v1302, 2147483648
    %v1315 = vor.u32 1.1754944e-38, %v1314
    %v1316 = vsel %vm1313, %v1315, %v1311
    %v1317 = vmul.f32 1.0, %v1316
    %v1318 = vadd.f32 %v1236, %v1276
    %v1319 = vxor.u32 %v1318, 2147483648
    %v1320 = vmul.f32 %v1319, 1.442695
    %v1321 = vpow.pop %v1320
    %v1322 = vadd.f32 %v1321, 1.0
    %v1323 = vrcp.pop %v1322
    %v1324 = vmul.f32 %v1322, %v1323
    %v1325 = vsub.f32 1.0, %v1324
    %v1326 = vmul.f32 %v1323, %v1325
    %v1327 = vadd.f32 %v1323, %v1326
    %vm1328 = vweird.f32 %v1322
    %vm1329 = vweird.f32 %v1323
    %vm1330 = vmor %vm1328, %vm1329
    %v1331 = vsel %vm1330, %v1323, %v1327
    %v1332 = vand.u32 2147483647, %v1322
    %vm1333 = vcmp.eq.f32.partialorder %v1332, 8.507059e+37
    %v1334 = vand.u32 %v1322, 2147483648
    %v1335 = vor.u32 1.1754944e-38, %v1334
    %v1336 = vsel %vm1333, %v1335, %v1331
    %v1337 = vmul.f32 1.0, %v1336
    %v1338 = vmul.f32 %v1317, %v1296
    %v1339 = vadd.f32 %v1237, %v1338
    %v1340 = vtanh.pop %v1339
    %v1341 = vsub.f32 1.0, %v1337
    %v1342 = vmul.f32 %v1341, %v1340
    %v1343 = vmul.f32 %v1337, %v1111
    %v1344 = vadd.f32 %v1342, %v1343
    %vm1345 = vcmp.gt.s32.totalorder %v635, 2
    %v1346 = vsel %vm1345, 1, 0
    %1347 = vset.pattern.permute.xlu0 0
    %1348 = vperm.xlu0 %1347, %v1346
    %v1349 = vpop.permute.xlu0 %1348
    %vm1350 = vcmp.eq.s32.totalorder %v1349, 1
    %v1351 = vsel %vm1350, %v1344, %v1111
    %s1352 = smul.u32 5, 3
    %s1353 = smul.addr %s1352, 8
    %s1354 = scalar_lea.vmem [#allocation3], %s1353
    %v1355 = vld [vmem:[%s1354] sm:$0xff]
    %v1356 = vld [vmem:[%s1354 + $0x8] sm:$0xff]
    %v1357 = vld [vmem:[%s1354 + $0x10] sm:$0xff]
    %1358 = vmatpush.msra.mxu0 %v734
    %1359 = vmatpush.msra.mxu0 %v731
    %1360 = vmatpush.msra.mxu0 %v728
    %1361 = vmatpush.msra.mxu0 %v725
    %1362 = vmatpush.msra.mxu0 %v722
    %1363 = vmatpush.msra.mxu0 %v719
    %1364 = vmatpush.msra.mxu0 %v716
    %1365 = vmatpush.msra.mxu0 %v713
    %1366 = vmatpush.msra.mxu0 %v710
    %1367 = vmatpush.msra.mxu0 %v707
    %1368 = vmatpush.msra.mxu0 %v704
    %1369 = vmatpush.msra.mxu0 %v701
    %1370 = vmatpush.msra.mxu0 %v698
    %1371 = vmatpush.msra.mxu0 %v695
    %1372 = vmatpush.msra.mxu0 %v692
    %1373 = vmatpush.msra.mxu0 %v689
    %1374 = vmatmul.f32.gmra.mxu0 %v1231
    %v1375 = vpop.f32.mrf.mxu0
    %v1376 = vadd.f32 %v872, %v1375
    %1377 = vdwg.mxu0
    %1378 = vmatpush.msra.mxu0 %v735
    %1379 = vmatpush.msra.mxu0 %v732
    %1380 = vmatpush.msra.mxu0 %v729
    %1381 = vmatpush.msra.mxu0 %v726
    %1382 = vmatpush.msra.mxu0 %v723
    %1383 = vmatpush.msra.mxu0 %v720
    %1384 = vmatpush.msra.mxu0 %v717
    %1385 = vmatpush.msra.mxu0 %v714
    %1386 = vmatpush.msra.mxu0 %v711
    %1387 = vmatpush.msra.mxu0 %v708
    %1388 = vmatpush.msra.mxu0 %v705
    %1389 = vmatpush.msra.mxu0 %v702
    %1390 = vmatpush.msra.mxu0 %v699
    %1391 = vmatpush.msra.mxu0 %v696
    %1392 = vmatpush.msra.mxu0 %v693
    %1393 = vmatpush.msra.mxu0 %v690
    %1394 = vmatmul.f32.gmra.mxu0 %v1231
    %v1395 = vpop.f32.mrf.mxu0
    %v1396 = vadd.f32 %v873, %v1395
    %1397 = vdwg.mxu0
    %1398 = vmatpush.msra.mxu0 %v736
    %1399 = vmatpush.msra.mxu0 %v733
    %1400 = vmatpush.msra.mxu0 %v730
    %1401 = vmatpush.msra.mxu0 %v727
    %1402 = vmatpush.msra.mxu0 %v724
    %1403 = vmatpush.msra.mxu0 %v721
    %1404 = vmatpush.msra.mxu0 %v718
    %1405 = vmatpush.msra.mxu0 %v715
    %1406 = vmatpush.msra.mxu0 %v712
    %1407 = vmatpush.msra.mxu0 %v709
    %1408 = vmatpush.msra.mxu0 %v706
    %1409 = vmatpush.msra.mxu0 %v703
    %1410 = vmatpush.msra.mxu0 %v700
    %1411 = vmatpush.msra.mxu0 %v697
    %1412 = vmatpush.msra.mxu0 %v694
    %1413 = vmatpush.msra.mxu0 %v691
    %1414 = vmatmul.f32.gmra.mxu0 %v1231
    %v1415 = vpop.f32.mrf.mxu0
    %v1416 = vadd.f32 %v874, %v1415
    %1417 = vdwg.mxu0
    %v1418 = vadd.f32 %v1355, %v1376
    %v1419 = vxor.u32 %v1418, 2147483648
    %v1420 = vmul.f32 %v1419, 1.442695
    %v1421 = vpow.pop %v1420
    %v1422 = vadd.f32 %v1421, 1.0
    %v1423 = vrcp.pop %v1422
    %v1424 = vmul.f32 %v1422, %v1423
    %v1425 = vsub.f32 1.0, %v1424
    %v1426 = vmul.f32 %v1423, %v1425
    %v1427 = vadd.f32 %v1423, %v1426
    %vm1428 = vweird.f32 %v1422
    %vm1429 = vweird.f32 %v1423
    %vm1430 = vmor %vm1428, %vm1429
    %v1431 = vsel %vm1430, %v1423, %v1427
    %v1432 = vand.u32 2147483647, %v1422
    %vm1433 = vcmp.eq.f32.partialorder %v1432, 8.507059e+37
    %v1434 = vand.u32 %v1422, 2147483648
    %v1435 = vor.u32 1.1754944e-38, %v1434
    %v1436 = vsel %vm1433, %v1435, %v1431
    %v1437 = vmul.f32 1.0, %v1436
    %v1438 = vadd.f32 %v1356, %v1396
    %v1439 = vxor.u32 %v1438, 2147483648
    %v1440 = vmul.f32 %v1439, 1.442695
    %v1441 = vpow.pop %v1440
    %v1442 = vadd.f32 %v1441, 1.0
    %v1443 = vrcp.pop %v1442
    %v1444 = vmul.f32 %v1442, %v1443
    %v1445 = vsub.f32 1.0, %v1444
    %v1446 = vmul.f32 %v1443, %v1445
    %v1447 = vadd.f32 %v1443, %v1446
    %vm1448 = vweird.f32 %v1442
    %vm1449 = vweird.f32 %v1443
    %vm1450 = vmor %vm1448, %vm1449
    %v1451 = vsel %vm1450, %v1443, %v1447
    %v1452 = vand.u32 2147483647, %v1442
    %vm1453 = vcmp.eq.f32.partialorder %v1452, 8.507059e+37
    %v1454 = vand.u32 %v1442, 2147483648
    %v1455 = vor.u32 1.1754944e-38, %v1454
    %v1456 = vsel %vm1453, %v1455, %v1451
    %v1457 = vmul.f32 1.0, %v1456
    %v1458 = vmul.f32 %v1437, %v1416
    %v1459 = vadd.f32 %v1357, %v1458
    %v1460 = vtanh.pop %v1459
    %v1461 = vsub.f32 1.0, %v1457
    %v1462 = vmul.f32 %v1461, %v1460
    %v1463 = vmul.f32 %v1457, %v1231
    %v1464 = vadd.f32 %v1462, %v1463
    %vm1465 = vcmp.gt.s32.totalorder %v635, 5
    %v1466 = vsel %vm1465, 1, 0
    %1467 = vset.pattern.permute.xlu0 0
    %1468 = vperm.xlu0 %1467, %v1466
    %v1469 = vpop.permute.xlu0 %1468
    %vm1470 = vcmp.eq.s32.totalorder %v1469, 1
    %v1471 = vsel %vm1470, %v1464, %v1231
    %s1472 = smul.u32 3, 3
    %s1473 = smul.addr %s1472, 8
    %s1474 = scalar_lea.vmem [#allocation2], %s1473
    %v1475 = vld [vmem:[%s1474] sm:$0xff]
    %v1476 = vld [vmem:[%s1474 + $0x8] sm:$0xff]
    %v1477 = vld [vmem:[%s1474 + $0x10] sm:$0xff]
    %1478 = vmatpush.msra.mxu0 %v685
    %1479 = vmatpush.msra.mxu0 %v682
    %1480 = vmatpush.msra.mxu0 %v679
    %1481 = vmatpush.msra.mxu0 %v676
    %1482 = vmatpush.msra.mxu0 %v673
    %1483 = vmatpush.msra.mxu0 %v670
    %1484 = vmatpush.msra.mxu0 %v667
    %1485 = vmatpush.msra.mxu0 %v664
    %1486 = vmatpush.msra.mxu0 %v661
    %1487 = vmatpush.msra.mxu0 %v658
    %1488 = vmatpush.msra.mxu0 %v655
    %1489 = vmatpush.msra.mxu0 %v652
    %1490 = vmatpush.msra.mxu0 %v649
    %1491 = vmatpush.msra.mxu0 %v646
    %1492 = vmatpush.msra.mxu0 %v643
    %1493 = vmatpush.msra.mxu0 %v640
    %1494 = vmatmul.f32.gmra.mxu0 %v1351
    %v1495 = vpop.f32.mrf.mxu0
    %v1496 = vadd.f32 %v745, %v1495
    %1497 = vdwg.mxu0
    %1498 = vmatpush.msra.mxu0 %v686
    %1499 = vmatpush.msra.mxu0 %v683
    %1500 = vmatpush.msra.mxu0 %v680
    %1501 = vmatpush.msra.mxu0 %v677
    %1502 = vmatpush.msra.mxu0 %v674
    %1503 = vmatpush.msra.mxu0 %v671
    %1504 = vmatpush.msra.mxu0 %v668
    %1505 = vmatpush.msra.mxu0 %v665
    %1506 = vmatpush.msra.mxu0 %v662
    %1507 = vmatpush.msra.mxu0 %v659
    %1508 = vmatpush.msra.mxu0 %v656
    %1509 = vmatpush.msra.mxu0 %v653
    %1510 = vmatpush.msra.mxu0 %v650
    %1511 = vmatpush.msra.mxu0 %v647
    %1512 = vmatpush.msra.mxu0 %v644
    %1513 = vmatpush.msra.mxu0 %v641
    %1514 = vmatmul.f32.gmra.mxu0 %v1351
    %v1515 = vpop.f32.mrf.mxu0
    %v1516 = vadd.f32 %v746, %v1515
    %1517 = vdwg.mxu0
    %1518 = vmatpush.msra.mxu0 %v687
    %1519 = vmatpush.msra.mxu0 %v684
    %1520 = vmatpush.msra.mxu0 %v681
    %1521 = vmatpush.msra.mxu0 %v678
    %1522 = vmatpush.msra.mxu0 %v675
    %1523 = vmatpush.msra.mxu0 %v672
    %1524 = vmatpush.msra.mxu0 %v669
    %1525 = vmatpush.msra.mxu0 %v666
    %1526 = vmatpush.msra.mxu0 %v663
    %1527 = vmatpush.msra.mxu0 %v660
    %1528 = vmatpush.msra.mxu0 %v657
    %1529 = vmatpush.msra.mxu0 %v654
    %1530 = vmatpush.msra.mxu0 %v651
    %1531 = vmatpush.msra.mxu0 %v648
    %1532 = vmatpush.msra.mxu0 %v645
    %1533 = vmatpush.msra.mxu0 %v642
    %1534 = vmatmul.f32.gmra.mxu0 %v1351
    %v1535 = vpop.f32.mrf.mxu0
    %v1536 = vadd.f32 %v747, %v1535
    %1537 = vdwg.mxu0
    %v1538 = vadd.f32 %v1475, %v1496
    %v1539 = vxor.u32 %v1538, 2147483648
    %v1540 = vmul.f32 %v1539, 1.442695
    %v1541 = vpow.pop %v1540
    %v1542 = vadd.f32 %v1541, 1.0
    %v1543 = vrcp.pop %v1542
    %v1544 = vmul.f32 %v1542, %v1543
    %v1545 = vsub.f32 1.0, %v1544
    %v1546 = vmul.f32 %v1543, %v1545
    %v1547 = vadd.f32 %v1543, %v1546
    %vm1548 = vweird.f32 %v1542
    %vm1549 = vweird.f32 %v1543
    %vm1550 = vmor %vm1548, %vm1549
    %v1551 = vsel %vm1550, %v1543, %v1547
    %v1552 = vand.u32 2147483647, %v1542
    %vm1553 = vcmp.eq.f32.partialorder %v1552, 8.507059e+37
    %v1554 = vand.u32 %v1542, 2147483648
    %v1555 = vor.u32 1.1754944e-38, %v1554
    %v1556 = vsel %vm1553, %v1555, %v1551
    %v1557 = vmul.f32 1.0, %v1556
    %v1558 = vadd.f32 %v1476, %v1516
    %v1559 = vxor.u32 %v1558, 2147483648
    %v1560 = vmul.f32 %v1559, 1.442695
    %v1561 = vpow.pop %v1560
    %v1562 = vadd.f32 %v1561, 1.0
    %v1563 = vrcp.pop %v1562
    %v1564 = vmul.f32 %v1562, %v1563
    %v1565 = vsub.f32 1.0, %v1564
    %v1566 = vmul.f32 %v1563, %v1565
    %v1567 = vadd.f32 %v1563, %v1566
    %vm1568 = vweird.f32 %v1562
    %vm1569 = vweird.f32 %v1563
    %vm1570 = vmor %vm1568, %vm1569
    %v1571 = vsel %vm1570, %v1563, %v1567
    %v1572 = vand.u32 2147483647, %v1562
    %vm1573 = vcmp.eq.f32.partialorder %v1572, 8.507059e+37
    %v1574 = vand.u32 %v1562, 2147483648
    %v1575 = vor.u32 1.1754944e-38, %v1574
    %v1576 = vsel %vm1573, %v1575, %v1571
    %v1577 = vmul.f32 1.0, %v1576
    %v1578 = vmul.f32 %v1557, %v1536
    %v1579 = vadd.f32 %v1477, %v1578
    %v1580 = vtanh.pop %v1579
    %v1581 = vsub.f32 1.0, %v1577
    %v1582 = vmul.f32 %v1581, %v1580
    %v1583 = vmul.f32 %v1577, %v1351
    %v1584 = vadd.f32 %v1582, %v1583
    %vm1585 = vcmp.gt.s32.totalorder %v635, 3
    %v1586 = vsel %vm1585, 1, 0
    %1587 = vset.pattern.permute.xlu0 0
    %1588 = vperm.xlu0 %1587, %v1586
    %v1589 = vpop.permute.xlu0 %1588
    %vm1590 = vcmp.eq.s32.totalorder %v1589, 1
    %v1591 = vsel %vm1590, %v1584, %v1351
    %s1592 = smul.u32 4, 3
    %s1593 = smul.addr %s1592, 8
    %s1594 = scalar_lea.vmem [#allocation3], %s1593
    %v1595 = vld [vmem:[%s1594] sm:$0xff]
    %v1596 = vld [vmem:[%s1594 + $0x8] sm:$0xff]
    %v1597 = vld [vmem:[%s1594 + $0x10] sm:$0xff]
    %1598 = vmatpush.msra.mxu0 %v734
    %1599 = vmatpush.msra.mxu0 %v731
    %1600 = vmatpush.msra.mxu0 %v728
    %1601 = vmatpush.msra.mxu0 %v725
    %1602 = vmatpush.msra.mxu0 %v722
    %1603 = vmatpush.msra.mxu0 %v719
    %1604 = vmatpush.msra.mxu0 %v716
    %1605 = vmatpush.msra.mxu0 %v713
    %1606 = vmatpush.msra.mxu0 %v710
    %1607 = vmatpush.msra.mxu0 %v707
    %1608 = vmatpush.msra.mxu0 %v704
    %1609 = vmatpush.msra.mxu0 %v701
    %1610 = vmatpush.msra.mxu0 %v698
    %1611 = vmatpush.msra.mxu0 %v695
    %1612 = vmatpush.msra.mxu0 %v692
    %1613 = vmatpush.msra.mxu0 %v689
    %1614 = vmatmul.f32.gmra.mxu0 %v1471
    %v1615 = vpop.f32.mrf.mxu0
    %v1616 = vadd.f32 %v872, %v1615
    %1617 = vdwg.mxu0
    %1618 = vmatpush.msra.mxu0 %v735
    %1619 = vmatpush.msra.mxu0 %v732
    %1620 = vmatpush.msra.mxu0 %v729
    %1621 = vmatpush.msra.mxu0 %v726
    %1622 = vmatpush.msra.mxu0 %v723
    %1623 = vmatpush.msra.mxu0 %v720
    %1624 = vmatpush.msra.mxu0 %v717
    %1625 = vmatpush.msra.mxu0 %v714
    %1626 = vmatpush.msra.mxu0 %v711
    %1627 = vmatpush.msra.mxu0 %v708
    %1628 = vmatpush.msra.mxu0 %v705
    %1629 = vmatpush.msra.mxu0 %v702
    %1630 = vmatpush.msra.mxu0 %v699
    %1631 = vmatpush.msra.mxu0 %v696
    %1632 = vmatpush.msra.mxu0 %v693
    %1633 = vmatpush.msra.mxu0 %v690
    %1634 = vmatmul.f32.gmra.mxu0 %v1471
    %v1635 = vpop.f32.mrf.mxu0
    %v1636 = vadd.f32 %v873, %v1635
    %1637 = vdwg.mxu0
    %1638 = vmatpush.msra.mxu0 %v736
    %1639 = vmatpush.msra.mxu0 %v733
    %1640 = vmatpush.msra.mxu0 %v730
    %1641 = vmatpush.msra.mxu0 %v727
    %1642 = vmatpush.msra.mxu0 %v724
    %1643 = vmatpush.msra.mxu0 %v721
    %1644 = vmatpush.msra.mxu0 %v718
    %1645 = vmatpush.msra.mxu0 %v715
    %1646 = vmatpush.msra.mxu0 %v712
    %1647 = vmatpush.msra.mxu0 %v709
    %1648 = vmatpush.msra.mxu0 %v706
    %1649 = vmatpush.msra.mxu0 %v703
    %1650 = vmatpush.msra.mxu0 %v700
    %1651 = vmatpush.msra.mxu0 %v697
    %1652 = vmatpush.msra.mxu0 %v694
    %1653 = vmatpush.msra.mxu0 %v691
    %1654 = vmatmul.f32.gmra.mxu0 %v1471
    %v1655 = vpop.f32.mrf.mxu0
    %v1656 = vadd.f32 %v874, %v1655
    %1657 = vdwg.mxu0
    %v1658 = vadd.f32 %v1595, %v1616
    %v1659 = vxor.u32 %v1658, 2147483648
    %v1660 = vmul.f32 %v1659, 1.442695
    %v1661 = vpow.pop %v1660
    %v1662 = vadd.f32 %v1661, 1.0
    %v1663 = vrcp.pop %v1662
    %v1664 = vmul.f32 %v1662, %v1663
    %v1665 = vsub.f32 1.0, %v1664
    %v1666 = vmul.f32 %v1663, %v1665
    %v1667 = vadd.f32 %v1663, %v1666
    %vm1668 = vweird.f32 %v1662
    %vm1669 = vweird.f32 %v1663
    %vm1670 = vmor %vm1668, %vm1669
    %v1671 = vsel %vm1670, %v1663, %v1667
    %v1672 = vand.u32 2147483647, %v1662
    %vm1673 = vcmp.eq.f32.partialorder %v1672, 8.507059e+37
    %v1674 = vand.u32 %v1662, 2147483648
    %v1675 = vor.u32 1.1754944e-38, %v1674
    %v1676 = vsel %vm1673, %v1675, %v1671
    %v1677 = vmul.f32 1.0, %v1676
    %v1678 = vadd.f32 %v1596, %v1636
    %v1679 = vxor.u32 %v1678, 2147483648
    %v1680 = vmul.f32 %v1679, 1.442695
    %v1681 = vpow.pop %v1680
    %v1682 = vadd.f32 %v1681, 1.0
    %v1683 = vrcp.pop %v1682
    %v1684 = vmul.f32 %v1682, %v1683
    %v1685 = vsub.f32 1.0, %v1684
    %v1686 = vmul.f32 %v1683, %v1685
    %v1687 = vadd.f32 %v1683, %v1686
    %vm1688 = vweird.f32 %v1682
    %vm1689 = vweird.f32 %v1683
    %vm1690 = vmor %vm1688, %vm1689
    %v1691 = vsel %vm1690, %v1683, %v1687
    %v1692 = vand.u32 2147483647, %v1682
    %vm1693 = vcmp.eq.f32.partialorder %v1692, 8.507059e+37
    %v1694 = vand.u32 %v1682, 2147483648
    %v1695 = vor.u32 1.1754944e-38, %v1694
    %v1696 = vsel %vm1693, %v1695, %v1691
    %v1697 = vmul.f32 1.0, %v1696
    %v1698 = vmul.f32 %v1677, %v1656
    %v1699 = vadd.f32 %v1597, %v1698
    %v1700 = vtanh.pop %v1699
    %v1701 = vsub.f32 1.0, %v1697
    %v1702 = vmul.f32 %v1701, %v1700
    %v1703 = vmul.f32 %v1697, %v1471
    %v1704 = vadd.f32 %v1702, %v1703
    %vm1705 = vcmp.gt.s32.totalorder %v635, 4
    %v1706 = vsel %vm1705, 1, 0
    %1707 = vset.pattern.permute.xlu0 0
    %1708 = vperm.xlu0 %1707, %v1706
    %v1709 = vpop.permute.xlu0 %1708
    %vm1710 = vcmp.eq.s32.totalorder %v1709, 1
    %v1711 = vsel %vm1710, %v1704, %v1471
    %s1712 = smul.addr %s1592, 8
    %s1713 = scalar_lea.vmem [#allocation2], %s1712
    %v1714 = vld [vmem:[%s1713] sm:$0xff]
    %v1715 = vld [vmem:[%s1713 + $0x8] sm:$0xff]
    %v1716 = vld [vmem:[%s1713 + $0x10] sm:$0xff]
    %1717 = vmatpush.msra.mxu0 %v685
    %1718 = vmatpush.msra.mxu0 %v682
    %1719 = vmatpush.msra.mxu0 %v679
    %1720 = vmatpush.msra.mxu0 %v676
    %1721 = vmatpush.msra.mxu0 %v673
    %1722 = vmatpush.msra.mxu0 %v670
    %1723 = vmatpush.msra.mxu0 %v667
    %1724 = vmatpush.msra.mxu0 %v664
    %1725 = vmatpush.msra.mxu0 %v661
    %1726 = vmatpush.msra.mxu0 %v658
    %1727 = vmatpush.msra.mxu0 %v655
    %1728 = vmatpush.msra.mxu0 %v652
    %1729 = vmatpush.msra.mxu0 %v649
    %1730 = vmatpush.msra.mxu0 %v646
    %1731 = vmatpush.msra.mxu0 %v643
    %1732 = vmatpush.msra.mxu0 %v640
    %1733 = vmatmul.f32.gmra.mxu0 %v1591
    %v1734 = vpop.f32.mrf.mxu0
    %v1735 = vadd.f32 %v745, %v1734
    %1736 = vdwg.mxu0
    %1737 = vmatpush.msra.mxu0 %v686
    %1738 = vmatpush.msra.mxu0 %v683
    %1739 = vmatpush.msra.mxu0 %v680
    %1740 = vmatpush.msra.mxu0 %v677
    %1741 = vmatpush.msra.mxu0 %v674
    %1742 = vmatpush.msra.mxu0 %v671
    %1743 = vmatpush.msra.mxu0 %v668
    %1744 = vmatpush.msra.mxu0 %v665
    %1745 = vmatpush.msra.mxu0 %v662
    %1746 = vmatpush.msra.mxu0 %v659
    %1747 = vmatpush.msra.mxu0 %v656
    %1748 = vmatpush.msra.mxu0 %v653
    %1749 = vmatpush.msra.mxu0 %v650
    %1750 = vmatpush.msra.mxu0 %v647
    %1751 = vmatpush.msra.mxu0 %v644
    %1752 = vmatpush.msra.mxu0 %v641
    %1753 = vmatmul.f32.gmra.mxu0 %v1591
    %v1754 = vpop.f32.mrf.mxu0
    %v1755 = vadd.f32 %v746, %v1754
    %1756 = vdwg.mxu0
    %1757 = vmatpush.msra.mxu0 %v687
    %1758 = vmatpush.msra.mxu0 %v684
    %1759 = vmatpush.msra.mxu0 %v681
    %1760 = vmatpush.msra.mxu0 %v678
    %1761 = vmatpush.msra.mxu0 %v675
    %1762 = vmatpush.msra.mxu0 %v672
    %1763 = vmatpush.msra.mxu0 %v669
    %1764 = vmatpush.msra.mxu0 %v666
    %1765 = vmatpush.msra.mxu0 %v663
    %1766 = vmatpush.msra.mxu0 %v660
    %1767 = vmatpush.msra.mxu0 %v657
    %1768 = vmatpush.msra.mxu0 %v654
    %1769 = vmatpush.msra.mxu0 %v651
    %1770 = vmatpush.msra.mxu0 %v648
    %1771 = vmatpush.msra.mxu0 %v645
    %1772 = vmatpush.msra.mxu0 %v642
    %1773 = vmatmul.f32.gmra.mxu0 %v1591
    %v1774 = vpop.f32.mrf.mxu0
    %v1775 = vadd.f32 %v747, %v1774
    %1776 = vdwg.mxu0
    %v1777 = vadd.f32 %v1714, %v1735
    %v1778 = vxor.u32 %v1777, 2147483648
    %v1779 = vmul.f32 %v1778, 1.442695
    %v1780 = vpow.pop %v1779
    %v1781 = vadd.f32 %v1780, 1.0
    %v1782 = vrcp.pop %v1781
    %v1783 = vmul.f32 %v1781, %v1782
    %v1784 = vsub.f32 1.0, %v1783
    %v1785 = vmul.f32 %v1782, %v1784
    %v1786 = vadd.f32 %v1782, %v1785
    %vm1787 = vweird.f32 %v1781
    %vm1788 = vweird.f32 %v1782
    %vm1789 = vmor %vm1787, %vm1788
    %v1790 = vsel %vm1789, %v1782, %v1786
    %v1791 = vand.u32 2147483647, %v1781
    %vm1792 = vcmp.eq.f32.partialorder %v1791, 8.507059e+37
    %v1793 = vand.u32 %v1781, 2147483648
    %v1794 = vor.u32 1.1754944e-38, %v1793
    %v1795 = vsel %vm1792, %v1794, %v1790
    %v1796 = vmul.f32 1.0, %v1795
    %v1797 = vadd.f32 %v1715, %v1755
    %v1798 = vxor.u32 %v1797, 2147483648
    %v1799 = vmul.f32 %v1798, 1.442695
    %v1800 = vpow.pop %v1799
    %v1801 = vadd.f32 %v1800, 1.0
    %v1802 = vrcp.pop %v1801
    %v1803 = vmul.f32 %v1801, %v1802
    %v1804 = vsub.f32 1.0, %v1803
    %v1805 = vmul.f32 %v1802, %v1804
    %v1806 = vadd.f32 %v1802, %v1805
    %vm1807 = vweird.f32 %v1801
    %vm1808 = vweird.f32 %v1802
    %vm1809 = vmor %vm1807, %vm1808
    %v1810 = vsel %vm1809, %v1802, %v1806
    %v1811 = vand.u32 2147483647, %v1801
    %vm1812 = vcmp.eq.f32.partialorder %v1811, 8.507059e+37
    %v1813 = vand.u32 %v1801, 2147483648
    %v1814 = vor.u32 1.1754944e-38, %v1813
    %v1815 = vsel %vm1812, %v1814, %v1810
    %v1816 = vmul.f32 1.0, %v1815
    %v1817 = vmul.f32 %v1796, %v1775
    %v1818 = vadd.f32 %v1716, %v1817
    %v1819 = vtanh.pop %v1818
    %v1820 = vsub.f32 1.0, %v1816
    %v1821 = vmul.f32 %v1820, %v1819
    %v1822 = vmul.f32 %v1816, %v1591
    %v1823 = vadd.f32 %v1821, %v1822
    %v1824 = vsel %vm1710, %v1823, %v1591
    %s1825 = smul.addr %s1472, 8
    %s1826 = scalar_lea.vmem [#allocation3], %s1825
    %v1827 = vld [vmem:[%s1826] sm:$0xff]
    %v1828 = vld [vmem:[%s1826 + $0x8] sm:$0xff]
    %v1829 = vld [vmem:[%s1826 + $0x10] sm:$0xff]
    %1830 = vmatpush.msra.mxu0 %v734
    %1831 = vmatpush.msra.mxu0 %v731
    %1832 = vmatpush.msra.mxu0 %v728
    %1833 = vmatpush.msra.mxu0 %v725
    %1834 = vmatpush.msra.mxu0 %v722
    %1835 = vmatpush.msra.mxu0 %v719
    %1836 = vmatpush.msra.mxu0 %v716
    %1837 = vmatpush.msra.mxu0 %v713
    %1838 = vmatpush.msra.mxu0 %v710
    %1839 = vmatpush.msra.mxu0 %v707
    %1840 = vmatpush.msra.mxu0 %v704
    %1841 = vmatpush.msra.mxu0 %v701
    %1842 = vmatpush.msra.mxu0 %v698
    %1843 = vmatpush.msra.mxu0 %v695
    %1844 = vmatpush.msra.mxu0 %v692
    %1845 = vmatpush.msra.mxu0 %v689
    %1846 = vmatmul.f32.gmra.mxu0 %v1711
    %v1847 = vpop.f32.mrf.mxu0
    %v1848 = vadd.f32 %v872, %v1847
    %1849 = vdwg.mxu0
    %1850 = vmatpush.msra.mxu0 %v735
    %1851 = vmatpush.msra.mxu0 %v732
    %1852 = vmatpush.msra.mxu0 %v729
    %1853 = vmatpush.msra.mxu0 %v726
    %1854 = vmatpush.msra.mxu0 %v723
    %1855 = vmatpush.msra.mxu0 %v720
    %1856 = vmatpush.msra.mxu0 %v717
    %1857 = vmatpush.msra.mxu0 %v714
    %1858 = vmatpush.msra.mxu0 %v711
    %1859 = vmatpush.msra.mxu0 %v708
    %1860 = vmatpush.msra.mxu0 %v705
    %1861 = vmatpush.msra.mxu0 %v702
    %1862 = vmatpush.msra.mxu0 %v699
    %1863 = vmatpush.msra.mxu0 %v696
    %1864 = vmatpush.msra.mxu0 %v693
    %1865 = vmatpush.msra.mxu0 %v690
    %1866 = vmatmul.f32.gmra.mxu0 %v1711
    %v1867 = vpop.f32.mrf.mxu0
    %v1868 = vadd.f32 %v873, %v1867
    %1869 = vdwg.mxu0
    %1870 = vmatpush.msra.mxu0 %v736
    %1871 = vmatpush.msra.mxu0 %v733
    %1872 = vmatpush.msra.mxu0 %v730
    %1873 = vmatpush.msra.mxu0 %v727
    %1874 = vmatpush.msra.mxu0 %v724
    %1875 = vmatpush.msra.mxu0 %v721
    %1876 = vmatpush.msra.mxu0 %v718
    %1877 = vmatpush.msra.mxu0 %v715
    %1878 = vmatpush.msra.mxu0 %v712
    %1879 = vmatpush.msra.mxu0 %v709
    %1880 = vmatpush.msra.mxu0 %v706
    %1881 = vmatpush.msra.mxu0 %v703
    %1882 = vmatpush.msra.mxu0 %v700
    %1883 = vmatpush.msra.mxu0 %v697
    %1884 = vmatpush.msra.mxu0 %v694
    %1885 = vmatpush.msra.mxu0 %v691
    %1886 = vmatmul.f32.gmra.mxu0 %v1711
    %v1887 = vpop.f32.mrf.mxu0
    %v1888 = vadd.f32 %v874, %v1887
    %1889 = vdwg.mxu0
    %v1890 = vadd.f32 %v1827, %v1848
    %v1891 = vxor.u32 %v1890, 2147483648
    %v1892 = vmul.f32 %v1891, 1.442695
    %v1893 = vpow.pop %v1892
    %v1894 = vadd.f32 %v1893, 1.0
    %v1895 = vrcp.pop %v1894
    %v1896 = vmul.f32 %v1894, %v1895
    %v1897 = vsub.f32 1.0, %v1896
    %v1898 = vmul.f32 %v1895, %v1897
    %v1899 = vadd.f32 %v1895, %v1898
    %vm1900 = vweird.f32 %v1894
    %vm1901 = vweird.f32 %v1895
    %vm1902 = vmor %vm1900, %vm1901
    %v1903 = vsel %vm1902, %v1895, %v1899
    %v1904 = vand.u32 2147483647, %v1894
    %vm1905 = vcmp.eq.f32.partialorder %v1904, 8.507059e+37
    %v1906 = vand.u32 %v1894, 2147483648
    %v1907 = vor.u32 1.1754944e-38, %v1906
    %v1908 = vsel %vm1905, %v1907, %v1903
    %v1909 = vmul.f32 1.0, %v1908
    %v1910 = vadd.f32 %v1828, %v1868
    %v1911 = vxor.u32 %v1910, 2147483648
    %v1912 = vmul.f32 %v1911, 1.442695
    %v1913 = vpow.pop %v1912
    %v1914 = vadd.f32 %v1913, 1.0
    %v1915 = vrcp.pop %v1914
    %v1916 = vmul.f32 %v1914, %v1915
    %v1917 = vsub.f32 1.0, %v1916
    %v1918 = vmul.f32 %v1915, %v1917
    %v1919 = vadd.f32 %v1915, %v1918
    %vm1920 = vweird.f32 %v1914
    %vm1921 = vweird.f32 %v1915
    %vm1922 = vmor %vm1920, %vm1921
    %v1923 = vsel %vm1922, %v1915, %v1919
    %v1924 = vand.u32 2147483647, %v1914
    %vm1925 = vcmp.eq.f32.partialorder %v1924, 8.507059e+37
    %v1926 = vand.u32 %v1914, 2147483648
    %v1927 = vor.u32 1.1754944e-38, %v1926
    %v1928 = vsel %vm1925, %v1927, %v1923
    %v1929 = vmul.f32 1.0, %v1928
    %v1930 = vmul.f32 %v1909, %v1888
    %v1931 = vadd.f32 %v1829, %v1930
    %v1932 = vtanh.pop %v1931
    %v1933 = vsub.f32 1.0, %v1929
    %v1934 = vmul.f32 %v1933, %v1932
    %v1935 = vmul.f32 %v1929, %v1711
    %v1936 = vadd.f32 %v1934, %v1935
    %v1937 = vsel %vm1590, %v1936, %v1711
    %s1938 = smul.addr %s1352, 8
    %s1939 = scalar_lea.vmem [#allocation2], %s1938
    %v1940 = vld [vmem:[%s1939] sm:$0xff]
    %v1941 = vld [vmem:[%s1939 + $0x8] sm:$0xff]
    %v1942 = vld [vmem:[%s1939 + $0x10] sm:$0xff]
    %1943 = vmatpush.msra.mxu0 %v685
    %1944 = vmatpush.msra.mxu0 %v682
    %1945 = vmatpush.msra.mxu0 %v679
    %1946 = vmatpush.msra.mxu0 %v676
    %1947 = vmatpush.msra.mxu0 %v673
    %1948 = vmatpush.msra.mxu0 %v670
    %1949 = vmatpush.msra.mxu0 %v667
    %1950 = vmatpush.msra.mxu0 %v664
    %1951 = vmatpush.msra.mxu0 %v661
    %1952 = vmatpush.msra.mxu0 %v658
    %1953 = vmatpush.msra.mxu0 %v655
    %1954 = vmatpush.msra.mxu0 %v652
    %1955 = vmatpush.msra.mxu0 %v649
    %1956 = vmatpush.msra.mxu0 %v646
    %1957 = vmatpush.msra.mxu0 %v643
    %1958 = vmatpush.msra.mxu0 %v640
    %1959 = vmatmul.f32.gmra.mxu0 %v1824
    %v1960 = vpop.f32.mrf.mxu0
    %v1961 = vadd.f32 %v745, %v1960
    %1962 = vdwg.mxu0
    %1963 = vmatpush.msra.mxu0 %v686
    %1964 = vmatpush.msra.mxu0 %v683
    %1965 = vmatpush.msra.mxu0 %v680
    %1966 = vmatpush.msra.mxu0 %v677
    %1967 = vmatpush.msra.mxu0 %v674
    %1968 = vmatpush.msra.mxu0 %v671
    %1969 = vmatpush.msra.mxu0 %v668
    %1970 = vmatpush.msra.mxu0 %v665
    %1971 = vmatpush.msra.mxu0 %v662
    %1972 = vmatpush.msra.mxu0 %v659
    %1973 = vmatpush.msra.mxu0 %v656
    %1974 = vmatpush.msra.mxu0 %v653
    %1975 = vmatpush.msra.mxu0 %v650
    %1976 = vmatpush.msra.mxu0 %v647
    %1977 = vmatpush.msra.mxu0 %v644
    %1978 = vmatpush.msra.mxu0 %v641
    %1979 = vmatmul.f32.gmra.mxu0 %v1824
    %v1980 = vpop.f32.mrf.mxu0
    %v1981 = vadd.f32 %v746, %v1980
    %1982 = vdwg.mxu0
    %1983 = vmatpush.msra.mxu0 %v687
    %1984 = vmatpush.msra.mxu0 %v684
    %1985 = vmatpush.msra.mxu0 %v681
    %1986 = vmatpush.msra.mxu0 %v678
    %1987 = vmatpush.msra.mxu0 %v675
    %1988 = vmatpush.msra.mxu0 %v672
    %1989 = vmatpush.msra.mxu0 %v669
    %1990 = vmatpush.msra.mxu0 %v666
    %1991 = vmatpush.msra.mxu0 %v663
    %1992 = vmatpush.msra.mxu0 %v660
    %1993 = vmatpush.msra.mxu0 %v657
    %1994 = vmatpush.msra.mxu0 %v654
    %1995 = vmatpush.msra.mxu0 %v651
    %1996 = vmatpush.msra.mxu0 %v648
    %1997 = vmatpush.msra.mxu0 %v645
    %1998 = vmatpush.msra.mxu0 %v642
    %1999 = vmatmul.f32.gmra.mxu0 %v1824
    %v2000 = vpop.f32.mrf.mxu0
    %v2001 = vadd.f32 %v747, %v2000
    %2002 = vdwg.mxu0
    %v2003 = vadd.f32 %v1940, %v1961
    %v2004 = vxor.u32 %v2003, 2147483648
    %v2005 = vmul.f32 %v2004, 1.442695
    %v2006 = vpow.pop %v2005
    %v2007 = vadd.f32 %v2006, 1.0
    %v2008 = vrcp.pop %v2007
    %v2009 = vmul.f32 %v2007, %v2008
    %v2010 = vsub.f32 1.0, %v2009
    %v2011 = vmul.f32 %v2008, %v2010
    %v2012 = vadd.f32 %v2008, %v2011
    %vm2013 = vweird.f32 %v2007
    %vm2014 = vweird.f32 %v2008
    %vm2015 = vmor %vm2013, %vm2014
    %v2016 = vsel %vm2015, %v2008, %v2012
    %v2017 = vand.u32 2147483647, %v2007
    %vm2018 = vcmp.eq.f32.partialorder %v2017, 8.507059e+37
    %v2019 = vand.u32 %v2007, 2147483648
    %v2020 = vor.u32 1.1754944e-38, %v2019
    %v2021 = vsel %vm2018, %v2020, %v2016
    %v2022 = vmul.f32 1.0, %v2021
    %v2023 = vadd.f32 %v1941, %v1981
    %v2024 = vxor.u32 %v2023, 2147483648
    %v2025 = vmul.f32 %v2024, 1.442695
    %v2026 = vpow.pop %v2025
    %v2027 = vadd.f32 %v2026, 1.0
    %v2028 = vrcp.pop %v2027
    %v2029 = vmul.f32 %v2027, %v2028
    %v2030 = vsub.f32 1.0, %v2029
    %v2031 = vmul.f32 %v2028, %v2030
    %v2032 = vadd.f32 %v2028, %v2031
    %vm2033 = vweird.f32 %v2027
    %vm2034 = vweird.f32 %v2028
    %vm2035 = vmor %vm2033, %vm2034
    %v2036 = vsel %vm2035, %v2028, %v2032
    %v2037 = vand.u32 2147483647, %v2027
    %vm2038 = vcmp.eq.f32.partialorder %v2037, 8.507059e+37
    %v2039 = vand.u32 %v2027, 2147483648
    %v2040 = vor.u32 1.1754944e-38, %v2039
    %v2041 = vsel %vm2038, %v2040, %v2036
    %v2042 = vmul.f32 1.0, %v2041
    %v2043 = vmul.f32 %v2022, %v2001
    %v2044 = vadd.f32 %v1942, %v2043
    %v2045 = vtanh.pop %v2044
    %v2046 = vsub.f32 1.0, %v2042
    %v2047 = vmul.f32 %v2046, %v2045
    %v2048 = vmul.f32 %v2042, %v1824
    %v2049 = vadd.f32 %v2047, %v2048
    %v2050 = vsel %vm1470, %v2049, %v1824
    %s2051 = smul.addr %s1232, 8
    %s2052 = scalar_lea.vmem [#allocation3], %s2051
    %v2053 = vld [vmem:[%s2052] sm:$0xff]
    %v2054 = vld [vmem:[%s2052 + $0x8] sm:$0xff]
    %v2055 = vld [vmem:[%s2052 + $0x10] sm:$0xff]
    %2056 = vmatpush.msra.mxu0 %v734
    %2057 = vmatpush.msra.mxu0 %v731
    %2058 = vmatpush.msra.mxu0 %v728
    %2059 = vmatpush.msra.mxu0 %v725
    %2060 = vmatpush.msra.mxu0 %v722
    %2061 = vmatpush.msra.mxu0 %v719
    %2062 = vmatpush.msra.mxu0 %v716
    %2063 = vmatpush.msra.mxu0 %v713
    %2064 = vmatpush.msra.mxu0 %v710
    %2065 = vmatpush.msra.mxu0 %v707
    %2066 = vmatpush.msra.mxu0 %v704
    %2067 = vmatpush.msra.mxu0 %v701
    %2068 = vmatpush.msra.mxu0 %v698
    %2069 = vmatpush.msra.mxu0 %v695
    %2070 = vmatpush.msra.mxu0 %v692
    %2071 = vmatpush.msra.mxu0 %v689
    %2072 = vmatmul.f32.gmra.mxu0 %v1937
    %v2073 = vpop.f32.mrf.mxu0
    %v2074 = vadd.f32 %v872, %v2073
    %2075 = vdwg.mxu0
    %2076 = vmatpush.msra.mxu0 %v735
    %2077 = vmatpush.msra.mxu0 %v732
    %2078 = vmatpush.msra.mxu0 %v729
    %2079 = vmatpush.msra.mxu0 %v726
    %2080 = vmatpush.msra.mxu0 %v723
    %2081 = vmatpush.msra.mxu0 %v720
    %2082 = vmatpush.msra.mxu0 %v717
    %2083 = vmatpush.msra.mxu0 %v714
    %2084 = vmatpush.msra.mxu0 %v711
    %2085 = vmatpush.msra.mxu0 %v708
    %2086 = vmatpush.msra.mxu0 %v705
    %2087 = vmatpush.msra.mxu0 %v702
    %2088 = vmatpush.msra.mxu0 %v699
    %2089 = vmatpush.msra.mxu0 %v696
    %2090 = vmatpush.msra.mxu0 %v693
    %2091 = vmatpush.msra.mxu0 %v690
    %2092 = vmatmul.f32.gmra.mxu0 %v1937
    %v2093 = vpop.f32.mrf.mxu0
    %v2094 = vadd.f32 %v873, %v2093
    %2095 = vdwg.mxu0
    %2096 = vmatpush.msra.mxu0 %v736
    %2097 = vmatpush.msra.mxu0 %v733
    %2098 = vmatpush.msra.mxu0 %v730
    %2099 = vmatpush.msra.mxu0 %v727
    %2100 = vmatpush.msra.mxu0 %v724
    %2101 = vmatpush.msra.mxu0 %v721
    %2102 = vmatpush.msra.mxu0 %v718
    %2103 = vmatpush.msra.mxu0 %v715
    %2104 = vmatpush.msra.mxu0 %v712
    %2105 = vmatpush.msra.mxu0 %v709
    %2106 = vmatpush.msra.mxu0 %v706
    %2107 = vmatpush.msra.mxu0 %v703
    %2108 = vmatpush.msra.mxu0 %v700
    %2109 = vmatpush.msra.mxu0 %v697
    %2110 = vmatpush.msra.mxu0 %v694
    %2111 = vmatpush.msra.mxu0 %v691
    %2112 = vmatmul.f32.gmra.mxu0 %v1937
    %v2113 = vpop.f32.mrf.mxu0
    %v2114 = vadd.f32 %v874, %v2113
    %2115 = vdwg.mxu0
    %v2116 = vadd.f32 %v2053, %v2074
    %v2117 = vxor.u32 %v2116, 2147483648
    %v2118 = vmul.f32 %v2117, 1.442695
    %v2119 = vpow.pop %v2118
    %v2120 = vadd.f32 %v2119, 1.0
    %v2121 = vrcp.pop %v2120
    %v2122 = vmul.f32 %v2120, %v2121
    %v2123 = vsub.f32 1.0, %v2122
    %v2124 = vmul.f32 %v2121, %v2123
    %v2125 = vadd.f32 %v2121, %v2124
    %vm2126 = vweird.f32 %v2120
    %vm2127 = vweird.f32 %v2121
    %vm2128 = vmor %vm2126, %vm2127
    %v2129 = vsel %vm2128, %v2121, %v2125
    %v2130 = vand.u32 2147483647, %v2120
    %vm2131 = vcmp.eq.f32.partialorder %v2130, 8.507059e+37
    %v2132 = vand.u32 %v2120, 2147483648
    %v2133 = vor.u32 1.1754944e-38, %v2132
    %v2134 = vsel %vm2131, %v2133, %v2129
    %v2135 = vmul.f32 1.0, %v2134
    %v2136 = vadd.f32 %v2054, %v2094
    %v2137 = vxor.u32 %v2136, 2147483648
    %v2138 = vmul.f32 %v2137, 1.442695
    %v2139 = vpow.pop %v2138
    %v2140 = vadd.f32 %v2139, 1.0
    %v2141 = vrcp.pop %v2140
    %v2142 = vmul.f32 %v2140, %v2141
    %v2143 = vsub.f32 1.0, %v2142
    %v2144 = vmul.f32 %v2141, %v2143
    %v2145 = vadd.f32 %v2141, %v2144
    %vm2146 = vweird.f32 %v2140
    %vm2147 = vweird.f32 %v2141
    %vm2148 = vmor %vm2146, %vm2147
    %v2149 = vsel %vm2148, %v2141, %v2145
    %v2150 = vand.u32 2147483647, %v2140
    %vm2151 = vcmp.eq.f32.partialorder %v2150, 8.507059e+37
    %v2152 = vand.u32 %v2140, 2147483648
    %v2153 = vor.u32 1.1754944e-38, %v2152
    %v2154 = vsel %vm2151, %v2153, %v2149
    %v2155 = vmul.f32 1.0, %v2154
    %v2156 = vmul.f32 %v2135, %v2114
    %v2157 = vadd.f32 %v2055, %v2156
    %v2158 = vtanh.pop %v2157
    %v2159 = vsub.f32 1.0, %v2155
    %v2160 = vmul.f32 %v2159, %v2158
    %v2161 = vmul.f32 %v2155, %v1937
    %v2162 = vadd.f32 %v2160, %v2161
    %v2163 = vsel %vm1350, %v2162, %v1937
    %s2164 = smul.addr %s1112, 8
    %s2165 = scalar_lea.vmem [#allocation2], %s2164
    %v2166 = vld [vmem:[%s2165] sm:$0xff]
    %v2167 = vld [vmem:[%s2165 + $0x8] sm:$0xff]
    %v2168 = vld [vmem:[%s2165 + $0x10] sm:$0xff]
    %2169 = vmatpush.msra.mxu0 %v685
    %2170 = vmatpush.msra.mxu0 %v682
    %2171 = vmatpush.msra.mxu0 %v679
    %2172 = vmatpush.msra.mxu0 %v676
    %2173 = vmatpush.msra.mxu0 %v673
    %2174 = vmatpush.msra.mxu0 %v670
    %2175 = vmatpush.msra.mxu0 %v667
    %2176 = vmatpush.msra.mxu0 %v664
    %2177 = vmatpush.msra.mxu0 %v661
    %2178 = vmatpush.msra.mxu0 %v658
    %2179 = vmatpush.msra.mxu0 %v655
    %2180 = vmatpush.msra.mxu0 %v652
    %2181 = vmatpush.msra.mxu0 %v649
    %2182 = vmatpush.msra.mxu0 %v646
    %2183 = vmatpush.msra.mxu0 %v643
    %2184 = vmatpush.msra.mxu0 %v640
    %2185 = vmatmul.f32.gmra.mxu0 %v2050
    %v2186 = vpop.f32.mrf.mxu0
    %v2187 = vadd.f32 %v745, %v2186
    %2188 = vdwg.mxu0
    %2189 = vmatpush.msra.mxu0 %v686
    %2190 = vmatpush.msra.mxu0 %v683
    %2191 = vmatpush.msra.mxu0 %v680
    %2192 = vmatpush.msra.mxu0 %v677
    %2193 = vmatpush.msra.mxu0 %v674
    %2194 = vmatpush.msra.mxu0 %v671
    %2195 = vmatpush.msra.mxu0 %v668
    %2196 = vmatpush.msra.mxu0 %v665
    %2197 = vmatpush.msra.mxu0 %v662
    %2198 = vmatpush.msra.mxu0 %v659
    %2199 = vmatpush.msra.mxu0 %v656
    %2200 = vmatpush.msra.mxu0 %v653
    %2201 = vmatpush.msra.mxu0 %v650
    %2202 = vmatpush.msra.mxu0 %v647
    %2203 = vmatpush.msra.mxu0 %v644
    %2204 = vmatpush.msra.mxu0 %v641
    %2205 = vmatmul.f32.gmra.mxu0 %v2050
    %v2206 = vpop.f32.mrf.mxu0
    %v2207 = vadd.f32 %v746, %v2206
    %2208 = vdwg.mxu0
    %2209 = vmatpush.msra.mxu0 %v687
    %2210 = vmatpush.msra.mxu0 %v684
    %2211 = vmatpush.msra.mxu0 %v681
    %2212 = vmatpush.msra.mxu0 %v678
    %2213 = vmatpush.msra.mxu0 %v675
    %2214 = vmatpush.msra.mxu0 %v672
    %2215 = vmatpush.msra.mxu0 %v669
    %2216 = vmatpush.msra.mxu0 %v666
    %2217 = vmatpush.msra.mxu0 %v663
    %2218 = vmatpush.msra.mxu0 %v660
    %2219 = vmatpush.msra.mxu0 %v657
    %2220 = vmatpush.msra.mxu0 %v654
    %2221 = vmatpush.msra.mxu0 %v651
    %2222 = vmatpush.msra.mxu0 %v648
    %2223 = vmatpush.msra.mxu0 %v645
    %2224 = vmatpush.msra.mxu0 %v642
    %2225 = vmatmul.f32.gmra.mxu0 %v2050
    %v2226 = vpop.f32.mrf.mxu0
    %v2227 = vadd.f32 %v747, %v2226
    %2228 = vdwg.mxu0
    %v2229 = vadd.f32 %v2166, %v2187
    %v2230 = vxor.u32 %v2229, 2147483648
    %v2231 = vmul.f32 %v2230, 1.442695
    %v2232 = vpow.pop %v2231
    %v2233 = vadd.f32 %v2232, 1.0
    %v2234 = vrcp.pop %v2233
    %v2235 = vmul.f32 %v2233, %v2234
    %v2236 = vsub.f32 1.0, %v2235
    %v2237 = vmul.f32 %v2234, %v2236
    %v2238 = vadd.f32 %v2234, %v2237
    %vm2239 = vweird.f32 %v2233
    %vm2240 = vweird.f32 %v2234
    %vm2241 = vmor %vm2239, %vm2240
    %v2242 = vsel %vm2241, %v2234, %v2238
    %v2243 = vand.u32 2147483647, %v2233
    %vm2244 = vcmp.eq.f32.partialorder %v2243, 8.507059e+37
    %v2245 = vand.u32 %v2233, 2147483648
    %v2246 = vor.u32 1.1754944e-38, %v2245
    %v2247 = vsel %vm2244, %v2246, %v2242
    %v2248 = vmul.f32 1.0, %v2247
    %v2249 = vadd.f32 %v2167, %v2207
    %v2250 = vxor.u32 %v2249, 2147483648
    %v2251 = vmul.f32 %v2250, 1.442695
    %v2252 = vpow.pop %v2251
    %v2253 = vadd.f32 %v2252, 1.0
    %v2254 = vrcp.pop %v2253
    %v2255 = vmul.f32 %v2253, %v2254
    %v2256 = vsub.f32 1.0, %v2255
    %v2257 = vmul.f32 %v2254, %v2256
    %v2258 = vadd.f32 %v2254, %v2257
    %vm2259 = vweird.f32 %v2253
    %vm2260 = vweird.f32 %v2254
    %vm2261 = vmor %vm2259, %vm2260
    %v2262 = vsel %vm2261, %v2254, %v2258
    %v2263 = vand.u32 2147483647, %v2253
    %vm2264 = vcmp.eq.f32.partialorder %v2263, 8.507059e+37
    %v2265 = vand.u32 %v2253, 2147483648
    %v2266 = vor.u32 1.1754944e-38, %v2265
    %v2267 = vsel %vm2264, %v2266, %v2262
    %v2268 = vmul.f32 1.0, %v2267
    %v2269 = vmul.f32 %v2248, %v2227
    %v2270 = vadd.f32 %v2168, %v2269
    %v2271 = vtanh.pop %v2270
    %v2272 = vsub.f32 1.0, %v2268
    %v2273 = vmul.f32 %v2272, %v2271
    %v2274 = vmul.f32 %v2268, %v2050
    %v2275 = vadd.f32 %v2273, %v2274
    %v2276 = vsel %vm1230, %v2275, %v2050
    %s2277 = smul.addr %s992, 8
    %s2278 = scalar_lea.vmem [#allocation3], %s2277
    %v2279 = vld [vmem:[%s2278] sm:$0xff]
    %v2280 = vld [vmem:[%s2278 + $0x8] sm:$0xff]
    %v2281 = vld [vmem:[%s2278 + $0x10] sm:$0xff]
    %2282 = vmatpush.msra.mxu0 %v734
    %2283 = vmatpush.msra.mxu0 %v731
    %2284 = vmatpush.msra.mxu0 %v728
    %2285 = vmatpush.msra.mxu0 %v725
    %2286 = vmatpush.msra.mxu0 %v722
    %2287 = vmatpush.msra.mxu0 %v719
    %2288 = vmatpush.msra.mxu0 %v716
    %2289 = vmatpush.msra.mxu0 %v713
    %2290 = vmatpush.msra.mxu0 %v710
    %2291 = vmatpush.msra.mxu0 %v707
    %2292 = vmatpush.msra.mxu0 %v704
    %2293 = vmatpush.msra.mxu0 %v701
    %2294 = vmatpush.msra.mxu0 %v698
    %2295 = vmatpush.msra.mxu0 %v695
    %2296 = vmatpush.msra.mxu0 %v692
    %2297 = vmatpush.msra.mxu0 %v689
    %2298 = vmatmul.f32.gmra.mxu0 %v2163
    %v2299 = vpop.f32.mrf.mxu0
    %v2300 = vadd.f32 %v872, %v2299
    %2301 = vdwg.mxu0
    %2302 = vmatpush.msra.mxu0 %v735
    %2303 = vmatpush.msra.mxu0 %v732
    %2304 = vmatpush.msra.mxu0 %v729
    %2305 = vmatpush.msra.mxu0 %v726
    %2306 = vmatpush.msra.mxu0 %v723
    %2307 = vmatpush.msra.mxu0 %v720
    %2308 = vmatpush.msra.mxu0 %v717
    %2309 = vmatpush.msra.mxu0 %v714
    %2310 = vmatpush.msra.mxu0 %v711
    %2311 = vmatpush.msra.mxu0 %v708
    %2312 = vmatpush.msra.mxu0 %v705
    %2313 = vmatpush.msra.mxu0 %v702
    %2314 = vmatpush.msra.mxu0 %v699
    %2315 = vmatpush.msra.mxu0 %v696
    %2316 = vmatpush.msra.mxu0 %v693
    %2317 = vmatpush.msra.mxu0 %v690
    %2318 = vmatmul.f32.gmra.mxu0 %v2163
    %v2319 = vpop.f32.mrf.mxu0
    %v2320 = vadd.f32 %v873, %v2319
    %2321 = vdwg.mxu0
    %2322 = vmatpush.msra.mxu0 %v736
    %2323 = vmatpush.msra.mxu0 %v733
    %2324 = vmatpush.msra.mxu0 %v730
    %2325 = vmatpush.msra.mxu0 %v727
    %2326 = vmatpush.msra.mxu0 %v724
    %2327 = vmatpush.msra.mxu0 %v721
    %2328 = vmatpush.msra.mxu0 %v718
    %2329 = vmatpush.msra.mxu0 %v715
    %2330 = vmatpush.msra.mxu0 %v712
    %2331 = vmatpush.msra.mxu0 %v709
    %2332 = vmatpush.msra.mxu0 %v706
    %2333 = vmatpush.msra.mxu0 %v703
    %2334 = vmatpush.msra.mxu0 %v700
    %2335 = vmatpush.msra.mxu0 %v697
    %2336 = vmatpush.msra.mxu0 %v694
    %2337 = vmatpush.msra.mxu0 %v691
    %2338 = vmatmul.f32.gmra.mxu0 %v2163
    %v2339 = vpop.f32.mrf.mxu0
    %v2340 = vadd.f32 %v874, %v2339
    %2341 = vdwg.mxu0
    %v2342 = vadd.f32 %v2279, %v2300
    %v2343 = vxor.u32 %v2342, 2147483648
    %v2344 = vmul.f32 %v2343, 1.442695
    %v2345 = vpow.pop %v2344
    %v2346 = vadd.f32 %v2345, 1.0
    %v2347 = vrcp.pop %v2346
    %v2348 = vmul.f32 %v2346, %v2347
    %v2349 = vsub.f32 1.0, %v2348
    %v2350 = vmul.f32 %v2347, %v2349
    %v2351 = vadd.f32 %v2347, %v2350
    %vm2352 = vweird.f32 %v2346
    %vm2353 = vweird.f32 %v2347
    %vm2354 = vmor %vm2352, %vm2353
    %v2355 = vsel %vm2354, %v2347, %v2351
    %v2356 = vand.u32 2147483647, %v2346
    %vm2357 = vcmp.eq.f32.partialorder %v2356, 8.507059e+37
    %v2358 = vand.u32 %v2346, 2147483648
    %v2359 = vor.u32 1.1754944e-38, %v2358
    %v2360 = vsel %vm2357, %v2359, %v2355
    %v2361 = vmul.f32 1.0, %v2360
    %v2362 = vadd.f32 %v2280, %v2320
    %v2363 = vxor.u32 %v2362, 2147483648
    %v2364 = vmul.f32 %v2363, 1.442695
    %v2365 = vpow.pop %v2364
    %v2366 = vadd.f32 %v2365, 1.0
    %v2367 = vrcp.pop %v2366
    %v2368 = vmul.f32 %v2366, %v2367
    %v2369 = vsub.f32 1.0, %v2368
    %v2370 = vmul.f32 %v2367, %v2369
    %v2371 = vadd.f32 %v2367, %v2370
    %vm2372 = vweird.f32 %v2366
    %vm2373 = vweird.f32 %v2367
    %vm2374 = vmor %vm2372, %vm2373
    %v2375 = vsel %vm2374, %v2367, %v2371
    %v2376 = vand.u32 2147483647, %v2366
    %vm2377 = vcmp.eq.f32.partialorder %v2376, 8.507059e+37
    %v2378 = vand.u32 %v2366, 2147483648
    %v2379 = vor.u32 1.1754944e-38, %v2378
    %v2380 = vsel %vm2377, %v2379, %v2375
    %v2381 = vmul.f32 1.0, %v2380
    %v2382 = vmul.f32 %v2361, %v2340
    %v2383 = vadd.f32 %v2281, %v2382
    %v2384 = vtanh.pop %v2383
    %v2385 = vsub.f32 1.0, %v2381
    %v2386 = vmul.f32 %v2385, %v2384
    %v2387 = vmul.f32 %v2381, %v2163
    %v2388 = vadd.f32 %v2386, %v2387
    %v2389 = vsel %vm1110, %v2388, %v2163
    %s2390 = smul.addr %s865, 8
    %s2391 = scalar_lea.vmem [#allocation2], %s2390
    %v2392 = vld [vmem:[%s2391] sm:$0xff]
    %v2393 = vld [vmem:[%s2391 + $0x8] sm:$0xff]
    %v2394 = vld [vmem:[%s2391 + $0x10] sm:$0xff]
    %2395 = vmatpush.msra.mxu0 %v685
    %2396 = vmatpush.msra.mxu0 %v682
    %2397 = vmatpush.msra.mxu0 %v679
    %2398 = vmatpush.msra.mxu0 %v676
    %2399 = vmatpush.msra.mxu0 %v673
    %2400 = vmatpush.msra.mxu0 %v670
    %2401 = vmatpush.msra.mxu0 %v667
    %2402 = vmatpush.msra.mxu0 %v664
    %2403 = vmatpush.msra.mxu0 %v661
    %2404 = vmatpush.msra.mxu0 %v658
    %2405 = vmatpush.msra.mxu0 %v655
    %2406 = vmatpush.msra.mxu0 %v652
    %2407 = vmatpush.msra.mxu0 %v649
    %2408 = vmatpush.msra.mxu0 %v646
    %2409 = vmatpush.msra.mxu0 %v643
    %2410 = vmatpush.msra.mxu0 %v640
    %2411 = vmatmul.f32.gmra.mxu0 %v2276
    %v2412 = vpop.f32.mrf.mxu0
    %v2413 = vadd.f32 %v745, %v2412
    %2414 = vdwg.mxu0
    %2415 = vmatpush.msra.mxu0 %v686
    %2416 = vmatpush.msra.mxu0 %v683
    %2417 = vmatpush.msra.mxu0 %v680
    %2418 = vmatpush.msra.mxu0 %v677
    %2419 = vmatpush.msra.mxu0 %v674
    %2420 = vmatpush.msra.mxu0 %v671
    %2421 = vmatpush.msra.mxu0 %v668
    %2422 = vmatpush.msra.mxu0 %v665
    %2423 = vmatpush.msra.mxu0 %v662
    %2424 = vmatpush.msra.mxu0 %v659
    %2425 = vmatpush.msra.mxu0 %v656
    %2426 = vmatpush.msra.mxu0 %v653
    %2427 = vmatpush.msra.mxu0 %v650
    %2428 = vmatpush.msra.mxu0 %v647
    %2429 = vmatpush.msra.mxu0 %v644
    %2430 = vmatpush.msra.mxu0 %v641
    %2431 = vmatmul.f32.gmra.mxu0 %v2276
    %v2432 = vpop.f32.mrf.mxu0
    %v2433 = vadd.f32 %v746, %v2432
    %2434 = vdwg.mxu0
    %2435 = vmatpush.msra.mxu0 %v687
    %2436 = vmatpush.msra.mxu0 %v684
    %2437 = vmatpush.msra.mxu0 %v681
    %2438 = vmatpush.msra.mxu0 %v678
    %2439 = vmatpush.msra.mxu0 %v675
    %2440 = vmatpush.msra.mxu0 %v672
    %2441 = vmatpush.msra.mxu0 %v669
    %2442 = vmatpush.msra.mxu0 %v666
    %2443 = vmatpush.msra.mxu0 %v663
    %2444 = vmatpush.msra.mxu0 %v660
    %2445 = vmatpush.msra.mxu0 %v657
    %2446 = vmatpush.msra.mxu0 %v654
    %2447 = vmatpush.msra.mxu0 %v651
    %2448 = vmatpush.msra.mxu0 %v648
    %2449 = vmatpush.msra.mxu0 %v645
    %2450 = vmatpush.msra.mxu0 %v642
    %2451 = vmatmul.f32.gmra.mxu0 %v2276
    %v2452 = vpop.f32.mrf.mxu0
    %v2453 = vadd.f32 %v747, %v2452
    %2454 = vdwg.mxu0
    %v2455 = vadd.f32 %v2392, %v2413
    %v2456 = vxor.u32 %v2455, 2147483648
    %v2457 = vmul.f32 %v2456, 1.442695
    %v2458 = vpow.pop %v2457
    %v2459 = vadd.f32 %v2458, 1.0
    %v2460 = vrcp.pop %v2459
    %v2461 = vmul.f32 %v2459, %v2460
    %v2462 = vsub.f32 1.0, %v2461
    %v2463 = vmul.f32 %v2460, %v2462
    %v2464 = vadd.f32 %v2460, %v2463
    %vm2465 = vweird.f32 %v2459
    %vm2466 = vweird.f32 %v2460
    %vm2467 = vmor %vm2465, %vm2466
    %v2468 = vsel %vm2467, %v2460, %v2464
    %v2469 = vand.u32 2147483647, %v2459
    %vm2470 = vcmp.eq.f32.partialorder %v2469, 8.507059e+37
    %v2471 = vand.u32 %v2459, 2147483648
    %v2472 = vor.u32 1.1754944e-38, %v2471
    %v2473 = vsel %vm2470, %v2472, %v2468
    %v2474 = vmul.f32 1.0, %v2473
    %v2475 = vadd.f32 %v2393, %v2433
    %v2476 = vxor.u32 %v2475, 2147483648
    %v2477 = vmul.f32 %v2476, 1.442695
    %v2478 = vpow.pop %v2477
    %v2479 = vadd.f32 %v2478, 1.0
    %v2480 = vrcp.pop %v2479
    %v2481 = vmul.f32 %v2479, %v2480
    %v2482 = vsub.f32 1.0, %v2481
    %v2483 = vmul.f32 %v2480, %v2482
    %v2484 = vadd.f32 %v2480, %v2483
    %vm2485 = vweird.f32 %v2479
    %vm2486 = vweird.f32 %v2480
    %vm2487 = vmor %vm2485, %vm2486
    %v2488 = vsel %vm2487, %v2480, %v2484
    %v2489 = vand.u32 2147483647, %v2479
    %vm2490 = vcmp.eq.f32.partialorder %v2489, 8.507059e+37
    %v2491 = vand.u32 %v2479, 2147483648
    %v2492 = vor.u32 1.1754944e-38, %v2491
    %v2493 = vsel %vm2490, %v2492, %v2488
    %v2494 = vmul.f32 1.0, %v2493
    %v2495 = vmul.f32 %v2474, %v2453
    %v2496 = vadd.f32 %v2394, %v2495
    %v2497 = vtanh.pop %v2496
    %v2498 = vsub.f32 1.0, %v2494
    %v2499 = vmul.f32 %v2498, %v2497
    %v2500 = vmul.f32 %v2494, %v2276
    %v2501 = vadd.f32 %v2499, %v2500
    %v2502 = vsel %vm990, %v2501, %v2276
    %s2503 = smul.addr %s738, 8
    %s2504 = scalar_lea.vmem [#allocation3], %s2503
    %v2505 = vld [vmem:[%s2504] sm:$0xff]
    %v2506 = vld [vmem:[%s2504 + $0x8] sm:$0xff]
    %v2507 = vld [vmem:[%s2504 + $0x10] sm:$0xff]
    %2508 = vmatpush.msra.mxu0 %v734
    %2509 = vmatpush.msra.mxu0 %v731
    %2510 = vmatpush.msra.mxu0 %v728
    %2511 = vmatpush.msra.mxu0 %v725
    %2512 = vmatpush.msra.mxu0 %v722
    %2513 = vmatpush.msra.mxu0 %v719
    %2514 = vmatpush.msra.mxu0 %v716
    %2515 = vmatpush.msra.mxu0 %v713
    %2516 = vmatpush.msra.mxu0 %v710
    %2517 = vmatpush.msra.mxu0 %v707
    %2518 = vmatpush.msra.mxu0 %v704
    %2519 = vmatpush.msra.mxu0 %v701
    %2520 = vmatpush.msra.mxu0 %v698
    %2521 = vmatpush.msra.mxu0 %v695
    %2522 = vmatpush.msra.mxu0 %v692
    %2523 = vmatpush.msra.mxu0 %v689
    %2524 = vmatmul.f32.gmra.mxu0 %v2389
    %v2525 = vpop.f32.mrf.mxu0
    %v2526 = vadd.f32 %v872, %v2525
    %2527 = vdwg.mxu0
    %2528 = vmatpush.msra.mxu0 %v735
    %2529 = vmatpush.msra.mxu0 %v732
    %2530 = vmatpush.msra.mxu0 %v729
    %2531 = vmatpush.msra.mxu0 %v726
    %2532 = vmatpush.msra.mxu0 %v723
    %2533 = vmatpush.msra.mxu0 %v720
    %2534 = vmatpush.msra.mxu0 %v717
    %2535 = vmatpush.msra.mxu0 %v714
    %2536 = vmatpush.msra.mxu0 %v711
    %2537 = vmatpush.msra.mxu0 %v708
    %2538 = vmatpush.msra.mxu0 %v705
    %2539 = vmatpush.msra.mxu0 %v702
    %2540 = vmatpush.msra.mxu0 %v699
    %2541 = vmatpush.msra.mxu0 %v696
    %2542 = vmatpush.msra.mxu0 %v693
    %2543 = vmatpush.msra.mxu0 %v690
    %2544 = vmatmul.f32.gmra.mxu0 %v2389
    %v2545 = vpop.f32.mrf.mxu0
    %v2546 = vadd.f32 %v873, %v2545
    %2547 = vdwg.mxu0
    %2548 = vmatpush.msra.mxu0 %v736
    %2549 = vmatpush.msra.mxu0 %v733
    %2550 = vmatpush.msra.mxu0 %v730
    %2551 = vmatpush.msra.mxu0 %v727
    %2552 = vmatpush.msra.mxu0 %v724
    %2553 = vmatpush.msra.mxu0 %v721
    %2554 = vmatpush.msra.mxu0 %v718
    %2555 = vmatpush.msra.mxu0 %v715
    %2556 = vmatpush.msra.mxu0 %v712
    %2557 = vmatpush.msra.mxu0 %v709
    %2558 = vmatpush.msra.mxu0 %v706
    %2559 = vmatpush.msra.mxu0 %v703
    %2560 = vmatpush.msra.mxu0 %v700
    %2561 = vmatpush.msra.mxu0 %v697
    %2562 = vmatpush.msra.mxu0 %v694
    %2563 = vmatpush.msra.mxu0 %v691
    %2564 = vmatmul.f32.gmra.mxu0 %v2389
    %v2565 = vpop.f32.mrf.mxu0
    %v2566 = vadd.f32 %v874, %v2565
    %2567 = vdwg.mxu0
    %v2568 = vadd.f32 %v2505, %v2526
    %v2569 = vxor.u32 %v2568, 2147483648
    %v2570 = vmul.f32 %v2569, 1.442695
    %v2571 = vpow.pop %v2570
    %v2572 = vadd.f32 %v2571, 1.0
    %v2573 = vrcp.pop %v2572
    %v2574 = vmul.f32 %v2572, %v2573
    %v2575 = vsub.f32 1.0, %v2574
    %v2576 = vmul.f32 %v2573, %v2575
    %v2577 = vadd.f32 %v2573, %v2576
    %vm2578 = vweird.f32 %v2572
    %vm2579 = vweird.f32 %v2573
    %vm2580 = vmor %vm2578, %vm2579
    %v2581 = vsel %vm2580, %v2573, %v2577
    %v2582 = vand.u32 2147483647, %v2572
    %vm2583 = vcmp.eq.f32.partialorder %v2582, 8.507059e+37
    %v2584 = vand.u32 %v2572, 2147483648
    %v2585 = vor.u32 1.1754944e-38, %v2584
    %v2586 = vsel %vm2583, %v2585, %v2581
    %v2587 = vmul.f32 1.0, %v2586
    %v2588 = vadd.f32 %v2506, %v2546
    %v2589 = vxor.u32 %v2588, 2147483648
    %v2590 = vmul.f32 %v2589, 1.442695
    %v2591 = vpow.pop %v2590
    %v2592 = vadd.f32 %v2591, 1.0
    %v2593 = vrcp.pop %v2592
    %v2594 = vmul.f32 %v2592, %v2593
    %v2595 = vsub.f32 1.0, %v2594
    %v2596 = vmul.f32 %v2593, %v2595
    %v2597 = vadd.f32 %v2593, %v2596
    %vm2598 = vweird.f32 %v2592
    %vm2599 = vweird.f32 %v2593
    %vm2600 = vmor %vm2598, %vm2599
    %v2601 = vsel %vm2600, %v2593, %v2597
    %v2602 = vand.u32 2147483647, %v2592
    %vm2603 = vcmp.eq.f32.partialorder %v2602, 8.507059e+37
    %v2604 = vand.u32 %v2592, 2147483648
    %v2605 = vor.u32 1.1754944e-38, %v2604
    %v2606 = vsel %vm2603, %v2605, %v2601
    %v2607 = vmul.f32 1.0, %v2606
    %v2608 = vmul.f32 %v2587, %v2566
    %v2609 = vadd.f32 %v2507, %v2608
    %v2610 = vtanh.pop %v2609
    %v2611 = vsub.f32 1.0, %v2607
    %v2612 = vmul.f32 %v2611, %v2610
    %v2613 = vmul.f32 %v2607, %v2389
    %v2614 = vadd.f32 %v2612, %v2613
    %v2615 = vsel %vm863, %v2614, %v2389
    %v2616 = vld [vmem:[%s16] sm:$0xff]
    %v2617 = vld [vmem:[%s16 + $0x8] sm:$0xff]
    %v2618 = vld [vmem:[%s16 + $0x10] sm:$0xff]
    %v2619 = vld [vmem:[%s16 + $0x18] sm:$0xff]
    %v2620 = vld [vmem:[%s16 + $0x20] sm:$0xff]
    %v2621 = vld [vmem:[%s16 + $0x28] sm:$0xff]
    %v2622 = vld [vmem:[%s16 + $0x30] sm:$0xff]
    %v2623 = vld [vmem:[%s16 + $0x38] sm:$0xff]
    %v2624 = vld [vmem:[%s16 + $0x40] sm:$0xff]
    %v2625 = vld [vmem:[%s16 + $0x48] sm:$0xff]
    %v2626 = vld [vmem:[%s16 + $0x50] sm:$0xff]
    %v2627 = vld [vmem:[%s16 + $0x58] sm:$0xff]
    %v2628 = vld [vmem:[%s16 + $0x60] sm:$0xff]
    %v2629 = vld [vmem:[%s16 + $0x68] sm:$0xff]
    %v2630 = vld [vmem:[%s16 + $0x70] sm:$0xff]
    %v2631 = vld [vmem:[%s16 + $0x78] sm:$0xff]
    %v2632 = vld [vmem:[%s16 + $0x80] sm:$0xff]
    %v2633 = vld [vmem:[%s16 + $0x88] sm:$0xff]
    %v2634 = vld [vmem:[%s16 + $0x90] sm:$0xff]
    %v2635 = vld [vmem:[%s16 + $0x98] sm:$0xff]
    %v2636 = vld [vmem:[%s16 + $0xa0] sm:$0xff]
    %v2637 = vld [vmem:[%s16 + $0xa8] sm:$0xff]
    %v2638 = vld [vmem:[%s16 + $0xb0] sm:$0xff]
    %v2639 = vld [vmem:[%s16 + $0xb8] sm:$0xff]
    %v2640 = vld [vmem:[%s16 + $0xc0] sm:$0xff]
    %v2641 = vld [vmem:[%s16 + $0xc8] sm:$0xff]
    %v2642 = vld [vmem:[%s16 + $0xd0] sm:$0xff]
    %v2643 = vld [vmem:[%s16 + $0xd8] sm:$0xff]
    %v2644 = vld [vmem:[%s16 + $0xe0] sm:$0xff]
    %v2645 = vld [vmem:[%s16 + $0xe8] sm:$0xff]
    %v2646 = vld [vmem:[%s16 + $0xf0] sm:$0xff]
    %v2647 = vld [vmem:[%s16 + $0xf8] sm:$0xff]
    %v2648 = vld [vmem:[%s17] sm:$0x1]
    %v2650 = vperm.slane %v2648, 0
    %2652 = vmatpush.msra.mxu0 %v2631
    %2653 = vmatpush.msra.mxu0 %v2630
    %2654 = vmatpush.msra.mxu0 %v2629
    %2655 = vmatpush.msra.mxu0 %v2628
    %2656 = vmatpush.msra.mxu0 %v2627
    %2657 = vmatpush.msra.mxu0 %v2626
    %2658 = vmatpush.msra.mxu0 %v2625
    %2659 = vmatpush.msra.mxu0 %v2624
    %2660 = vmatpush.msra.mxu0 %v2623
    %2661 = vmatpush.msra.mxu0 %v2622
    %2662 = vmatpush.msra.mxu0 %v2621
    %2663 = vmatpush.msra.mxu0 %v2620
    %2664 = vmatpush.msra.mxu0 %v2619
    %2665 = vmatpush.msra.mxu0 %v2618
    %2666 = vmatpush.msra.mxu0 %v2617
    %2667 = vmatpush.msra.mxu0 %v2616
    %2668 = vmatmul.f32.gmra.mxu0 %v2502
    %v2669 = vpop.f32.mrf.mxu0
    %v2670 = vadd.f32 %v2650, %v2669
    %2671 = vdwg.mxu0
    %2672 = vmatpush.msra.mxu0 %v2647
    %2673 = vmatpush.msra.mxu0 %v2646
    %2674 = vmatpush.msra.mxu0 %v2645
    %2675 = vmatpush.msra.mxu0 %v2644
    %2676 = vmatpush.msra.mxu0 %v2643
    %2677 = vmatpush.msra.mxu0 %v2642
    %2678 = vmatpush.msra.mxu0 %v2641
    %2679 = vmatpush.msra.mxu0 %v2640
    %2680 = vmatpush.msra.mxu0 %v2639
    %2681 = vmatpush.msra.mxu0 %v2638
    %2682 = vmatpush.msra.mxu0 %v2637
    %2683 = vmatpush.msra.mxu0 %v2636
    %2684 = vmatpush.msra.mxu0 %v2635
    %2685 = vmatpush.msra.mxu0 %v2634
    %2686 = vmatpush.msra.mxu0 %v2633
    %2687 = vmatpush.msra.mxu0 %v2632
    %2688 = vmatmul.f32.gmra.mxu0 %v2615
    %v2689 = vpop.f32.mrf.mxu0
    %v2690 = vadd.f32 %v2670, %v2689
    %2691 = vdwg.mxu0
    %2692 = vadd.xlane.f32.xlu0 %v2690
    %v2693 = vpop.xlane.xlu0 %2692
    %v2694 = vrcp.pop 128.0
    %v2695 = vmul.f32 128.0, %v2694
    %v2696 = vsub.f32 1.0, %v2695
    %v2697 = vmul.f32 %v2694, %v2696
    %v2698 = vadd.f32 %v2694, %v2697
    %vm2699 = vweird.f32 %v2694
    %v2700 = vsel %vm2699, %v2694, %v2698
    %v2701 = vmul.f32 %v2693, %v2700
    %v2702 = vsub.f32 %v2690, %v2701
    %v2703 = vmul.f32 %v2702, %v2702
    %2704 = vadd.xlane.f32.xlu0 %v2703
    %v2705 = vpop.xlane.xlu0 %2704
    %v2706 = vmul.f32 %v2705, %v2700
    %v2707 = vadd.f32 %v2706, 1e-05
    %v2708 = vrsqrt.pop %v2707
    %v2709 = vmul.f32 %v2708, %v2707
    %v2710 = vmul.f32 %v2709, %v2708
    %v2711 = vmul.f32 0.5, %v2710
    %v2712 = vsub.f32 1.5, %v2711
    %v2713 = vmul.f32 %v2708, %v2712
    %vm2714 = vweird.f32 %v2707
    %vm2715 = vweird.f32 %v2708
    %vm2716 = vmor %vm2714, %vm2715
    %v2717 = vsel %vm2716, %v2708, %v2713
    %v2718 = vmul.f32 %v2702, %v2717
    %v2719 = vld [vmem:[%s18] sm:$0x1]
    %v2721 = vperm.slane %v2719, 0
    %v2723 = vmul.f32 %v2718, %v2721
    %v2724 = vld [vmem:[%s19] sm:$0x1]
    %v2726 = vperm.slane %v2724, 0
    %v2728 = vadd.f32 %v2723, %v2726
    %vm2729 = vcmp.ge.f32.partialorder %v2728, 0.0
    %v2730 = vmul.f32 %v2728, 0.2
    %v2731 = vsel %vm2729, %v2728, %v2730
    %v2732 = vld [vmem:[%s20] sm:$0xff]
    %v2733 = vld [vmem:[%s20 + $0x8] sm:$0xff]
    %v2734 = vld [vmem:[%s20 + $0x10] sm:$0xff]
    %v2735 = vld [vmem:[%s20 + $0x18] sm:$0xff]
    %v2736 = vld [vmem:[%s20 + $0x20] sm:$0xff]
    %v2737 = vld [vmem:[%s20 + $0x28] sm:$0xff]
    %v2738 = vld [vmem:[%s20 + $0x30] sm:$0xff]
    %v2739 = vld [vmem:[%s20 + $0x38] sm:$0xff]
    %v2740 = vld [vmem:[%s20 + $0x40] sm:$0xff]
    %v2741 = vld [vmem:[%s20 + $0x48] sm:$0xff]
    %v2742 = vld [vmem:[%s20 + $0x50] sm:$0xff]
    %v2743 = vld [vmem:[%s20 + $0x58] sm:$0xff]
    %v2744 = vld [vmem:[%s20 + $0x60] sm:$0xff]
    %v2745 = vld [vmem:[%s20 + $0x68] sm:$0xff]
    %v2746 = vld [vmem:[%s20 + $0x70] sm:$0xff]
    %v2747 = vld [vmem:[%s20 + $0x78] sm:$0xff]
    %v2748 = vld [vmem:[%s21] sm:$0x1]
    %v2750 = vperm.slane %v2748, 0
    %2752 = vmatpush.msra.mxu0 %v2747
    %2753 = vmatpush.msra.mxu0 %v2746
    %2754 = vmatpush.msra.mxu0 %v2745
    %2755 = vmatpush.msra.mxu0 %v2744
    %2756 = vmatpush.msra.mxu0 %v2743
    %2757 = vmatpush.msra.mxu0 %v2742
    %2758 = vmatpush.msra.mxu0 %v2741
    %2759 = vmatpush.msra.mxu0 %v2740
    %2760 = vmatpush.msra.mxu0 %v2739
    %2761 = vmatpush.msra.mxu0 %v2738
    %2762 = vmatpush.msra.mxu0 %v2737
    %2763 = vmatpush.msra.mxu0 %v2736
    %2764 = vmatpush.msra.mxu0 %v2735
    %2765 = vmatpush.msra.mxu0 %v2734
    %2766 = vmatpush.msra.mxu0 %v2733
    %2767 = vmatpush.msra.mxu0 %v2732
    %2768 = vmatmul.f32.gmra.mxu0 %v2731
    %v2769 = vpop.f32.mrf.mxu0
    %v2770 = vadd.f32 %v2750, %v2769
    %2771 = vdwg.mxu0
    %2772 = vst [vmem:[#allocation4] sm:$0xff] %v2770
    // Predicated region
    $region90: #{text_encoder_bigru_co.1} parent=1 // pred_check
      _
    $region91: #{text_encoder_bigru_co.1} parent=1 // pred_check_branch
      %2774 = sbr.rel (0) target = $region93
    $region92: #{text_encoder_bigru_co.1} parent=1 // pred_region
      %2776 = vsyncadd [#allocation5], 0
      %s2778 = sshll.u32 [#allocation4], 4
      %s2779 = int_to_ptr.vmem [resolvable:$true] %s2778
      %s2780 = sshll.u32 %s22, 4
      %s2781 = int_to_ptr.hbm [resolvable:$true] %s2780
      %2783 = dma.vmem_to_hbm [thread:$0]  %s2779, 128, %s2781, [#allocation5]
    $region93: #{text_encoder_bigru_co.1} parent=1 // pred_fallthru
      _
    // Predicated region
    $region94: #{text_encoder_bigru_co.1} parent=1 // pred_check
      _
    $region95: #{text_encoder_bigru_co.1} parent=1 // pred_check_branch
      %2785 = sbr.rel (0) target = $region97
    $region96: #{text_encoder_bigru_co.1} parent=1 // pred_region
      %2787 = dma.done [#allocation5], 128
    $region97: #{text_encoder_bigru_co.1} parent=1 // pred_fallthru
      _
    %2788 = vsyncpa [#allocation5], 1

</llo_original>
